<compile_context>
chip_gen: v7x
topology: tpu7x:2x2x1
jax: 0.10.0
libtpu: 0.0.40
codegen_flags: <defaults>
</compile_context>

<pallas_src>
import math
import functools

import jax
import jax.numpy as jnp
from jax import lax
from jax.experimental import pallas as pl
from jax.experimental.pallas import tpu as pltpu


def _layernorm(z, gamma, beta, eps=1e-5):
    mu = jnp.mean(z, axis=-1, keepdims=True)
    var = jnp.mean((z - mu) ** 2, axis=-1, keepdims=True)
    return (z - mu) * lax.rsqrt(var + eps) * gamma + beta


def _gelu_exact(z):
    # nn.GELU() default = exact erf formulation
    return 0.5 * z * (1.0 + lax.erf(z / jnp.sqrt(2.0).astype(z.dtype)))


def decoder_block_kernel(xq_ref, xf_ref,
                         wq_ref, bq_ref, wkv_ref, bkv_ref,
                         wo_ref, bo_ref,
                         ln1g_ref, ln1b_ref,
                         w1_ref, b1_ref, w2_ref, b2_ref,
                         ln2g_ref, ln2b_ref,
                         out_ref,
                         k_scr, v_scr,
                         *, num_heads):
    TQ, C = xq_ref.shape          # query tile
    T = xf_ref.shape[0]           # full (padded) sequence, K/V source
    N = num_heads
    D = C // N
    scale = 1.0 / math.sqrt(D)

    qi = pl.program_id(1)
    q_start = qi * TQ             # global row offset of this query tile

    # ---- fused K|V projection, hoisted: computed once per batch (qi == 0) --------
    @pl.when(qi == 0)
    def _fill_kv():
        kv = jnp.dot(xf_ref[...], wkv_ref[...],
                     preferred_element_type=jnp.float32) + bkv_ref[...]
        k = kv[:, :C].reshape(T, N, D)
        v = kv[:, C:].reshape(T, N, D)
        k_scr[...] = jnp.swapaxes(k, 0, 1).astype(jnp.bfloat16)   # (N, T, D)
        v_scr[...] = jnp.swapaxes(v, 0, 1).astype(jnp.bfloat16)   # (N, T, D)

    # ---- Q projection for this tile; heads batched on a leading axis -------------
    x_q32 = xq_ref[...].astype(jnp.float32)                        # residual path fp32
    q = jnp.dot(x_q32.astype(jnp.bfloat16), wq_ref[...],
                preferred_element_type=jnp.float32) + bq_ref[...]
    qh = jnp.swapaxes(q.reshape(TQ, N, D), 0, 1).astype(jnp.bfloat16)   # (N, TQ, D)

    row = q_start + lax.broadcasted_iota(jnp.int32, (1, TQ, TQ), 1)

    # ---- causal key-tile loop with online softmax (only tiles kt <= qi) ----------
    def kv_tile(kt, carry):
        m_prev, l_prev, acc_prev = carry
        start = pl.multiple_of(kt * TQ, TQ)
        kh = k_scr[:, pl.ds(start, TQ), :]                         # (N, TK, D) bf16
        vh = v_scr[:, pl.ds(start, TQ), :]
        s = jnp.einsum("ntd,nsd->nts", qh, kh,
                       preferred_element_type=jnp.float32) * scale  # (N, TQ, TK)
        col = start + lax.broadcasted_iota(jnp.int32, (1, TQ, TQ), 2)
        s = jnp.where(col > row, jnp.float32(-1e30), s)            # finite sentinel
        m_new = jnp.maximum(m_prev, jnp.max(s, axis=-1, keepdims=True))
        alpha = jnp.exp(m_prev - m_new)
        p = jnp.exp(s - m_new)                                     # single exp buffer
        l_new = alpha * l_prev + jnp.sum(p, axis=-1, keepdims=True)
        acc_new = alpha * acc_prev + jnp.einsum(
            "nts,nsd->ntd", p.astype(jnp.bfloat16), vh,
            preferred_element_type=jnp.float32)
        return m_new, l_new, acc_new

    m0 = jnp.full((N, TQ, 1), -1e30, jnp.float32)
    l0 = jnp.zeros((N, TQ, 1), jnp.float32)
    a0 = jnp.zeros((N, TQ, D), jnp.float32)
    _, l_f, acc = lax.fori_loop(0, qi + 1, kv_tile, (m0, l0, a0))

    ctx = acc * pl.reciprocal(l_f, approx=True)                    # (N, TQ, D) fp32
    ctx2d = jnp.swapaxes(ctx, 0, 1).reshape(TQ, C)                 # head-major concat

    # ---- output projection: one full-width matmul ---------------------------------
    y = jnp.dot(ctx2d.astype(jnp.bfloat16), wo_ref[...],
                preferred_element_type=jnp.float32) + bo_ref[...]

    # ---- residual + LayerNorm 1 ----------------------------------------------------
    h1 = _layernorm(x_q32 + y, ln1g_ref[...], ln1b_ref[...])

    # ---- MLP (exact-erf GELU) ------------------------------------------------------
    m1 = jnp.dot(h1.astype(jnp.bfloat16), w1_ref[...],
                 preferred_element_type=jnp.float32) + b1_ref[...]
    m1 = _gelu_exact(m1)
    m2 = jnp.dot(m1.astype(jnp.bfloat16), w2_ref[...],
                 preferred_element_type=jnp.float32) + b2_ref[...]

    # ---- residual + LayerNorm 2 ----------------------------------------------------
    out = _layernorm(h1 + m2, ln2g_ref[...], ln2b_ref[...])
    out_ref[...] = out.astype(out_ref.dtype)


def _round_up(a, b):
    return ((a + b - 1) // b) * b


def _vmem_budget_bytes():
    """~85% of the actual chip's VMEM (v5e/v6e 128 MiB, v7x 64 MiB per core)."""
    cap = 64 * 1024 * 1024
    try:
        cap = int(getattr(pltpu.get_tpu_info(), "vmem_capacity_bytes", cap))
    except Exception:
        pass
    return int(cap * 0.85)


def _choose_q_tile(T, C, H, N, budget):
    """Large MXU-friendly query tile; shrink only if the VMEM estimate overflows."""
    if T <= 256:
        return max(8, _round_up(T, 8))          # single tile covering the sequence
    D = C // N

    def est(tq):
        t_pad = _round_up(T, tq)
        weights = 2 * (4 * C * C + 2 * C * H)               # bf16, single-buffered
        kv_scr = 2 * 2 * N * t_pad * max(D, 128)            # bf16 K/V scratch (lane pad)
        x_blk = 2 * 2 * t_pad * C + 4 * 4 * tq * C          # xf (bf16) + xq/out (fp32), x2 bufs
        acts = 4 * (3 * N * tq * tq + 2 * N * tq * D + 2 * tq * H + 8 * tq * C)
        return weights + kv_scr + x_blk + acts

    for tq in (256, 128, 64, 32):                # v5e users may prefer to cap at 128
        if est(tq) <= budget:
            return tq
    return 32


def decoder_block(x, params, *, num_heads):
    B, T, C = x.shape
    H = params["w1"].shape[1]                    # mlp hidden = mlp_ratio * C
    N = num_heads
    D = C // N
    assert C % N == 0, "h_dim must be a multiple of num_heads"

    vmem_limit = _vmem_budget_bytes()
    q_tile = _choose_q_tile(T, C, H, N, vmem_limit)
    T_pad = _round_up(T, q_tile)
    nq = T_pad // q_tile

    # ---- host-side prep: pad sequence, fuse K|V, bf16 weights, bf16 KV source ------
    x_p = x if T_pad == T else jnp.pad(x, ((0, 0), (0, T_pad - T), (0, 0)))
    x_bf = x_p.astype(jnp.bfloat16)              # K/V projection source (halves DMA)

    wq = params["wq"].astype(jnp.bfloat16)
    wkv = jnp.concatenate([params["wk"], params["wv"]], axis=1).astype(jnp.bfloat16)
    bq = params["bq"].astype(jnp.float32)
    bkv = jnp.concatenate([params["bk"], params["bv"]], axis=1).astype(jnp.float32)
    wo = params["wo"].astype(jnp.bfloat16)
    w1 = params["w1"].astype(jnp.bfloat16)
    w2 = params["w2"].astype(jnp.bfloat16)

    weight_bytes = 2 * (wq.size + wkv.size + wo.size + w1.size + w2.size)

    # ---- advisory cost estimate (KV hoisted once/batch, causal attention ~1/2) -----
    flops = B * (2 * T_pad * C * (2 * C)         # fused K|V projection (once per batch)
                 + 2 * T_pad * C * C             # Q projection
                 + 2 * T_pad * T_pad * C         # causal QK^T + PV
                 + 2 * T_pad * C * C             # output projection
                 + 4 * T_pad * C * H)            # MLP
    transcendentals = B * (N * T_pad * T_pad // 2 + T_pad * H)
    bytes_accessed = B * (weight_bytes + T_pad * C * (4 + 2 + 4))
    cost = pl.CostEstimate(flops=int(flops), transcendentals=int(transcendentals),
                           bytes_accessed=int(bytes_accessed))

    kernel = functools.partial(decoder_block_kernel, num_heads=N)

    def _build_and_run(single_buffer_weights):
        def wspec(shape):
            # Grid-invariant weights: single-buffer to halve resident VMEM (v7x).
            if single_buffer_weights:
                return pl.BlockSpec(shape, lambda b, qi: (0, 0),
                                    pipeline_mode=pl.Buffered(1))
            return pl.BlockSpec(shape, lambda b, qi: (0, 0))

        in_specs = [
            pl.BlockSpec((pl.Squeezed(), q_tile, C), lambda b, qi: (b, qi, 0)),  # x query tile (fp32)
            pl.BlockSpec((pl.Squeezed(), T_pad, C), lambda b, qi: (b, 0, 0)),    # x full seq (bf16)
            wspec((C, C)), wspec((1, C)),            # wq, bq
            wspec((C, 2 * C)), wspec((1, 2 * C)),    # wkv (fused), bkv
            wspec((C, C)), wspec((1, C)),            # wo, bo
            wspec((1, C)), wspec((1, C)),            # ln1 gamma, beta
            wspec((C, H)), wspec((1, H)),            # w1, b1
            wspec((H, C)), wspec((1, C)),            # w2, b2
            wspec((1, C)), wspec((1, C)),            # ln2 gamma, beta
        ]
        out_spec = pl.BlockSpec((pl.Squeezed(), q_tile, C), lambda b, qi: (b, qi, 0))

        return pl.pallas_call(
            kernel,
            out_shape=jax.ShapeDtypeStruct((B, T_pad, C), x.dtype),
            grid=(B, nq),
            in_specs=in_specs,
            out_specs=out_spec,
            scratch_shapes=[pltpu.VMEM((N, T_pad, D), jnp.bfloat16),   # K (head-major)
                            pltpu.VMEM((N, T_pad, D), jnp.bfloat16)],  # V (head-major)
            compiler_params=pltpu.CompilerParams(
                # batch parallel (megacore on v7x); query-tile axis is sequential so the
                # KV scratch filled at qi==0 is reused by all later tiles of the batch.
                dimension_semantics=("parallel", "arbitrary"),
                vmem_limit_bytes=vmem_limit),
            cost_estimate=cost,
        )(x_p, x_bf,
          wq, bq, wkv, bkv, wo, params["bo"],
          params["ln1_g"], params["ln1_b"],
          w1, params["b1"], w2, params["b2"],
          params["ln2_g"], params["ln2_b"])

    try:
        out = _build_and_run(True)
    except Exception:
        # pipeline_mode=pl.Buffered(1) not supported by this jax/Mosaic build:
        # fall back to default double-buffered weight specs (correctness identical).
        out = _build_and_run(False)

    if T_pad != T:
        out = out[:, :T, :]
    return out


def reference_decoder_block(x, params, *, num_heads):
    """Pure-JAX fp32 reference matching the PyTorch forward (dropout = identity)."""
    B, T, C = x.shape
    D = C // num_heads

    def lin(z, w, b):
        return z @ w + b

    q = lin(x, params["wq"], params["bq"]).reshape(B, T, num_heads, D).transpose(0, 2, 1, 3)
    k = lin(x, params["wk"], params["bk"]).reshape(B, T, num_heads, D).transpose(0, 2, 1, 3)
    v = lin(x, params["wv"], params["bv"]).reshape(B, T, num_heads, D).transpose(0, 2, 1, 3)

    logits = jnp.einsum("bntd,bnsd->bnts", q, k) / math.sqrt(D)
    mask = jnp.triu(jnp.ones((T, T), dtype=bool), k=1)
    logits = jnp.where(mask, -jnp.inf, logits)
    attn = jax.nn.softmax(logits, axis=-1)
    o = jnp.einsum("bnts,bnsd->bntd", attn, v).transpose(0, 2, 1, 3).reshape(B, T, C)
    o = lin(o, params["wo"], params["bo"])

    h1 = _layernorm(x + o, params["ln1_g"], params["ln1_b"])
    m = lin(h1, params["w1"], params["b1"])
    m = _gelu_exact(m)
    m = lin(m, params["w2"], params["b2"])
    return _layernorm(h1 + m, params["ln2_g"], params["ln2_b"])


def init_params(key, h_dim, mlp_ratio):
    H = mlp_ratio * h_dim
    keys = jax.random.split(key, 8)
    s = 0.02

    def w(k, shp):
        return (s * jax.random.normal(k, shp)).astype(jnp.float32)

    return {
        "wq": w(keys[0], (h_dim, h_dim)), "bq": jnp.zeros((1, h_dim), jnp.float32),
        "wk": w(keys[1], (h_dim, h_dim)), "bk": jnp.zeros((1, h_dim), jnp.float32),
        "wv": w(keys[2], (h_dim, h_dim)), "bv": jnp.zeros((1, h_dim), jnp.float32),
        "wo": w(keys[3], (h_dim, h_dim)), "bo": jnp.zeros((1, h_dim), jnp.float32),
        "ln1_g": jnp.ones((1, h_dim), jnp.float32), "ln1_b": jnp.zeros((1, h_dim), jnp.float32),
        "w1": w(keys[4], (h_dim, H)), "b1": jnp.zeros((1, H), jnp.float32),
        "w2": w(keys[5], (H, h_dim)), "b2": jnp.zeros((1, h_dim), jnp.float32),
        "ln2_g": jnp.ones((1, h_dim), jnp.float32), "ln2_b": jnp.zeros((1, h_dim), jnp.float32),
    }


if __name__ == "__main__":
    B, T, C = 2, 8, 32          # batch, seq_len, h_dim
    num_heads, mlp_ratio = 4, 4
    # dropout = 0.0 (eval semantics): nn.Dropout is identity in this forward.

    key = jax.random.PRNGKey(0)
    kx, kp = jax.random.split(key)
    x = jax.random.normal(kx, (B, T, C), dtype=jnp.float32)
    params = init_params(kp, C, mlp_ratio)

    out = decoder_block(x, params, num_heads=num_heads)
    out = jax.block_until_ready(out)

    ref = reference_decoder_block(x, params, num_heads=num_heads)
    assert out.shape == (B, T, C)
    err = float(jnp.max(jnp.abs(out - ref)))
    # bf16 MXU operands + approx reciprocal vs fp32 reference: allow small tolerance.
    assert err < 2e-2, f"Pallas output mismatch vs JAX reference (max abs err {err})"

    print("KERNEL_OK")
</pallas_src>

<mosaic_0001>
module attributes {stable_mosaic.version = 11 : i64} {
  func.func @decoder_block_kernel(%arg0: i32, %arg1: i32, %arg2: memref<1x8x32xf32, #tpu.memory_space<vmem>>, %arg3: memref<1x8x32xbf16, #tpu.memory_space<vmem>>, %arg4: memref<32x32xbf16, #tpu.memory_space<vmem>>, %arg5: memref<1x32xf32, #tpu.memory_space<vmem>>, %arg6: memref<32x64xbf16, #tpu.memory_space<vmem>>, %arg7: memref<1x64xf32, #tpu.memory_space<vmem>>, %arg8: memref<32x32xbf16, #tpu.memory_space<vmem>>, %arg9: memref<1x32xf32, #tpu.memory_space<vmem>>, %arg10: memref<1x32xf32, #tpu.memory_space<vmem>>, %arg11: memref<1x32xf32, #tpu.memory_space<vmem>>, %arg12: memref<32x128xbf16, #tpu.memory_space<vmem>>, %arg13: memref<1x128xf32, #tpu.memory_space<vmem>>, %arg14: memref<128x32xbf16, #tpu.memory_space<vmem>>, %arg15: memref<1x32xf32, #tpu.memory_space<vmem>>, %arg16: memref<1x32xf32, #tpu.memory_space<vmem>>, %arg17: memref<1x32xf32, #tpu.memory_space<vmem>>, %arg18: memref<1x8x32xf32, #tpu.memory_space<vmem>>, %arg19: memref<4x8x8xbf16, #tpu.memory_space<vmem>>, %arg20: memref<4x8x8xbf16, #tpu.memory_space<vmem>>) attributes {dimension_semantics = [#tpu.dimension_semantics<parallel>, #tpu.dimension_semantics<arbitrary>], iteration_bounds = array<i64: 2, 1>, scalar_prefetch = 0 : i64, scratch_operands = 2 : i64, tpu.core_type = #tpu.core_type<tc>, window_params = [{transform_indices = @transform_0, window_bounds = array<i64: 1, 8, 32>}, {transform_indices = @transform_1, window_bounds = array<i64: 1, 8, 32>}, {pipeline_mode = #tpu.pipeline_mode<synchronous>, transform_indices = @transform_2, window_bounds = array<i64: 32, 32>}, {pipeline_mode = #tpu.pipeline_mode<synchronous>, transform_indices = @transform_3, window_bounds = array<i64: 1, 32>}, {pipeline_mode = #tpu.pipeline_mode<synchronous>, transform_indices = @transform_4, window_bounds = array<i64: 32, 64>}, {pipeline_mode = #tpu.pipeline_mode<synchronous>, transform_indices = @transform_5, window_bounds = array<i64: 1, 64>}, {pipeline_mode = #tpu.pipeline_mode<synchronous>, transform_indices = @transform_6, window_bounds = array<i64: 32, 32>}, {pipeline_mode = #tpu.pipeline_mode<synchronous>, transform_indices = @transform_7, window_bounds = array<i64: 1, 32>}, {pipeline_mode = #tpu.pipeline_mode<synchronous>, transform_indices = @transform_8, window_bounds = array<i64: 1, 32>}, {pipeline_mode = #tpu.pipeline_mode<synchronous>, transform_indices = @transform_9, window_bounds = array<i64: 1, 32>}, {pipeline_mode = #tpu.pipeline_mode<synchronous>, transform_indices = @transform_10, window_bounds = array<i64: 32, 128>}, {pipeline_mode = #tpu.pipeline_mode<synchronous>, transform_indices = @transform_11, window_bounds = array<i64: 1, 128>}, {pipeline_mode = #tpu.pipeline_mode<synchronous>, transform_indices = @transform_12, window_bounds = array<i64: 128, 32>}, {pipeline_mode = #tpu.pipeline_mode<synchronous>, transform_indices = @transform_13, window_bounds = array<i64: 1, 32>}, {pipeline_mode = #tpu.pipeline_mode<synchronous>, transform_indices = @transform_14, window_bounds = array<i64: 1, 32>}, {pipeline_mode = #tpu.pipeline_mode<synchronous>, transform_indices = @transform_15, window_bounds = array<i64: 1, 32>}, {transform_indices = @transform_16, window_bounds = array<i64: 1, 8, 32>}]} {
    %c8_i32 = arith.constant 8 : i32
    %0 = arith.muli %arg1, %c8_i32 : i32
    %c0_i32 = arith.constant 0 : i32
    %1 = arith.cmpi eq, %arg1, %c0_i32 : i32
    %2 = arith.extui %1 : i1 to i32
    %c0_i32_0 = arith.constant 0 : i32
    %3 = arith.cmpi ne, %2, %c0_i32_0 : i32
    scf.if %3 {
      %c0_51 = arith.constant 0 : index
      %c0_52 = arith.constant 0 : index
      %c0_53 = arith.constant 0 : index
      %110 = vector.load %arg3[%c0_51, %c0_52, %c0_53] : memref<1x8x32xbf16, #tpu.memory_space<vmem>>, vector<1x8x32xbf16>
      %111 = vector.shape_cast %110 : vector<1x8x32xbf16> to vector<8x32xbf16>
      %c0_54 = arith.constant 0 : index
      %c0_55 = arith.constant 0 : index
      %112 = vector.load %arg6[%c0_54, %c0_55] : memref<32x64xbf16, #tpu.memory_space<vmem>>, vector<32x64xbf16>
      %cst_56 = arith.constant dense<0.000000e+00> : vector<8x64xf32>
      %113 = tpu.matmul %111, %112, %cst_56 {dimension_numbers = #tpu.dot_dimension_numbers<[1], [0], [0], [1], [0, 0, 1, 1], [], []>} : vector<8x32xbf16>, vector<32x64xbf16>, vector<8x64xf32> -> vector<8x64xf32>
      %c0_57 = arith.constant 0 : index
      %c0_58 = arith.constant 0 : index
      %114 = vector.load %arg7[%c0_57, %c0_58] : memref<1x64xf32, #tpu.memory_space<vmem>>, vector<1x64xf32>
      %115 = vector.broadcast %114 : vector<1x64xf32> to vector<8x64xf32>
      %116 = arith.addf %113, %115 : vector<8x64xf32>
      %117 = vector.extract_strided_slice %116 {offsets = [0, 0], sizes = [8, 32], strides = [1, 1]} : vector<8x64xf32> to vector<8x32xf32>
      %118 = vector.shape_cast %117 : vector<8x32xf32> to vector<8x4x8xf32>
      %119 = vector.extract_strided_slice %116 {offsets = [0, 32], sizes = [8, 32], strides = [1, 1]} : vector<8x64xf32> to vector<8x32xf32>
      %120 = vector.shape_cast %119 : vector<8x32xf32> to vector<8x4x8xf32>
      %121 = tpu.transpose %118, [1, 0, 2] : vector<8x4x8xf32> -> vector<4x8x8xf32>
      %122 = arith.truncf %121 : vector<4x8x8xf32> to vector<4x8x8xbf16>
      %c0_59 = arith.constant 0 : index
      %c0_60 = arith.constant 0 : index
      %c0_61 = arith.constant 0 : index
      %123 = vector.load %arg19[%c0_59, %c0_60, %c0_61] : memref<4x8x8xbf16, #tpu.memory_space<vmem>>, vector<4x8x8xbf16>
      tpu.vector_store %arg19[%c0_59, %c0_60, %c0_61], %122 {strides = array<i32>} : memref<4x8x8xbf16, #tpu.memory_space<vmem>>, vector<4x8x8xbf16>,
      %124 = tpu.transpose %120, [1, 0, 2] : vector<8x4x8xf32> -> vector<4x8x8xf32>
      %125 = arith.truncf %124 : vector<4x8x8xf32> to vector<4x8x8xbf16>
      %c0_62 = arith.constant 0 : index
      %c0_63 = arith.constant 0 : index
      %c0_64 = arith.constant 0 : index
      %126 = vector.load %arg20[%c0_62, %c0_63, %c0_64] : memref<4x8x8xbf16, #tpu.memory_space<vmem>>, vector<4x8x8xbf16>
      tpu.vector_store %arg20[%c0_62, %c0_63, %c0_64], %125 {strides = array<i32>} : memref<4x8x8xbf16, #tpu.memory_space<vmem>>, vector<4x8x8xbf16>,
    } else {
    }
    %c0 = arith.constant 0 : index
    %c0_1 = arith.constant 0 : index
    %c0_2 = arith.constant 0 : index
    %4 = vector.load %arg2[%c0, %c0_1, %c0_2] : memref<1x8x32xf32, #tpu.memory_space<vmem>>, vector<1x8x32xf32>
    %5 = vector.shape_cast %4 : vector<1x8x32xf32> to vector<8x32xf32>
    %6 = arith.truncf %5 : vector<8x32xf32> to vector<8x32xbf16>
    %c0_3 = arith.constant 0 : index
    %c0_4 = arith.constant 0 : index
    %7 = vector.load %arg4[%c0_3, %c0_4] : memref<32x32xbf16, #tpu.memory_space<vmem>>, vector<32x32xbf16>
    %cst = arith.constant dense<0.000000e+00> : vector<8x32xf32>
    %8 = tpu.matmul %6, %7, %cst {dimension_numbers = #tpu.dot_dimension_numbers<[1], [0], [0], [1], [0, 0, 1, 1], [], []>} : vector<8x32xbf16>, vector<32x32xbf16>, vector<8x32xf32> -> vector<8x32xf32>
    %c0_5 = arith.constant 0 : index
    %c0_6 = arith.constant 0 : index
    %9 = vector.load %arg5[%c0_5, %c0_6] : memref<1x32xf32, #tpu.memory_space<vmem>>, vector<1x32xf32>
    %10 = vector.broadcast %9 : vector<1x32xf32> to vector<8x32xf32>
    %11 = arith.addf %8, %10 : vector<8x32xf32>
    %12 = vector.shape_cast %11 : vector<8x32xf32> to vector<8x4x8xf32>
    %13 = tpu.transpose %12, [1, 0, 2] : vector<8x4x8xf32> -> vector<4x8x8xf32>
    %14 = arith.truncf %13 : vector<4x8x8xf32> to vector<4x8x8xbf16>
    %15 = tpu.iota {dimensions = array<i32: 1>} : vector<1x8x8xi32>
    %16 = vector.broadcast %0 : i32 to vector<1x8x8xi32>
    %17 = arith.addi %16, %15 : vector<1x8x8xi32>
    %cst_7 = arith.constant -1.000000e+30 : f32
    %18 = vector.broadcast %cst_7 : f32 to vector<4x8x1xf32>
    %cst_8 = arith.constant 0.000000e+00 : f32
    %19 = vector.broadcast %cst_8 : f32 to vector<4x8x1xf32>
    %cst_9 = arith.constant 0.000000e+00 : f32
    %20 = vector.broadcast %cst_9 : f32 to vector<4x8x8xf32>
    %c1_i32 = arith.constant 1 : i32
    %21 = arith.addi %arg1, %c1_i32 : i32
    %c0_i32_10 = arith.constant 0 : i32
    %22 = arith.subi %21, %c0_i32_10 : i32
    %23 = arith.addi %c0_i32_10, %22 : i32
    %c1_i32_11 = arith.constant 1 : i32
    %24:3 = scf.for %arg21 = %c0_i32_10 to %23 step %c1_i32_11 iter_args(%arg22 = %18, %arg23 = %19, %arg24 = %20) -> (vector<4x8x1xf32>, vector<4x8x1xf32>, vector<4x8x8xf32>)  : i32 {
      %c8_i32_51 = arith.constant 8 : i32
      %110 = arith.muli %arg21, %c8_i32_51 : i32
      %111 = tpu.assume_multiple %110, 8 : i32
      %c0_52 = arith.constant 0 : index
      %112 = arith.index_cast %111 : i32 to index
      %c0_53 = arith.constant 0 : index
      %113 = vector.load %arg19[%c0_52, %112, %c0_53] : memref<4x8x8xbf16, #tpu.memory_space<vmem>>, vector<4x8x8xbf16>
      %c0_54 = arith.constant 0 : index
      %114 = arith.index_cast %111 : i32 to index
      %c0_55 = arith.constant 0 : index
      %115 = vector.load %arg20[%c0_54, %114, %c0_55] : memref<4x8x8xbf16, #tpu.memory_space<vmem>>, vector<4x8x8xbf16>
      "tpu.trace_start"() <{level = 10 : i32, message = "ntd,nsd->nts"}> : () -> ()
      %cst_56 = arith.constant dense<0.000000e+00> : vector<4x8x8xf32>
      %116 = tpu.matmul %14, %113, %cst_56 {dimension_numbers = #tpu.dot_dimension_numbers<[2], [2], [1], [1], [0, 0, 0, 1, 1, 1], [0], [0]>} : vector<4x8x8xbf16>, vector<4x8x8xbf16>, vector<4x8x8xf32> -> vector<4x8x8xf32>
      "tpu.trace_stop"() : () -> ()
      %cst_57 = arith.constant 0.353553385 : f32
      %117 = vector.broadcast %cst_57 : f32 to vector<4x8x8xf32>
      %118 = arith.mulf %116, %117 : vector<4x8x8xf32>
      %119 = tpu.iota {dimensions = array<i32: 2>} : vector<1x8x8xi32>
      %120 = vector.broadcast %111 : i32 to vector<1x8x8xi32>
      %121 = arith.addi %120, %119 : vector<1x8x8xi32>
      %122 = arith.cmpi sgt, %121, %17 : vector<1x8x8xi32>
      %cst_58 = arith.constant -1.000000e+30 : f32
      %123 = vector.shape_cast %122 : vector<1x8x8xi1> to vector<1x8x8xi1>
      %124 = vector.broadcast %123 : vector<1x8x8xi1> to vector<4x8x8xi1>
      %125 = vector.broadcast %cst_58 : f32 to vector<4x8x8xf32>
      %126 = arith.select %124, %125, %118 : vector<4x8x8xi1>, vector<4x8x8xf32>
      %cst_59 = arith.constant dense<0xFF800000> : vector<4x8xf32>
      %127 = vector.multi_reduction <maximumf>, %126, %cst_59 [2] : vector<4x8x8xf32> to vector<4x8xf32>
      %128 = vector.shape_cast %127 : vector<4x8xf32> to vector<4x8x1xf32>
      %129 = arith.maximumf %arg22, %128 : vector<4x8x1xf32>
      %130 = arith.subf %arg22, %129 : vector<4x8x1xf32>
      %131 = math.exp %130 : vector<4x8x1xf32>
      %132 = vector.broadcast %129 : vector<4x8x1xf32> to vector<4x8x8xf32>
      %133 = arith.subf %126, %132 : vector<4x8x8xf32>
      %134 = math.exp %133 : vector<4x8x8xf32>
      %135 = arith.mulf %131, %arg23 : vector<4x8x1xf32>
      %cst_60 = arith.constant dense<0.000000e+00> : vector<4x8xf32>
      %136 = vector.multi_reduction <add>, %134, %cst_60 [2] : vector<4x8x8xf32> to vector<4x8xf32>
      %137 = vector.shape_cast %136 : vector<4x8xf32> to vector<4x8x1xf32>
      %138 = arith.addf %135, %137 : vector<4x8x1xf32>
      %139 = vector.broadcast %131 : vector<4x8x1xf32> to vector<4x8x8xf32>
      %140 = arith.mulf %139, %arg24 : vector<4x8x8xf32>
      %141 = arith.truncf %134 : vector<4x8x8xf32> to vector<4x8x8xbf16>
      "tpu.trace_start"() <{level = 10 : i32, message = "nts,nsd->ntd"}> : () -> ()
      %cst_61 = arith.constant dense<0.000000e+00> : vector<4x8x8xf32>
      %142 = tpu.matmul %141, %115, %cst_61 {dimension_numbers = #tpu.dot_dimension_numbers<[2], [1], [1], [2], [0, 0, 0, 1, 1, 2], [0], [0]>} : vector<4x8x8xbf16>, vector<4x8x8xbf16>, vector<4x8x8xf32> -> vector<4x8x8xf32>
      "tpu.trace_stop"() : () -> ()
      %143 = arith.addf %140, %142 : vector<4x8x8xf32>
      scf.yield %129, %138, %143 : vector<4x8x1xf32>, vector<4x8x1xf32>, vector<4x8x8xf32>
    }
    %25 = tpu.reciprocal %24#1 {approx = true} : vector<4x8x1xf32> -> vector<4x8x1xf32>
    %26 = vector.broadcast %25 : vector<4x8x1xf32> to vector<4x8x8xf32>
    %27 = arith.mulf %24#2, %26 : vector<4x8x8xf32>
    %28 = tpu.transpose %27, [1, 0, 2] : vector<4x8x8xf32> -> vector<8x4x8xf32>
    %29 = vector.shape_cast %28 : vector<8x4x8xf32> to vector<8x32xf32>
    %30 = arith.truncf %29 : vector<8x32xf32> to vector<8x32xbf16>
    %c0_12 = arith.constant 0 : index
    %c0_13 = arith.constant 0 : index
    %31 = vector.load %arg8[%c0_12, %c0_13] : memref<32x32xbf16, #tpu.memory_space<vmem>>, vector<32x32xbf16>
    %cst_14 = arith.constant dense<0.000000e+00> : vector<8x32xf32>
    %32 = tpu.matmul %30, %31, %cst_14 {dimension_numbers = #tpu.dot_dimension_numbers<[1], [0], [0], [1], [0, 0, 1, 1], [], []>} : vector<8x32xbf16>, vector<32x32xbf16>, vector<8x32xf32> -> vector<8x32xf32>
    %c0_15 = arith.constant 0 : index
    %c0_16 = arith.constant 0 : index
    %33 = vector.load %arg9[%c0_15, %c0_16] : memref<1x32xf32, #tpu.memory_space<vmem>>, vector<1x32xf32>
    %34 = vector.broadcast %33 : vector<1x32xf32> to vector<8x32xf32>
    %35 = arith.addf %32, %34 : vector<8x32xf32>
    %36 = arith.addf %5, %35 : vector<8x32xf32>
    %c0_17 = arith.constant 0 : index
    %c0_18 = arith.constant 0 : index
    %37 = vector.load %arg10[%c0_17, %c0_18] : memref<1x32xf32, #tpu.memory_space<vmem>>, vector<1x32xf32>
    %c0_19 = arith.constant 0 : index
    %c0_20 = arith.constant 0 : index
    %38 = vector.load %arg11[%c0_19, %c0_20] : memref<1x32xf32, #tpu.memory_space<vmem>>, vector<1x32xf32>
    %cst_21 = arith.constant dense<0.000000e+00> : vector<8xf32>
    %39 = vector.multi_reduction <add>, %36, %cst_21 [1] : vector<8x32xf32> to vector<8xf32>
    %40 = vector.shape_cast %39 : vector<8xf32> to vector<8x1xf32>
    %cst_22 = arith.constant 3.200000e+01 : f32
    %41 = vector.broadcast %cst_22 : f32 to vector<8x1xf32>
    %42 = arith.divf %40, %41 : vector<8x1xf32>
    %43 = vector.broadcast %42 : vector<8x1xf32> to vector<8x32xf32>
    %44 = arith.subf %36, %43 : vector<8x32xf32>
    %45 = arith.mulf %44, %44 : vector<8x32xf32>
    %cst_23 = arith.constant dense<0.000000e+00> : vector<8xf32>
    %46 = vector.multi_reduction <add>, %45, %cst_23 [1] : vector<8x32xf32> to vector<8xf32>
    %47 = vector.shape_cast %46 : vector<8xf32> to vector<8x1xf32>
    %cst_24 = arith.constant 3.200000e+01 : f32
    %48 = vector.broadcast %cst_24 : f32 to vector<8x1xf32>
    %49 = arith.divf %47, %48 : vector<8x1xf32>
    %50 = vector.broadcast %42 : vector<8x1xf32> to vector<8x32xf32>
    %51 = arith.subf %36, %50 : vector<8x32xf32>
    %cst_25 = arith.constant 9.99999974E-6 : f32
    %52 = vector.broadcast %cst_25 : f32 to vector<8x1xf32>
    %53 = arith.addf %49, %52 : vector<8x1xf32>
    %54 = math.rsqrt %53 : vector<8x1xf32>
    %55 = vector.broadcast %54 : vector<8x1xf32> to vector<8x32xf32>
    %56 = arith.mulf %51, %55 : vector<8x32xf32>
    %57 = vector.broadcast %37 : vector<1x32xf32> to vector<8x32xf32>
    %58 = arith.mulf %56, %57 : vector<8x32xf32>
    %59 = vector.broadcast %38 : vector<1x32xf32> to vector<8x32xf32>
    %60 = arith.addf %58, %59 : vector<8x32xf32>
    %61 = arith.truncf %60 : vector<8x32xf32> to vector<8x32xbf16>
    %c0_26 = arith.constant 0 : index
    %c0_27 = arith.constant 0 : index
    %62 = vector.load %arg12[%c0_26, %c0_27] : memref<32x128xbf16, #tpu.memory_space<vmem>>, vector<32x128xbf16>
    %cst_28 = arith.constant dense<0.000000e+00> : vector<8x128xf32>
    %63 = tpu.matmul %61, %62, %cst_28 {dimension_numbers = #tpu.dot_dimension_numbers<[1], [0], [0], [1], [0, 0, 1, 1], [], []>} : vector<8x32xbf16>, vector<32x128xbf16>, vector<8x128xf32> -> vector<8x128xf32>
    %c0_29 = arith.constant 0 : index
    %c0_30 = arith.constant 0 : index
    %64 = vector.load %arg13[%c0_29, %c0_30] : memref<1x128xf32, #tpu.memory_space<vmem>>, vector<1x128xf32>
    %65 = vector.broadcast %64 : vector<1x128xf32> to vector<8x128xf32>
    %66 = arith.addf %63, %65 : vector<8x128xf32>
    %cst_31 = arith.constant 5.000000e-01 : f32
    %67 = vector.broadcast %cst_31 : f32 to vector<8x128xf32>
    %68 = arith.mulf %67, %66 : vector<8x128xf32>
    %cst_32 = arith.constant 2.000000e+00 : f32
    %69 = math.sqrt %cst_32 : f32
    %70 = vector.broadcast %69 : f32 to vector<8x128xf32>
    %71 = arith.divf %66, %70 : vector<8x128xf32>
    %72 = math.erf %71 : vector<8x128xf32>
    %cst_33 = arith.constant 1.000000e+00 : f32
    %73 = vector.broadcast %cst_33 : f32 to vector<8x128xf32>
    %74 = arith.addf %73, %72 : vector<8x128xf32>
    %75 = arith.mulf %68, %74 : vector<8x128xf32>
    %76 = arith.truncf %75 : vector<8x128xf32> to vector<8x128xbf16>
    %c0_34 = arith.constant 0 : index
    %c0_35 = arith.constant 0 : index
    %77 = vector.load %arg14[%c0_34, %c0_35] : memref<128x32xbf16, #tpu.memory_space<vmem>>, vector<128x32xbf16>
    %cst_36 = arith.constant dense<0.000000e+00> : vector<8x32xf32>
    %78 = tpu.matmul %76, %77, %cst_36 {dimension_numbers = #tpu.dot_dimension_numbers<[1], [0], [0], [1], [0, 0, 1, 1], [], []>} : vector<8x128xbf16>, vector<128x32xbf16>, vector<8x32xf32> -> vector<8x32xf32>
    %c0_37 = arith.constant 0 : index
    %c0_38 = arith.constant 0 : index
    %79 = vector.load %arg15[%c0_37, %c0_38] : memref<1x32xf32, #tpu.memory_space<vmem>>, vector<1x32xf32>
    %80 = vector.broadcast %79 : vector<1x32xf32> to vector<8x32xf32>
    %81 = arith.addf %78, %80 : vector<8x32xf32>
    %82 = arith.addf %60, %81 : vector<8x32xf32>
    %c0_39 = arith.constant 0 : index
    %c0_40 = arith.constant 0 : index
    %83 = vector.load %arg16[%c0_39, %c0_40] : memref<1x32xf32, #tpu.memory_space<vmem>>, vector<1x32xf32>
    %c0_41 = arith.constant 0 : index
    %c0_42 = arith.constant 0 : index
    %84 = vector.load %arg17[%c0_41, %c0_42] : memref<1x32xf32, #tpu.memory_space<vmem>>, vector<1x32xf32>
    %cst_43 = arith.constant dense<0.000000e+00> : vector<8xf32>
    %85 = vector.multi_reduction <add>, %82, %cst_43 [1] : vector<8x32xf32> to vector<8xf32>
    %86 = vector.shape_cast %85 : vector<8xf32> to vector<8x1xf32>
    %cst_44 = arith.constant 3.200000e+01 : f32
    %87 = vector.broadcast %cst_44 : f32 to vector<8x1xf32>
    %88 = arith.divf %86, %87 : vector<8x1xf32>
    %89 = vector.broadcast %88 : vector<8x1xf32> to vector<8x32xf32>
    %90 = arith.subf %82, %89 : vector<8x32xf32>
    %91 = arith.mulf %90, %90 : vector<8x32xf32>
    %cst_45 = arith.constant dense<0.000000e+00> : vector<8xf32>
    %92 = vector.multi_reduction <add>, %91, %cst_45 [1] : vector<8x32xf32> to vector<8xf32>
    %93 = vector.shape_cast %92 : vector<8xf32> to vector<8x1xf32>
    %cst_46 = arith.constant 3.200000e+01 : f32
    %94 = vector.broadcast %cst_46 : f32 to vector<8x1xf32>
    %95 = arith.divf %93, %94 : vector<8x1xf32>
    %96 = vector.broadcast %88 : vector<8x1xf32> to vector<8x32xf32>
    %97 = arith.subf %82, %96 : vector<8x32xf32>
    %cst_47 = arith.constant 9.99999974E-6 : f32
    %98 = vector.broadcast %cst_47 : f32 to vector<8x1xf32>
    %99 = arith.addf %95, %98 : vector<8x1xf32>
    %100 = math.rsqrt %99 : vector<8x1xf32>
    %101 = vector.broadcast %100 : vector<8x1xf32> to vector<8x32xf32>
    %102 = arith.mulf %97, %101 : vector<8x32xf32>
    %103 = vector.broadcast %83 : vector<1x32xf32> to vector<8x32xf32>
    %104 = arith.mulf %102, %103 : vector<8x32xf32>
    %105 = vector.broadcast %84 : vector<1x32xf32> to vector<8x32xf32>
    %106 = arith.addf %104, %105 : vector<8x32xf32>
    %c0_48 = arith.constant 0 : index
    %c0_49 = arith.constant 0 : index
    %c0_50 = arith.constant 0 : index
    %107 = vector.load %arg18[%c0_48, %c0_49, %c0_50] : memref<1x8x32xf32, #tpu.memory_space<vmem>>, vector<1x8x32xf32>
    %108 = vector.shape_cast %107 : vector<1x8x32xf32> to vector<8x32xf32>
    %109 = vector.shape_cast %106 : vector<8x32xf32> to vector<1x8x32xf32>
    tpu.vector_store %arg18[%c0_48, %c0_49, %c0_50], %109 {strides = array<i32>} : memref<1x8x32xf32, #tpu.memory_space<vmem>>, vector<1x8x32xf32>,
    return
  }
  func.func @transform_0(%arg0: i32, %arg1: i32) -> (i32, i32, i32) {
    %c0_i32 = arith.constant 0 : i32
    %c0_i32_0 = arith.constant 0 : i32
    return %arg0, %arg1, %c0_i32 : i32, i32, i32
  }
  func.func @transform_1(%arg0: i32, %arg1: i32) -> (i32, i32, i32) {
    %c0_i32 = arith.constant 0 : i32
    %c0_i32_0 = arith.constant 0 : i32
    %c0_i32_1 = arith.constant 0 : i32
    return %arg0, %c0_i32, %c0_i32_0 : i32, i32, i32
  }
  func.func @transform_2(%arg0: i32, %arg1: i32) -> (i32, i32) {
    %c0_i32 = arith.constant 0 : i32
    %c0_i32_0 = arith.constant 0 : i32
    %c0_i32_1 = arith.constant 0 : i32
    return %c0_i32, %c0_i32_0 : i32, i32
  }
  func.func @transform_3(%arg0: i32, %arg1: i32) -> (i32, i32) {
    %c0_i32 = arith.constant 0 : i32
    %c0_i32_0 = arith.constant 0 : i32
    %c0_i32_1 = arith.constant 0 : i32
    return %c0_i32, %c0_i32_0 : i32, i32
  }
  func.func @transform_4(%arg0: i32, %arg1: i32) -> (i32, i32) {
    %c0_i32 = arith.constant 0 : i32
    %c0_i32_0 = arith.constant 0 : i32
    %c0_i32_1 = arith.constant 0 : i32
    return %c0_i32, %c0_i32_0 : i32, i32
  }
  func.func @transform_5(%arg0: i32, %arg1: i32) -> (i32, i32) {
    %c0_i32 = arith.constant 0 : i32
    %c0_i32_0 = arith.constant 0 : i32
    %c0_i32_1 = arith.constant 0 : i32
    return %c0_i32, %c0_i32_0 : i32, i32
  }
  func.func @transform_6(%arg0: i32, %arg1: i32) -> (i32, i32) {
    %c0_i32 = arith.constant 0 : i32
    %c0_i32_0 = arith.constant 0 : i32
    %c0_i32_1 = arith.constant 0 : i32
    return %c0_i32, %c0_i32_0 : i32, i32
  }
  func.func @transform_7(%arg0: i32, %arg1: i32) -> (i32, i32) {
    %c0_i32 = arith.constant 0 : i32
    %c0_i32_0 = arith.constant 0 : i32
    %c0_i32_1 = arith.constant 0 : i32
    return %c0_i32, %c0_i32_0 : i32, i32
  }
  func.func @transform_8(%arg0: i32, %arg1: i32) -> (i32, i32) {
    %c0_i32 = arith.constant 0 : i32
    %c0_i32_0 = arith.constant 0 : i32
    %c0_i32_1 = arith.constant 0 : i32
    return %c0_i32, %c0_i32_0 : i32, i32
  }
  func.func @transform_9(%arg0: i32, %arg1: i32) -> (i32, i32) {
    %c0_i32 = arith.constant 0 : i32
    %c0_i32_0 = arith.constant 0 : i32
    %c0_i32_1 = arith.constant 0 : i32
    return %c0_i32, %c0_i32_0 : i32, i32
  }
  func.func @transform_10(%arg0: i32, %arg1: i32) -> (i32, i32) {
    %c0_i32 = arith.constant 0 : i32
    %c0_i32_0 = arith.constant 0 : i32
    %c0_i32_1 = arith.constant 0 : i32
    return %c0_i32, %c0_i32_0 : i32, i32
  }
  func.func @transform_11(%arg0: i32, %arg1: i32) -> (i32, i32) {
    %c0_i32 = arith.constant 0 : i32
    %c0_i32_0 = arith.constant 0 : i32
    %c0_i32_1 = arith.constant 0 : i32
    return %c0_i32, %c0_i32_0 : i32, i32
  }
  func.func @transform_12(%arg0: i32, %arg1: i32) -> (i32, i32) {
    %c0_i32 = arith.constant 0 : i32
    %c0_i32_0 = arith.constant 0 : i32
    %c0_i32_1 = arith.constant 0 : i32
    return %c0_i32, %c0_i32_0 : i32, i32
  }
  func.func @transform_13(%arg0: i32, %arg1: i32) -> (i32, i32) {
    %c0_i32 = arith.constant 0 : i32
    %c0_i32_0 = arith.constant 0 : i32
    %c0_i32_1 = arith.constant 0 : i32
    return %c0_i32, %c0_i32_0 : i32, i32
  }
  func.func @transform_14(%arg0: i32, %arg1: i32) -> (i32, i32) {
    %c0_i32 = arith.constant 0 : i32
    %c0_i32_0 = arith.constant 0 : i32
    %c0_i32_1 = arith.constant 0 : i32
    return %c0_i32, %c0_i32_0 : i32, i32
  }
  func.func @transform_15(%arg0: i32, %arg1: i32) -> (i32, i32) {
    %c0_i32 = arith.constant 0 : i32
    %c0_i32_0 = arith.constant 0 : i32
    %c0_i32_1 = arith.constant 0 : i32
    return %c0_i32, %c0_i32_0 : i32, i32
  }
  func.func @transform_16(%arg0: i32, %arg1: i32) -> (i32, i32, i32) {
    %c0_i32 = arith.constant 0 : i32
    %c0_i32_0 = arith.constant 0 : i32
    return %arg0, %arg1, %c0_i32 : i32, i32, i32
  }
}

module attributes {stable_mosaic.version = 11 : i64} {
  func.func @decoder_block_kernel(%arg0: i32, %arg1: i32, %arg2: memref<1x8x32xf32, #tpu.memory_space<vmem>>, %arg3: memref<1x8x32xbf16, #tpu.memory_space<vmem>>, %arg4: memref<32x32xbf16, #tpu.memory_space<vmem>>, %arg5: memref<1x32xf32, #tpu.memory_space<vmem>>, %arg6: memref<32x64xbf16, #tpu.memory_space<vmem>>, %arg7: memref<1x64xf32, #tpu.memory_space<vmem>>, %arg8: memref<32x32xbf16, #tpu.memory_space<vmem>>, %arg9: memref<1x32xf32, #tpu.memory_space<vmem>>, %arg10: memref<1x32xf32, #tpu.memory_space<vmem>>, %arg11: memref<1x32xf32, #tpu.memory_space<vmem>>, %arg12: memref<32x128xbf16, #tpu.memory_space<vmem>>, %arg13: memref<1x128xf32, #tpu.memory_space<vmem>>, %arg14: memref<128x32xbf16, #tpu.memory_space<vmem>>, %arg15: memref<1x32xf32, #tpu.memory_space<vmem>>, %arg16: memref<1x32xf32, #tpu.memory_space<vmem>>, %arg17: memref<1x32xf32, #tpu.memory_space<vmem>>, %arg18: memref<1x8x32xf32, #tpu.memory_space<vmem>>, %arg19: memref<4x8x8xbf16, #tpu.memory_space<vmem>>, %arg20: memref<4x8x8xbf16, #tpu.memory_space<vmem>>) attributes {dimension_semantics = [#tpu.dimension_semantics<parallel>, #tpu.dimension_semantics<arbitrary>], iteration_bounds = array<i64: 2, 1>, scalar_prefetch = 0 : i64, scratch_operands = 2 : i64, tpu.core_type = #tpu.core_type<tc>, window_params = [{transform_indices = @transform_0, window_bounds = array<i64: 1, 8, 32>}, {transform_indices = @transform_1, window_bounds = array<i64: 1, 8, 32>}, {pipeline_mode = #tpu.pipeline_mode<synchronous>, transform_indices = @transform_2, window_bounds = array<i64: 32, 32>}, {pipeline_mode = #tpu.pipeline_mode<synchronous>, transform_indices = @transform_3, window_bounds = array<i64: 1, 32>}, {pipeline_mode = #tpu.pipeline_mode<synchronous>, transform_indices = @transform_4, window_bounds = array<i64: 32, 64>}, {pipeline_mode = #tpu.pipeline_mode<synchronous>, transform_indices = @transform_5, window_bounds = array<i64: 1, 64>}, {pipeline_mode = #tpu.pipeline_mode<synchronous>, transform_indices = @transform_6, window_bounds = array<i64: 32, 32>}, {pipeline_mode = #tpu.pipeline_mode<synchronous>, transform_indices = @transform_7, window_bounds = array<i64: 1, 32>}, {pipeline_mode = #tpu.pipeline_mode<synchronous>, transform_indices = @transform_8, window_bounds = array<i64: 1, 32>}, {pipeline_mode = #tpu.pipeline_mode<synchronous>, transform_indices = @transform_9, window_bounds = array<i64: 1, 32>}, {pipeline_mode = #tpu.pipeline_mode<synchronous>, transform_indices = @transform_10, window_bounds = array<i64: 32, 128>}, {pipeline_mode = #tpu.pipeline_mode<synchronous>, transform_indices = @transform_11, window_bounds = array<i64: 1, 128>}, {pipeline_mode = #tpu.pipeline_mode<synchronous>, transform_indices = @transform_12, window_bounds = array<i64: 128, 32>}, {pipeline_mode = #tpu.pipeline_mode<synchronous>, transform_indices = @transform_13, window_bounds = array<i64: 1, 32>}, {pipeline_mode = #tpu.pipeline_mode<synchronous>, transform_indices = @transform_14, window_bounds = array<i64: 1, 32>}, {pipeline_mode = #tpu.pipeline_mode<synchronous>, transform_indices = @transform_15, window_bounds = array<i64: 1, 32>}, {transform_indices = @transform_16, window_bounds = array<i64: 1, 8, 32>}]} {
    %c8_i32 = arith.constant 8 : i32
    %0 = arith.muli %arg1, %c8_i32 : i32
    %c0_i32 = arith.constant 0 : i32
    %1 = arith.cmpi eq, %arg1, %c0_i32 : i32
    %2 = arith.extui %1 : i1 to i32
    %c0_i32_0 = arith.constant 0 : i32
    %3 = arith.cmpi ne, %2, %c0_i32_0 : i32
    scf.if %3 {
      %c0_51 = arith.constant 0 : index
      %c0_52 = arith.constant 0 : index
      %c0_53 = arith.constant 0 : index
      %110 = vector.load %arg3[%c0_51, %c0_52, %c0_53] : memref<1x8x32xbf16, #tpu.memory_space<vmem>>, vector<1x8x32xbf16>
      %111 = vector.shape_cast %110 : vector<1x8x32xbf16> to vector<8x32xbf16>
      %c0_54 = arith.constant 0 : index
      %c0_55 = arith.constant 0 : index
      %112 = vector.load %arg6[%c0_54, %c0_55] : memref<32x64xbf16, #tpu.memory_space<vmem>>, vector<32x64xbf16>
      %cst_56 = arith.constant dense<0.000000e+00> : vector<8x64xf32>
      %113 = tpu.matmul %111, %112, %cst_56 {dimension_numbers = #tpu.dot_dimension_numbers<[1], [0], [0], [1], [0, 0, 1, 1], [], []>} : vector<8x32xbf16>, vector<32x64xbf16>, vector<8x64xf32> -> vector<8x64xf32>
      %c0_57 = arith.constant 0 : index
      %c0_58 = arith.constant 0 : index
      %114 = vector.load %arg7[%c0_57, %c0_58] : memref<1x64xf32, #tpu.memory_space<vmem>>, vector<1x64xf32>
      %115 = vector.broadcast %114 : vector<1x64xf32> to vector<8x64xf32>
      %116 = arith.addf %113, %115 : vector<8x64xf32>
      %117 = vector.extract_strided_slice %116 {offsets = [0, 0], sizes = [8, 32], strides = [1, 1]} : vector<8x64xf32> to vector<8x32xf32>
      %118 = vector.shape_cast %117 : vector<8x32xf32> to vector<8x4x8xf32>
      %119 = vector.extract_strided_slice %116 {offsets = [0, 32], sizes = [8, 32], strides = [1, 1]} : vector<8x64xf32> to vector<8x32xf32>
      %120 = vector.shape_cast %119 : vector<8x32xf32> to vector<8x4x8xf32>
      %121 = tpu.transpose %118, [1, 0, 2] : vector<8x4x8xf32> -> vector<4x8x8xf32>
      %122 = arith.truncf %121 : vector<4x8x8xf32> to vector<4x8x8xbf16>
      %c0_59 = arith.constant 0 : index
      %c0_60 = arith.constant 0 : index
      %c0_61 = arith.constant 0 : index
      %123 = vector.load %arg19[%c0_59, %c0_60, %c0_61] : memref<4x8x8xbf16, #tpu.memory_space<vmem>>, vector<4x8x8xbf16>
      tpu.vector_store %arg19[%c0_59, %c0_60, %c0_61], %122 {strides = array<i32>} : memref<4x8x8xbf16, #tpu.memory_space<vmem>>, vector<4x8x8xbf16>,
      %124 = tpu.transpose %120, [1, 0, 2] : vector<8x4x8xf32> -> vector<4x8x8xf32>
      %125 = arith.truncf %124 : vector<4x8x8xf32> to vector<4x8x8xbf16>
      %c0_62 = arith.constant 0 : index
      %c0_63 = arith.constant 0 : index
      %c0_64 = arith.constant 0 : index
      %126 = vector.load %arg20[%c0_62, %c0_63, %c0_64] : memref<4x8x8xbf16, #tpu.memory_space<vmem>>, vector<4x8x8xbf16>
      tpu.vector_store %arg20[%c0_62, %c0_63, %c0_64], %125 {strides = array<i32>} : memref<4x8x8xbf16, #tpu.memory_space<vmem>>, vector<4x8x8xbf16>,
    } else {
    }
    %c0 = arith.constant 0 : index
    %c0_1 = arith.constant 0 : index
    %c0_2 = arith.constant 0 : index
    %4 = vector.load %arg2[%c0, %c0_1, %c0_2] : memref<1x8x32xf32, #tpu.memory_space<vmem>>, vector<1x8x32xf32>
    %5 = vector.shape_cast %4 : vector<1x8x32xf32> to vector<8x32xf32>
    %6 = arith.truncf %5 : vector<8x32xf32> to vector<8x32xbf16>
    %c0_3 = arith.constant 0 : index
    %c0_4 = arith.constant 0 : index
    %7 = vector.load %arg4[%c0_3, %c0_4] : memref<32x32xbf16, #tpu.memory_space<vmem>>, vector<32x32xbf16>
    %cst = arith.constant dense<0.000000e+00> : vector<8x32xf32>
    %8 = tpu.matmul %6, %7, %cst {dimension_numbers = #tpu.dot_dimension_numbers<[1], [0], [0], [1], [0, 0, 1, 1], [], []>} : vector<8x32xbf16>, vector<32x32xbf16>, vector<8x32xf32> -> vector<8x32xf32>
    %c0_5 = arith.constant 0 : index
    %c0_6 = arith.constant 0 : index
    %9 = vector.load %arg5[%c0_5, %c0_6] : memref<1x32xf32, #tpu.memory_space<vmem>>, vector<1x32xf32>
    %10 = vector.broadcast %9 : vector<1x32xf32> to vector<8x32xf32>
    %11 = arith.addf %8, %10 : vector<8x32xf32>
    %12 = vector.shape_cast %11 : vector<8x32xf32> to vector<8x4x8xf32>
    %13 = tpu.transpose %12, [1, 0, 2] : vector<8x4x8xf32> -> vector<4x8x8xf32>
    %14 = arith.truncf %13 : vector<4x8x8xf32> to vector<4x8x8xbf16>
    %15 = tpu.iota {dimensions = array<i32: 1>} : vector<1x8x8xi32>
    %16 = vector.broadcast %0 : i32 to vector<1x8x8xi32>
    %17 = arith.addi %16, %15 : vector<1x8x8xi32>
    %cst_7 = arith.constant -1.000000e+30 : f32
    %18 = vector.broadcast %cst_7 : f32 to vector<4x8x1xf32>
    %cst_8 = arith.constant 0.000000e+00 : f32
    %19 = vector.broadcast %cst_8 : f32 to vector<4x8x1xf32>
    %cst_9 = arith.constant 0.000000e+00 : f32
    %20 = vector.broadcast %cst_9 : f32 to vector<4x8x8xf32>
    %c1_i32 = arith.constant 1 : i32
    %21 = arith.addi %arg1, %c1_i32 : i32
    %c0_i32_10 = arith.constant 0 : i32
    %22 = arith.subi %21, %c0_i32_10 : i32
    %23 = arith.addi %c0_i32_10, %22 : i32
    %c1_i32_11 = arith.constant 1 : i32
    %24:3 = scf.for %arg21 = %c0_i32_10 to %23 step %c1_i32_11 iter_args(%arg22 = %18, %arg23 = %19, %arg24 = %20) -> (vector<4x8x1xf32>, vector<4x8x1xf32>, vector<4x8x8xf32>)  : i32 {
      %c8_i32_51 = arith.constant 8 : i32
      %110 = arith.muli %arg21, %c8_i32_51 : i32
      %111 = tpu.assume_multiple %110, 8 : i32
      %c0_52 = arith.constant 0 : index
      %112 = arith.index_cast %111 : i32 to index
      %c0_53 = arith.constant 0 : index
      %113 = vector.load %arg19[%c0_52, %112, %c0_53] : memref<4x8x8xbf16, #tpu.memory_space<vmem>>, vector<4x8x8xbf16>
      %c0_54 = arith.constant 0 : index
      %114 = arith.index_cast %111 : i32 to index
      %c0_55 = arith.constant 0 : index
      %115 = vector.load %arg20[%c0_54, %114, %c0_55] : memref<4x8x8xbf16, #tpu.memory_space<vmem>>, vector<4x8x8xbf16>
      "tpu.trace_start"() <{level = 10 : i32, message = "ntd,nsd->nts"}> : () -> ()
      %cst_56 = arith.constant dense<0.000000e+00> : vector<4x8x8xf32>
      %116 = tpu.matmul %14, %113, %cst_56 {dimension_numbers = #tpu.dot_dimension_numbers<[2], [2], [1], [1], [0, 0, 0, 1, 1, 1], [0], [0]>} : vector<4x8x8xbf16>, vector<4x8x8xbf16>, vector<4x8x8xf32> -> vector<4x8x8xf32>
      "tpu.trace_stop"() : () -> ()
      %cst_57 = arith.constant 0.353553385 : f32
      %117 = vector.broadcast %cst_57 : f32 to vector<4x8x8xf32>
      %118 = arith.mulf %116, %117 : vector<4x8x8xf32>
      %119 = tpu.iota {dimensions = array<i32: 2>} : vector<1x8x8xi32>
      %120 = vector.broadcast %111 : i32 to vector<1x8x8xi32>
      %121 = arith.addi %120, %119 : vector<1x8x8xi32>
      %122 = arith.cmpi sgt, %121, %17 : vector<1x8x8xi32>
      %cst_58 = arith.constant -1.000000e+30 : f32
      %123 = vector.shape_cast %122 : vector<1x8x8xi1> to vector<1x8x8xi1>
      %124 = vector.broadcast %123 : vector<1x8x8xi1> to vector<4x8x8xi1>
      %125 = vector.broadcast %cst_58 : f32 to vector<4x8x8xf32>
      %126 = arith.select %124, %125, %118 : vector<4x8x8xi1>, vector<4x8x8xf32>
      %cst_59 = arith.constant dense<0xFF800000> : vector<4x8xf32>
      %127 = vector.multi_reduction <maximumf>, %126, %cst_59 [2] : vector<4x8x8xf32> to vector<4x8xf32>
      %128 = vector.shape_cast %127 : vector<4x8xf32> to vector<4x8x1xf32>
      %129 = arith.maximumf %arg22, %128 : vector<4x8x1xf32>
      %130 = arith.subf %arg22, %129 : vector<4x8x1xf32>
      %131 = math.exp %130 : vector<4x8x1xf32>
      %132 = vector.broadcast %129 : vector<4x8x1xf32> to vector<4x8x8xf32>
      %133 = arith.subf %126, %132 : vector<4x8x8xf32>
      %134 = math.exp %133 : vector<4x8x8xf32>
      %135 = arith.mulf %131, %arg23 : vector<4x8x1xf32>
      %cst_60 = arith.constant dense<0.000000e+00> : vector<4x8xf32>
      %136 = vector.multi_reduction <add>, %134, %cst_60 [2] : vector<4x8x8xf32> to vector<4x8xf32>
      %137 = vector.shape_cast %136 : vector<4x8xf32> to vector<4x8x1xf32>
      %138 = arith.addf %135, %137 : vector<4x8x1xf32>
      %139 = vector.broadcast %131 : vector<4x8x1xf32> to vector<4x8x8xf32>
      %140 = arith.mulf %139, %arg24 : vector<4x8x8xf32>
      %141 = arith.truncf %134 : vector<4x8x8xf32> to vector<4x8x8xbf16>
      "tpu.trace_start"() <{level = 10 : i32, message = "nts,nsd->ntd"}> : () -> ()
      %cst_61 = arith.constant dense<0.000000e+00> : vector<4x8x8xf32>
      %142 = tpu.matmul %141, %115, %cst_61 {dimension_numbers = #tpu.dot_dimension_numbers<[2], [1], [1], [2], [0, 0, 0, 1, 1, 2], [0], [0]>} : vector<4x8x8xbf16>, vector<4x8x8xbf16>, vector<4x8x8xf32> -> vector<4x8x8xf32>
      "tpu.trace_stop"() : () -> ()
      %143 = arith.addf %140, %142 : vector<4x8x8xf32>
      scf.yield %129, %138, %143 : vector<4x8x1xf32>, vector<4x8x1xf32>, vector<4x8x8xf32>
    }
    %25 = tpu.reciprocal %24#1 {approx = true} : vector<4x8x1xf32> -> vector<4x8x1xf32>
    %26 = vector.broadcast %25 : vector<4x8x1xf32> to vector<4x8x8xf32>
    %27 = arith.mulf %24#2, %26 : vector<4x8x8xf32>
    %28 = tpu.transpose %27, [1, 0, 2] : vector<4x8x8xf32> -> vector<8x4x8xf32>
    %29 = vector.shape_cast %28 : vector<8x4x8xf32> to vector<8x32xf32>
    %30 = arith.truncf %29 : vector<8x32xf32> to vector<8x32xbf16>
    %c0_12 = arith.constant 0 : index
    %c0_13 = arith.constant 0 : index
    %31 = vector.load %arg8[%c0_12, %c0_13] : memref<32x32xbf16, #tpu.memory_space<vmem>>, vector<32x32xbf16>
    %cst_14 = arith.constant dense<0.000000e+00> : vector<8x32xf32>
    %32 = tpu.matmul %30, %31, %cst_14 {dimension_numbers = #tpu.dot_dimension_numbers<[1], [0], [0], [1], [0, 0, 1, 1], [], []>} : vector<8x32xbf16>, vector<32x32xbf16>, vector<8x32xf32> -> vector<8x32xf32>
    %c0_15 = arith.constant 0 : index
    %c0_16 = arith.constant 0 : index
    %33 = vector.load %arg9[%c0_15, %c0_16] : memref<1x32xf32, #tpu.memory_space<vmem>>, vector<1x32xf32>
    %34 = vector.broadcast %33 : vector<1x32xf32> to vector<8x32xf32>
    %35 = arith.addf %32, %34 : vector<8x32xf32>
    %36 = arith.addf %5, %35 : vector<8x32xf32>
    %c0_17 = arith.constant 0 : index
    %c0_18 = arith.constant 0 : index
    %37 = vector.load %arg10[%c0_17, %c0_18] : memref<1x32xf32, #tpu.memory_space<vmem>>, vector<1x32xf32>
    %c0_19 = arith.constant 0 : index
    %c0_20 = arith.constant 0 : index
    %38 = vector.load %arg11[%c0_19, %c0_20] : memref<1x32xf32, #tpu.memory_space<vmem>>, vector<1x32xf32>
    %cst_21 = arith.constant dense<0.000000e+00> : vector<8xf32>
    %39 = vector.multi_reduction <add>, %36, %cst_21 [1] : vector<8x32xf32> to vector<8xf32>
    %40 = vector.shape_cast %39 : vector<8xf32> to vector<8x1xf32>
    %cst_22 = arith.constant 3.200000e+01 : f32
    %41 = vector.broadcast %cst_22 : f32 to vector<8x1xf32>
    %42 = arith.divf %40, %41 : vector<8x1xf32>
    %43 = vector.broadcast %42 : vector<8x1xf32> to vector<8x32xf32>
    %44 = arith.subf %36, %43 : vector<8x32xf32>
    %45 = arith.mulf %44, %44 : vector<8x32xf32>
    %cst_23 = arith.constant dense<0.000000e+00> : vector<8xf32>
    %46 = vector.multi_reduction <add>, %45, %cst_23 [1] : vector<8x32xf32> to vector<8xf32>
    %47 = vector.shape_cast %46 : vector<8xf32> to vector<8x1xf32>
    %cst_24 = arith.constant 3.200000e+01 : f32
    %48 = vector.broadcast %cst_24 : f32 to vector<8x1xf32>
    %49 = arith.divf %47, %48 : vector<8x1xf32>
    %50 = vector.broadcast %42 : vector<8x1xf32> to vector<8x32xf32>
    %51 = arith.subf %36, %50 : vector<8x32xf32>
    %cst_25 = arith.constant 9.99999974E-6 : f32
    %52 = vector.broadcast %cst_25 : f32 to vector<8x1xf32>
    %53 = arith.addf %49, %52 : vector<8x1xf32>
    %54 = math.rsqrt %53 : vector<8x1xf32>
    %55 = vector.broadcast %54 : vector<8x1xf32> to vector<8x32xf32>
    %56 = arith.mulf %51, %55 : vector<8x32xf32>
    %57 = vector.broadcast %37 : vector<1x32xf32> to vector<8x32xf32>
    %58 = arith.mulf %56, %57 : vector<8x32xf32>
    %59 = vector.broadcast %38 : vector<1x32xf32> to vector<8x32xf32>
    %60 = arith.addf %58, %59 : vector<8x32xf32>
    %61 = arith.truncf %60 : vector<8x32xf32> to vector<8x32xbf16>
    %c0_26 = arith.constant 0 : index
    %c0_27 = arith.constant 0 : index
    %62 = vector.load %arg12[%c0_26, %c0_27] : memref<32x128xbf16, #tpu.memory_space<vmem>>, vector<32x128xbf16>
    %cst_28 = arith.constant dense<0.000000e+00> : vector<8x128xf32>
    %63 = tpu.matmul %61, %62, %cst_28 {dimension_numbers = #tpu.dot_dimension_numbers<[1], [0], [0], [1], [0, 0, 1, 1], [], []>} : vector<8x32xbf16>, vector<32x128xbf16>, vector<8x128xf32> -> vector<8x128xf32>
    %c0_29 = arith.constant 0 : index
    %c0_30 = arith.constant 0 : index
    %64 = vector.load %arg13[%c0_29, %c0_30] : memref<1x128xf32, #tpu.memory_space<vmem>>, vector<1x128xf32>
    %65 = vector.broadcast %64 : vector<1x128xf32> to vector<8x128xf32>
    %66 = arith.addf %63, %65 : vector<8x128xf32>
    %cst_31 = arith.constant 5.000000e-01 : f32
    %67 = vector.broadcast %cst_31 : f32 to vector<8x128xf32>
    %68 = arith.mulf %67, %66 : vector<8x128xf32>
    %cst_32 = arith.constant 2.000000e+00 : f32
    %69 = math.sqrt %cst_32 : f32
    %70 = vector.broadcast %69 : f32 to vector<8x128xf32>
    %71 = arith.divf %66, %70 : vector<8x128xf32>
    %72 = math.erf %71 : vector<8x128xf32>
    %cst_33 = arith.constant 1.000000e+00 : f32
    %73 = vector.broadcast %cst_33 : f32 to vector<8x128xf32>
    %74 = arith.addf %73, %72 : vector<8x128xf32>
    %75 = arith.mulf %68, %74 : vector<8x128xf32>
    %76 = arith.truncf %75 : vector<8x128xf32> to vector<8x128xbf16>
    %c0_34 = arith.constant 0 : index
    %c0_35 = arith.constant 0 : index
    %77 = vector.load %arg14[%c0_34, %c0_35] : memref<128x32xbf16, #tpu.memory_space<vmem>>, vector<128x32xbf16>
    %cst_36 = arith.constant dense<0.000000e+00> : vector<8x32xf32>
    %78 = tpu.matmul %76, %77, %cst_36 {dimension_numbers = #tpu.dot_dimension_numbers<[1], [0], [0], [1], [0, 0, 1, 1], [], []>} : vector<8x128xbf16>, vector<128x32xbf16>, vector<8x32xf32> -> vector<8x32xf32>
    %c0_37 = arith.constant 0 : index
    %c0_38 = arith.constant 0 : index
    %79 = vector.load %arg15[%c0_37, %c0_38] : memref<1x32xf32, #tpu.memory_space<vmem>>, vector<1x32xf32>
    %80 = vector.broadcast %79 : vector<1x32xf32> to vector<8x32xf32>
    %81 = arith.addf %78, %80 : vector<8x32xf32>
    %82 = arith.addf %60, %81 : vector<8x32xf32>
    %c0_39 = arith.constant 0 : index
    %c0_40 = arith.constant 0 : index
    %83 = vector.load %arg16[%c0_39, %c0_40] : memref<1x32xf32, #tpu.memory_space<vmem>>, vector<1x32xf32>
    %c0_41 = arith.constant 0 : index
    %c0_42 = arith.constant 0 : index
    %84 = vector.load %arg17[%c0_41, %c0_42] : memref<1x32xf32, #tpu.memory_space<vmem>>, vector<1x32xf32>
    %cst_43 = arith.constant dense<0.000000e+00> : vector<8xf32>
    %85 = vector.multi_reduction <add>, %82, %cst_43 [1] : vector<8x32xf32> to vector<8xf32>
    %86 = vector.shape_cast %85 : vector<8xf32> to vector<8x1xf32>
    %cst_44 = arith.constant 3.200000e+01 : f32
    %87 = vector.broadcast %cst_44 : f32 to vector<8x1xf32>
    %88 = arith.divf %86, %87 : vector<8x1xf32>
    %89 = vector.broadcast %88 : vector<8x1xf32> to vector<8x32xf32>
    %90 = arith.subf %82, %89 : vector<8x32xf32>
    %91 = arith.mulf %90, %90 : vector<8x32xf32>
    %cst_45 = arith.constant dense<0.000000e+00> : vector<8xf32>
    %92 = vector.multi_reduction <add>, %91, %cst_45 [1] : vector<8x32xf32> to vector<8xf32>
    %93 = vector.shape_cast %92 : vector<8xf32> to vector<8x1xf32>
    %cst_46 = arith.constant 3.200000e+01 : f32
    %94 = vector.broadcast %cst_46 : f32 to vector<8x1xf32>
    %95 = arith.divf %93, %94 : vector<8x1xf32>
    %96 = vector.broadcast %88 : vector<8x1xf32> to vector<8x32xf32>
    %97 = arith.subf %82, %96 : vector<8x32xf32>
    %cst_47 = arith.constant 9.99999974E-6 : f32
    %98 = vector.broadcast %cst_47 : f32 to vector<8x1xf32>
    %99 = arith.addf %95, %98 : vector<8x1xf32>
    %100 = math.rsqrt %99 : vector<8x1xf32>
    %101 = vector.broadcast %100 : vector<8x1xf32> to vector<8x32xf32>
    %102 = arith.mulf %97, %101 : vector<8x32xf32>
    %103 = vector.broadcast %83 : vector<1x32xf32> to vector<8x32xf32>
    %104 = arith.mulf %102, %103 : vector<8x32xf32>
    %105 = vector.broadcast %84 : vector<1x32xf32> to vector<8x32xf32>
    %106 = arith.addf %104, %105 : vector<8x32xf32>
    %c0_48 = arith.constant 0 : index
    %c0_49 = arith.constant 0 : index
    %c0_50 = arith.constant 0 : index
    %107 = vector.load %arg18[%c0_48, %c0_49, %c0_50] : memref<1x8x32xf32, #tpu.memory_space<vmem>>, vector<1x8x32xf32>
    %108 = vector.shape_cast %107 : vector<1x8x32xf32> to vector<8x32xf32>
    %109 = vector.shape_cast %106 : vector<8x32xf32> to vector<1x8x32xf32>
    tpu.vector_store %arg18[%c0_48, %c0_49, %c0_50], %109 {strides = array<i32>} : memref<1x8x32xf32, #tpu.memory_space<vmem>>, vector<1x8x32xf32>,
    return
  }
  func.func @transform_0(%arg0: i32, %arg1: i32) -> (i32, i32, i32) {
    %c0_i32 = arith.constant 0 : i32
    %c0_i32_0 = arith.constant 0 : i32
    return %arg0, %arg1, %c0_i32 : i32, i32, i32
  }
  func.func @transform_1(%arg0: i32, %arg1: i32) -> (i32, i32, i32) {
    %c0_i32 = arith.constant 0 : i32
    %c0_i32_0 = arith.constant 0 : i32
    %c0_i32_1 = arith.constant 0 : i32
    return %arg0, %c0_i32, %c0_i32_0 : i32, i32, i32
  }
  func.func @transform_2(%arg0: i32, %arg1: i32) -> (i32, i32) {
    %c0_i32 = arith.constant 0 : i32
    %c0_i32_0 = arith.constant 0 : i32
    %c0_i32_1 = arith.constant 0 : i32
    return %c0_i32, %c0_i32_0 : i32, i32
  }
  func.func @transform_3(%arg0: i32, %arg1: i32) -> (i32, i32) {
    %c0_i32 = arith.constant 0 : i32
    %c0_i32_0 = arith.constant 0 : i32
    %c0_i32_1 = arith.constant 0 : i32
    return %c0_i32, %c0_i32_0 : i32, i32
  }
  func.func @transform_4(%arg0: i32, %arg1: i32) -> (i32, i32) {
    %c0_i32 = arith.constant 0 : i32
    %c0_i32_0 = arith.constant 0 : i32
    %c0_i32_1 = arith.constant 0 : i32
    return %c0_i32, %c0_i32_0 : i32, i32
  }
  func.func @transform_5(%arg0: i32, %arg1: i32) -> (i32, i32) {
    %c0_i32 = arith.constant 0 : i32
    %c0_i32_0 = arith.constant 0 : i32
    %c0_i32_1 = arith.constant 0 : i32
    return %c0_i32, %c0_i32_0 : i32, i32
  }
  func.func @transform_6(%arg0: i32, %arg1: i32) -> (i32, i32) {
    %c0_i32 = arith.constant 0 : i32
    %c0_i32_0 = arith.constant 0 : i32
    %c0_i32_1 = arith.constant 0 : i32
    return %c0_i32, %c0_i32_0 : i32, i32
  }
  func.func @transform_7(%arg0: i32, %arg1: i32) -> (i32, i32) {
    %c0_i32 = arith.constant 0 : i32
    %c0_i32_0 = arith.constant 0 : i32
    %c0_i32_1 = arith.constant 0 : i32
    return %c0_i32, %c0_i32_0 : i32, i32
  }
  func.func @transform_8(%arg0: i32, %arg1: i32) -> (i32, i32) {
    %c0_i32 = arith.constant 0 : i32
    %c0_i32_0 = arith.constant 0 : i32
    %c0_i32_1 = arith.constant 0 : i32
    return %c0_i32, %c0_i32_0 : i32, i32
  }
  func.func @transform_9(%arg0: i32, %arg1: i32) -> (i32, i32) {
    %c0_i32 = arith.constant 0 : i32
    %c0_i32_0 = arith.constant 0 : i32
    %c0_i32_1 = arith.constant 0 : i32
    return %c0_i32, %c0_i32_0 : i32, i32
  }
  func.func @transform_10(%arg0: i32, %arg1: i32) -> (i32, i32) {
    %c0_i32 = arith.constant 0 : i32
    %c0_i32_0 = arith.constant 0 : i32
    %c0_i32_1 = arith.constant 0 : i32
    return %c0_i32, %c0_i32_0 : i32, i32
  }
  func.func @transform_11(%arg0: i32, %arg1: i32) -> (i32, i32) {
    %c0_i32 = arith.constant 0 : i32
    %c0_i32_0 = arith.constant 0 : i32
    %c0_i32_1 = arith.constant 0 : i32
    return %c0_i32, %c0_i32_0 : i32, i32
  }
  func.func @transform_12(%arg0: i32, %arg1: i32) -> (i32, i32) {
    %c0_i32 = arith.constant 0 : i32
    %c0_i32_0 = arith.constant 0 : i32
    %c0_i32_1 = arith.constant 0 : i32
    return %c0_i32, %c0_i32_0 : i32, i32
  }
  func.func @transform_13(%arg0: i32, %arg1: i32) -> (i32, i32) {
    %c0_i32 = arith.constant 0 : i32
    %c0_i32_0 = arith.constant 0 : i32
    %c0_i32_1 = arith.constant 0 : i32
    return %c0_i32, %c0_i32_0 : i32, i32
  }
  func.func @transform_14(%arg0: i32, %arg1: i32) -> (i32, i32) {
    %c0_i32 = arith.constant 0 : i32
    %c0_i32_0 = arith.constant 0 : i32
    %c0_i32_1 = arith.constant 0 : i32
    return %c0_i32, %c0_i32_0 : i32, i32
  }
  func.func @transform_15(%arg0: i32, %arg1: i32) -> (i32, i32) {
    %c0_i32 = arith.constant 0 : i32
    %c0_i32_0 = arith.constant 0 : i32
    %c0_i32_1 = arith.constant 0 : i32
    return %c0_i32, %c0_i32_0 : i32, i32
  }
  func.func @transform_16(%arg0: i32, %arg1: i32) -> (i32, i32, i32) {
    %c0_i32 = arith.constant 0 : i32
    %c0_i32_0 = arith.constant 0 : i32
    return %arg0, %arg1, %c0_i32 : i32, i32, i32
  }
}

</mosaic_0001>

<llo_original>
// kernel: tpu_custom_call.1
$region0: #{tpu_custom_call.1}
  #allocation0 [shape = 'u32[]', space=smem, size = 0x4, offset = 0x4, fixed_abs, tag = 'smem constant byte address 0x4 - core index']
  #allocation1 [shape = 'u32[144,128]{1,0:T(1,128)}', space=vmem, size = 0x12000, scoped, tag = 'internal scratch']
  #allocation2 [shape = 'bf16[4,8,8]{2,1,0:T(8,128)(2,1)}', space=vmem, size = 0x2000, scoped, tag = 'scratch operand']
  #allocation3 [shape = 'bf16[4,8,8]{2,1,0:T(8,128)(2,1)}', space=vmem, size = 0x2000, scoped, tag = 'scratch operand']
  %s0 = inlined_call_operand.vmem [shape: f32[2,8,32], index: 0, kind: input, shape index: {}]
  %s1 = inlined_call_operand.hbm [shape: bf16[2,8,32], index: 1, kind: input, shape index: {}]
  %s2 = inlined_call_operand.vmem [shape: bf16[32,32], index: 2, kind: input, shape index: {}]
  %s3 = inlined_call_operand.vmem [shape: f32[1,32], index: 3, kind: input, shape index: {}]
  %s4 = inlined_call_operand.vmem [shape: bf16[32,64], index: 4, kind: input, shape index: {}]
  %s5 = inlined_call_operand.vmem [shape: f32[1,64], index: 5, kind: input, shape index: {}]
  %s6 = inlined_call_operand.vmem [shape: bf16[32,32], index: 6, kind: input, shape index: {}]
  %s7 = inlined_call_operand.vmem [shape: f32[1,32], index: 7, kind: input, shape index: {}]
  %s8 = inlined_call_operand.vmem [shape: f32[1,32], index: 8, kind: input, shape index: {}]
  %s9 = inlined_call_operand.vmem [shape: f32[1,32], index: 9, kind: input, shape index: {}]
  %s10 = inlined_call_operand.vmem [shape: bf16[32,128], index: 10, kind: input, shape index: {}]
  %s11 = inlined_call_operand.vmem [shape: f32[1,128], index: 11, kind: input, shape index: {}]
  %s12 = inlined_call_operand.vmem [shape: bf16[128,32], index: 12, kind: input, shape index: {}]
  %s13 = inlined_call_operand.vmem [shape: f32[1,32], index: 13, kind: input, shape index: {}]
  %s14 = inlined_call_operand.vmem [shape: f32[1,32], index: 14, kind: input, shape index: {}]
  %s15 = inlined_call_operand.vmem [shape: f32[1,32], index: 15, kind: input, shape index: {}]
  %s16 = inlined_call_operand.hbm [shape: f32[2,8,32], index: 16, kind: output, shape index: {}]
  %s17 = sld [smem:[#allocation0]]
  $region112: #{tpu_custom_call.1} parent=0
    _
  %s19 = ssub.s32 1, %s17
  %s20 = scalar_select 0, %s19, %s17
  $region1: #{tpu_custom_call.1} parent=0
    #allocation4 [shape = 'u8[4096]{0}', space=vmem, size = 0x1000, scoped, tag = 'input window, operand 1']
    #allocation5 [shape = 's32[2]{0}', space=sflag, size = 0x8, scoped, tag = 'scoped memory for tpu_custom_call.1']
    #allocation6 [shape = 's32[2]{0}', space=sflag, size = 0x8, scoped, tag = 'scoped memory for tpu_custom_call.1']
    #allocation7 [shape = 'u8[8192]{0}', space=vmem, size = 0x2000, scoped, tag = 'output window, operand 0']
    %21 = vsyncpa [#allocation5], 0
    %s22 = scalar_lea.sflag [#allocation5], 1
    %23 = vsyncpa %s22, 0
    %24 = vsyncpa [#allocation6], 0
    %s25 = scalar_lea.sflag [#allocation6], 1
    %26 = vsyncpa %s25, 0
    loop: start=0, step=1, limit=4
    $region2: #{tpu_custom_call.1} parent=1 // loop_pre_header
      _
    $region3: #{tpu_custom_call.1} parent=1 // loop_header
      %s28 = sphi 0, %s32
      %p29 = scmp.ge.s32.totalorder %s28, 4
      %s35 = sphi 0, %s47
      %s36 = sphi 0, %s43
      %s37 = sphi 0, %s35
      %s38 = sphi 0, %s36
      %s39 = sphi 0, %s37
      %s40 = sphi 0, %s38
      %s52 = sphi 0, %s54
      %s55 = sphi 0, %s52
      %s56 = sphi 0, %s55
      %s72 = sphi 0, %s56
      %s78 = sphi 0, %s80
      %s81 = sphi 0, %s78
      %s82 = sphi 0, %s81
      %s98 = sphi 0, %s82
      %s102 = sphi 0, %s102
      %s104 = sphi 0, %s102
      %s105 = sphi 0, %s104
      %s119 = sphi 0, %s105
      %s123 = sphi 0, %s123
      %s125 = sphi 0, %s123
      %s126 = sphi 0, %s125
      %s140 = sphi 0, %s126
      %s144 = sphi 0, %s144
      %s146 = sphi 0, %s144
      %s147 = sphi 0, %s146
      %s161 = sphi 0, %s147
      %s165 = sphi 0, %s165
      %s167 = sphi 0, %s165
      %s168 = sphi 0, %s167
      %s182 = sphi 0, %s168
      %s186 = sphi 0, %s186
      %s188 = sphi 0, %s186
      %s189 = sphi 0, %s188
      %s203 = sphi 0, %s189
      %s207 = sphi 0, %s207
      %s209 = sphi 0, %s207
      %s210 = sphi 0, %s209
      %s224 = sphi 0, %s210
      %s228 = sphi 0, %s228
      %s230 = sphi 0, %s228
      %s231 = sphi 0, %s230
      %s245 = sphi 0, %s231
      %s249 = sphi 0, %s249
      %s251 = sphi 0, %s249
      %s252 = sphi 0, %s251
      %s266 = sphi 0, %s252
      %s270 = sphi 0, %s270
      %s272 = sphi 0, %s270
      %s273 = sphi 0, %s272
      %s287 = sphi 0, %s273
      %s291 = sphi 0, %s291
      %s293 = sphi 0, %s291
      %s294 = sphi 0, %s293
      %s308 = sphi 0, %s294
      %s312 = sphi 0, %s312
      %s314 = sphi 0, %s312
      %s315 = sphi 0, %s314
      %s329 = sphi 0, %s315
      %s333 = sphi 0, %s333
      %s335 = sphi 0, %s333
      %s336 = sphi 0, %s335
      %s350 = sphi 0, %s336
      %s354 = sphi 0, %s354
      %s356 = sphi 0, %s354
      %s357 = sphi 0, %s356
      %s371 = sphi 0, %s357
      %s375 = sphi 0, %s375
      %s377 = sphi 0, %s375
      %s378 = sphi 0, %s377
      %s392 = sphi 0, %s378
      %s400 = sphi 0, %s402
      %s403 = sphi 0, %s400
      %s404 = sphi 0, %s403
      %s420 = sphi 0, %s404
    $region4: #{tpu_custom_call.1} parent=1 // loop_header_branch
      %31 = sbr.rel (%p29) target = $region8
    $region5: #{tpu_custom_call.1} parent=1 // loop_body
      %s33 = ssub.s32 %s28, 1
      %s34 = ssub.s32 %s28, 2
      %s41 = sadd.s32 1, %s36
      %p42 = scmp.ge.s32.totalorder %s41, 1
      %s43 = scalar_select %p42, 0, %s41
      %s44 = sadd.s32 1, %s35
      %s45 = scalar_select %p42, %s44, %s35
      %p46 = scmp.ge.s32.totalorder %s45, 2
      %s47 = scalar_select %p46, 0, %s45
      %s48 = ssub.s32 %s35, %s47
      %s49 = ssub.s32 %s36, %s43
      %s50 = sor.u32 %s48, %s49
      %p51 = scmp.eq.s32.totalorder %s50, 0
      %s53 = sadd.s32 %s52, 1
      %s54 = scalar_select %p51, %s52, %s53
      %p57 = pneg %p51
      %p58 = scmp.eq.s32.totalorder %s28, 1
      %p59 = por %p57, %p58
      %p60 = scmp.ne.s32.totalorder %s52, %s55
      %p61 = scmp.eq.s32.totalorder %s28, 0
      %p62 = por %p60, %p61
      %p63 = scmp.ne.s32.totalorder %s52, %s55
      %p64 = scmp.eq.s32.totalorder %s33, 1
      %p65 = por %p63, %p64
      %p66 = scmp.ne.s32.totalorder %s55, %s56
      %p67 = scmp.eq.s32.totalorder %s33, 0
      %p68 = por %p66, %p67
      %p69 = scmp.ne.s32.totalorder %s55, %s56
      %p70 = scmp.eq.s32.totalorder %s34, 1
      %p71 = por %p69, %p70
      %p73 = scmp.ne.s32.totalorder %s56, %s72
      %p74 = scmp.eq.s32.totalorder %s34, 0
      %p75 = por %p73, %p74
      %s76 = ssub.s32 %s35, %s47
      %p77 = scmp.eq.s32.totalorder %s76, 0
      %s79 = sadd.s32 %s78, 1
      %s80 = scalar_select %p77, %s78, %s79
      %p83 = pneg %p77
      %p84 = scmp.eq.s32.totalorder %s28, 1
      %p85 = por %p83, %p84
      %p86 = scmp.ne.s32.totalorder %s78, %s81
      %p87 = scmp.eq.s32.totalorder %s28, 0
      %p88 = por %p86, %p87
      %p89 = scmp.ne.s32.totalorder %s78, %s81
      %p90 = scmp.eq.s32.totalorder %s33, 1
      %p91 = por %p89, %p90
      %p92 = scmp.ne.s32.totalorder %s81, %s82
      %p93 = scmp.eq.s32.totalorder %s33, 0
      %p94 = por %p92, %p93
      %p95 = scmp.ne.s32.totalorder %s81, %s82
      %p96 = scmp.eq.s32.totalorder %s34, 1
      %p97 = por %p95, %p96
      %p99 = scmp.ne.s32.totalorder %s82, %s98
      %p100 = scmp.eq.s32.totalorder %s34, 0
      %p101 = por %p99, %p100
      %s103 = sadd.s32 %s102, 1
      %p106 = scmp.eq.s32.totalorder %s28, 1
      %p107 = scmp.ne.s32.totalorder %s102, %s104
      %p108 = scmp.eq.s32.totalorder %s28, 0
      %p109 = por %p107, %p108
      %p110 = scmp.ne.s32.totalorder %s102, %s104
      %p111 = scmp.eq.s32.totalorder %s33, 1
      %p112 = por %p110, %p111
      %p113 = scmp.ne.s32.totalorder %s104, %s105
      %p114 = scmp.eq.s32.totalorder %s33, 0
      %p115 = por %p113, %p114
      %p116 = scmp.ne.s32.totalorder %s104, %s105
      %p117 = scmp.eq.s32.totalorder %s34, 1
      %p118 = por %p116, %p117
      %p120 = scmp.ne.s32.totalorder %s105, %s119
      %p121 = scmp.eq.s32.totalorder %s34, 0
      %p122 = por %p120, %p121
      %s124 = sadd.s32 %s123, 1
      %p127 = scmp.eq.s32.totalorder %s28, 1
      %p128 = scmp.ne.s32.totalorder %s123, %s125
      %p129 = scmp.eq.s32.totalorder %s28, 0
      %p130 = por %p128, %p129
      %p131 = scmp.ne.s32.totalorder %s123, %s125
      %p132 = scmp.eq.s32.totalorder %s33, 1
      %p133 = por %p131, %p132
      %p134 = scmp.ne.s32.totalorder %s125, %s126
      %p135 = scmp.eq.s32.totalorder %s33, 0
      %p136 = por %p134, %p135
      %p137 = scmp.ne.s32.totalorder %s125, %s126
      %p138 = scmp.eq.s32.totalorder %s34, 1
      %p139 = por %p137, %p138
      %p141 = scmp.ne.s32.totalorder %s126, %s140
      %p142 = scmp.eq.s32.totalorder %s34, 0
      %p143 = por %p141, %p142
      %s145 = sadd.s32 %s144, 1
      %p148 = scmp.eq.s32.totalorder %s28, 1
      %p149 = scmp.ne.s32.totalorder %s144, %s146
      %p150 = scmp.eq.s32.totalorder %s28, 0
      %p151 = por %p149, %p150
      %p152 = scmp.ne.s32.totalorder %s144, %s146
      %p153 = scmp.eq.s32.totalorder %s33, 1
      %p154 = por %p152, %p153
      %p155 = scmp.ne.s32.totalorder %s146, %s147
      %p156 = scmp.eq.s32.totalorder %s33, 0
      %p157 = por %p155, %p156
      %p158 = scmp.ne.s32.totalorder %s146, %s147
      %p159 = scmp.eq.s32.totalorder %s34, 1
      %p160 = por %p158, %p159
      %p162 = scmp.ne.s32.totalorder %s147, %s161
      %p163 = scmp.eq.s32.totalorder %s34, 0
      %p164 = por %p162, %p163
      %s166 = sadd.s32 %s165, 1
      %p169 = scmp.eq.s32.totalorder %s28, 1
      %p170 = scmp.ne.s32.totalorder %s165, %s167
      %p171 = scmp.eq.s32.totalorder %s28, 0
      %p172 = por %p170, %p171
      %p173 = scmp.ne.s32.totalorder %s165, %s167
      %p174 = scmp.eq.s32.totalorder %s33, 1
      %p175 = por %p173, %p174
      %p176 = scmp.ne.s32.totalorder %s167, %s168
      %p177 = scmp.eq.s32.totalorder %s33, 0
      %p178 = por %p176, %p177
      %p179 = scmp.ne.s32.totalorder %s167, %s168
      %p180 = scmp.eq.s32.totalorder %s34, 1
      %p181 = por %p179, %p180
      %p183 = scmp.ne.s32.totalorder %s168, %s182
      %p184 = scmp.eq.s32.totalorder %s34, 0
      %p185 = por %p183, %p184
      %s187 = sadd.s32 %s186, 1
      %p190 = scmp.eq.s32.totalorder %s28, 1
      %p191 = scmp.ne.s32.totalorder %s186, %s188
      %p192 = scmp.eq.s32.totalorder %s28, 0
      %p193 = por %p191, %p192
      %p194 = scmp.ne.s32.totalorder %s186, %s188
      %p195 = scmp.eq.s32.totalorder %s33, 1
      %p196 = por %p194, %p195
      %p197 = scmp.ne.s32.totalorder %s188, %s189
      %p198 = scmp.eq.s32.totalorder %s33, 0
      %p199 = por %p197, %p198
      %p200 = scmp.ne.s32.totalorder %s188, %s189
      %p201 = scmp.eq.s32.totalorder %s34, 1
      %p202 = por %p200, %p201
      %p204 = scmp.ne.s32.totalorder %s189, %s203
      %p205 = scmp.eq.s32.totalorder %s34, 0
      %p206 = por %p204, %p205
      %s208 = sadd.s32 %s207, 1
      %p211 = scmp.eq.s32.totalorder %s28, 1
      %p212 = scmp.ne.s32.totalorder %s207, %s209
      %p213 = scmp.eq.s32.totalorder %s28, 0
      %p214 = por %p212, %p213
      %p215 = scmp.ne.s32.totalorder %s207, %s209
      %p216 = scmp.eq.s32.totalorder %s33, 1
      %p217 = por %p215, %p216
      %p218 = scmp.ne.s32.totalorder %s209, %s210
      %p219 = scmp.eq.s32.totalorder %s33, 0
      %p220 = por %p218, %p219
      %p221 = scmp.ne.s32.totalorder %s209, %s210
      %p222 = scmp.eq.s32.totalorder %s34, 1
      %p223 = por %p221, %p222
      %p225 = scmp.ne.s32.totalorder %s210, %s224
      %p226 = scmp.eq.s32.totalorder %s34, 0
      %p227 = por %p225, %p226
      %s229 = sadd.s32 %s228, 1
      %p232 = scmp.eq.s32.totalorder %s28, 1
      %p233 = scmp.ne.s32.totalorder %s228, %s230
      %p234 = scmp.eq.s32.totalorder %s28, 0
      %p235 = por %p233, %p234
      %p236 = scmp.ne.s32.totalorder %s228, %s230
      %p237 = scmp.eq.s32.totalorder %s33, 1
      %p238 = por %p236, %p237
      %p239 = scmp.ne.s32.totalorder %s230, %s231
      %p240 = scmp.eq.s32.totalorder %s33, 0
      %p241 = por %p239, %p240
      %p242 = scmp.ne.s32.totalorder %s230, %s231
      %p243 = scmp.eq.s32.totalorder %s34, 1
      %p244 = por %p242, %p243
      %p246 = scmp.ne.s32.totalorder %s231, %s245
      %p247 = scmp.eq.s32.totalorder %s34, 0
      %p248 = por %p246, %p247
      %s250 = sadd.s32 %s249, 1
      %p253 = scmp.eq.s32.totalorder %s28, 1
      %p254 = scmp.ne.s32.totalorder %s249, %s251
      %p255 = scmp.eq.s32.totalorder %s28, 0
      %p256 = por %p254, %p255
      %p257 = scmp.ne.s32.totalorder %s249, %s251
      %p258 = scmp.eq.s32.totalorder %s33, 1
      %p259 = por %p257, %p258
      %p260 = scmp.ne.s32.totalorder %s251, %s252
      %p261 = scmp.eq.s32.totalorder %s33, 0
      %p262 = por %p260, %p261
      %p263 = scmp.ne.s32.totalorder %s251, %s252
      %p264 = scmp.eq.s32.totalorder %s34, 1
      %p265 = por %p263, %p264
      %p267 = scmp.ne.s32.totalorder %s252, %s266
      %p268 = scmp.eq.s32.totalorder %s34, 0
      %p269 = por %p267, %p268
      %s271 = sadd.s32 %s270, 1
      %p274 = scmp.eq.s32.totalorder %s28, 1
      %p275 = scmp.ne.s32.totalorder %s270, %s272
      %p276 = scmp.eq.s32.totalorder %s28, 0
      %p277 = por %p275, %p276
      %p278 = scmp.ne.s32.totalorder %s270, %s272
      %p279 = scmp.eq.s32.totalorder %s33, 1
      %p280 = por %p278, %p279
      %p281 = scmp.ne.s32.totalorder %s272, %s273
      %p282 = scmp.eq.s32.totalorder %s33, 0
      %p283 = por %p281, %p282
      %p284 = scmp.ne.s32.totalorder %s272, %s273
      %p285 = scmp.eq.s32.totalorder %s34, 1
      %p286 = por %p284, %p285
      %p288 = scmp.ne.s32.totalorder %s273, %s287
      %p289 = scmp.eq.s32.totalorder %s34, 0
      %p290 = por %p288, %p289
      %s292 = sadd.s32 %s291, 1
      %p295 = scmp.eq.s32.totalorder %s28, 1
      %p296 = scmp.ne.s32.totalorder %s291, %s293
      %p297 = scmp.eq.s32.totalorder %s28, 0
      %p298 = por %p296, %p297
      %p299 = scmp.ne.s32.totalorder %s291, %s293
      %p300 = scmp.eq.s32.totalorder %s33, 1
      %p301 = por %p299, %p300
      %p302 = scmp.ne.s32.totalorder %s293, %s294
      %p303 = scmp.eq.s32.totalorder %s33, 0
      %p304 = por %p302, %p303
      %p305 = scmp.ne.s32.totalorder %s293, %s294
      %p306 = scmp.eq.s32.totalorder %s34, 1
      %p307 = por %p305, %p306
      %p309 = scmp.ne.s32.totalorder %s294, %s308
      %p310 = scmp.eq.s32.totalorder %s34, 0
      %p311 = por %p309, %p310
      %s313 = sadd.s32 %s312, 1
      %p316 = scmp.eq.s32.totalorder %s28, 1
      %p317 = scmp.ne.s32.totalorder %s312, %s314
      %p318 = scmp.eq.s32.totalorder %s28, 0
      %p319 = por %p317, %p318
      %p320 = scmp.ne.s32.totalorder %s312, %s314
      %p321 = scmp.eq.s32.totalorder %s33, 1
      %p322 = por %p320, %p321
      %p323 = scmp.ne.s32.totalorder %s314, %s315
      %p324 = scmp.eq.s32.totalorder %s33, 0
      %p325 = por %p323, %p324
      %p326 = scmp.ne.s32.totalorder %s314, %s315
      %p327 = scmp.eq.s32.totalorder %s34, 1
      %p328 = por %p326, %p327
      %p330 = scmp.ne.s32.totalorder %s315, %s329
      %p331 = scmp.eq.s32.totalorder %s34, 0
      %p332 = por %p330, %p331
      %s334 = sadd.s32 %s333, 1
      %p337 = scmp.eq.s32.totalorder %s28, 1
      %p338 = scmp.ne.s32.totalorder %s333, %s335
      %p339 = scmp.eq.s32.totalorder %s28, 0
      %p340 = por %p338, %p339
      %p341 = scmp.ne.s32.totalorder %s333, %s335
      %p342 = scmp.eq.s32.totalorder %s33, 1
      %p343 = por %p341, %p342
      %p344 = scmp.ne.s32.totalorder %s335, %s336
      %p345 = scmp.eq.s32.totalorder %s33, 0
      %p346 = por %p344, %p345
      %p347 = scmp.ne.s32.totalorder %s335, %s336
      %p348 = scmp.eq.s32.totalorder %s34, 1
      %p349 = por %p347, %p348
      %p351 = scmp.ne.s32.totalorder %s336, %s350
      %p352 = scmp.eq.s32.totalorder %s34, 0
      %p353 = por %p351, %p352
      %s355 = sadd.s32 %s354, 1
      %p358 = scmp.eq.s32.totalorder %s28, 1
      %p359 = scmp.ne.s32.totalorder %s354, %s356
      %p360 = scmp.eq.s32.totalorder %s28, 0
      %p361 = por %p359, %p360
      %p362 = scmp.ne.s32.totalorder %s354, %s356
      %p363 = scmp.eq.s32.totalorder %s33, 1
      %p364 = por %p362, %p363
      %p365 = scmp.ne.s32.totalorder %s356, %s357
      %p366 = scmp.eq.s32.totalorder %s33, 0
      %p367 = por %p365, %p366
      %p368 = scmp.ne.s32.totalorder %s356, %s357
      %p369 = scmp.eq.s32.totalorder %s34, 1
      %p370 = por %p368, %p369
      %p372 = scmp.ne.s32.totalorder %s357, %s371
      %p373 = scmp.eq.s32.totalorder %s34, 0
      %p374 = por %p372, %p373
      %s376 = sadd.s32 %s375, 1
      %p379 = scmp.eq.s32.totalorder %s28, 1
      %p380 = scmp.ne.s32.totalorder %s375, %s377
      %p381 = scmp.eq.s32.totalorder %s28, 0
      %p382 = por %p380, %p381
      %p383 = scmp.ne.s32.totalorder %s375, %s377
      %p384 = scmp.eq.s32.totalorder %s33, 1
      %p385 = por %p383, %p384
      %p386 = scmp.ne.s32.totalorder %s377, %s378
      %p387 = scmp.eq.s32.totalorder %s33, 0
      %p388 = por %p386, %p387
      %p389 = scmp.ne.s32.totalorder %s377, %s378
      %p390 = scmp.eq.s32.totalorder %s34, 1
      %p391 = por %p389, %p390
      %p393 = scmp.ne.s32.totalorder %s378, %s392
      %p394 = scmp.eq.s32.totalorder %s34, 0
      %p395 = por %p393, %p394
      %s396 = ssub.s32 %s35, %s47
      %s397 = ssub.s32 %s36, %s43
      %s398 = sor.u32 %s396, %s397
      %p399 = scmp.eq.s32.totalorder %s398, 0
      %s401 = sadd.s32 %s400, 1
      %s402 = scalar_select %p399, %s400, %s401
      %p405 = pneg %p399
      %p406 = scmp.eq.s32.totalorder %s28, 1
      %p407 = por %p405, %p406
      %p408 = scmp.ne.s32.totalorder %s400, %s403
      %p409 = scmp.eq.s32.totalorder %s28, 0
      %p410 = por %p408, %p409
      %p411 = scmp.ne.s32.totalorder %s400, %s403
      %p412 = scmp.eq.s32.totalorder %s33, 1
      %p413 = por %p411, %p412
      %p414 = scmp.ne.s32.totalorder %s403, %s404
      %p415 = scmp.eq.s32.totalorder %s33, 0
      %p416 = por %p414, %p415
      %p417 = scmp.ne.s32.totalorder %s403, %s404
      %p418 = scmp.eq.s32.totalorder %s34, 1
      %p419 = por %p417, %p418
      %p421 = scmp.ne.s32.totalorder %s404, %s420
      %p422 = scmp.eq.s32.totalorder %s34, 0
      %p423 = por %p421, %p422
      %p424 = scmp.le.s32.totalorder 1, %s28
      %p425 = scmp.lt.s32.totalorder %s28, 3
      %p426 = pnand %p424, %p425
      %p427 = pneg %p426
      // Predicated region
      $region9: #{tpu_custom_call.1} parent=5 // pred_check
        _
      $region10: #{tpu_custom_call.1} parent=5 // pred_check_branch
        %429 = sbr.rel (%p426) target = $region12
      $region11: #{tpu_custom_call.1} parent=5 // pred_region
        %s430 = ssub.s32 %s28, 1
        // Predicated region
        $region13: #{tpu_custom_call.1} parent=11 // pred_check
          %p431 = pneg %p115
        $region14: #{tpu_custom_call.1} parent=11 // pred_check_branch
          %433 = sbr.rel (%p431) target = $region16
        $region15: #{tpu_custom_call.1} parent=11 // pred_region
          _
        $region16: #{tpu_custom_call.1} parent=11 // pred_fallthru
          _
        // Predicated region
        $region17: #{tpu_custom_call.1} parent=11 // pred_check
          %p434 = pneg %p136
        $region18: #{tpu_custom_call.1} parent=11 // pred_check_branch
          %436 = sbr.rel (%p434) target = $region20
        $region19: #{tpu_custom_call.1} parent=11 // pred_region
          _
        $region20: #{tpu_custom_call.1} parent=11 // pred_fallthru
          _
        // Predicated region
        $region21: #{tpu_custom_call.1} parent=11 // pred_check
          %p437 = pneg %p157
        $region22: #{tpu_custom_call.1} parent=11 // pred_check_branch
          %439 = sbr.rel (%p437) target = $region24
        $region23: #{tpu_custom_call.1} parent=11 // pred_region
          _
        $region24: #{tpu_custom_call.1} parent=11 // pred_fallthru
          _
        // Predicated region
        $region25: #{tpu_custom_call.1} parent=11 // pred_check
          %p440 = pneg %p178
        $region26: #{tpu_custom_call.1} parent=11 // pred_check_branch
          %442 = sbr.rel (%p440) target = $region28
        $region27: #{tpu_custom_call.1} parent=11 // pred_region
          _
        $region28: #{tpu_custom_call.1} parent=11 // pred_fallthru
          _
        // Predicated region
        $region29: #{tpu_custom_call.1} parent=11 // pred_check
          %p443 = pneg %p199
        $region30: #{tpu_custom_call.1} parent=11 // pred_check_branch
          %445 = sbr.rel (%p443) target = $region32
        $region31: #{tpu_custom_call.1} parent=11 // pred_region
          _
        $region32: #{tpu_custom_call.1} parent=11 // pred_fallthru
          _
        // Predicated region
        $region33: #{tpu_custom_call.1} parent=11 // pred_check
          %p446 = pneg %p220
        $region34: #{tpu_custom_call.1} parent=11 // pred_check_branch
          %448 = sbr.rel (%p446) target = $region36
        $region35: #{tpu_custom_call.1} parent=11 // pred_region
          _
        $region36: #{tpu_custom_call.1} parent=11 // pred_fallthru
          _
        // Predicated region
        $region37: #{tpu_custom_call.1} parent=11 // pred_check
          %p449 = pneg %p241
        $region38: #{tpu_custom_call.1} parent=11 // pred_check_branch
          %451 = sbr.rel (%p449) target = $region40
        $region39: #{tpu_custom_call.1} parent=11 // pred_region
          _
        $region40: #{tpu_custom_call.1} parent=11 // pred_fallthru
          _
        // Predicated region
        $region41: #{tpu_custom_call.1} parent=11 // pred_check
          %p452 = pneg %p262
        $region42: #{tpu_custom_call.1} parent=11 // pred_check_branch
          %454 = sbr.rel (%p452) target = $region44
        $region43: #{tpu_custom_call.1} parent=11 // pred_region
          _
        $region44: #{tpu_custom_call.1} parent=11 // pred_fallthru
          _
        // Predicated region
        $region45: #{tpu_custom_call.1} parent=11 // pred_check
          %p455 = pneg %p283
        $region46: #{tpu_custom_call.1} parent=11 // pred_check_branch
          %457 = sbr.rel (%p455) target = $region48
        $region47: #{tpu_custom_call.1} parent=11 // pred_region
          _
        $region48: #{tpu_custom_call.1} parent=11 // pred_fallthru
          _
        // Predicated region
        $region49: #{tpu_custom_call.1} parent=11 // pred_check
          %p458 = pneg %p304
        $region50: #{tpu_custom_call.1} parent=11 // pred_check_branch
          %460 = sbr.rel (%p458) target = $region52
        $region51: #{tpu_custom_call.1} parent=11 // pred_region
          _
        $region52: #{tpu_custom_call.1} parent=11 // pred_fallthru
          _
        // Predicated region
        $region53: #{tpu_custom_call.1} parent=11 // pred_check
          %p461 = pneg %p325
        $region54: #{tpu_custom_call.1} parent=11 // pred_check_branch
          %463 = sbr.rel (%p461) target = $region56
        $region55: #{tpu_custom_call.1} parent=11 // pred_region
          _
        $region56: #{tpu_custom_call.1} parent=11 // pred_fallthru
          _
        // Predicated region
        $region57: #{tpu_custom_call.1} parent=11 // pred_check
          %p464 = pneg %p346
        $region58: #{tpu_custom_call.1} parent=11 // pred_check_branch
          %466 = sbr.rel (%p464) target = $region60
        $region59: #{tpu_custom_call.1} parent=11 // pred_region
          _
        $region60: #{tpu_custom_call.1} parent=11 // pred_fallthru
          _
        // Predicated region
        $region61: #{tpu_custom_call.1} parent=11 // pred_check
          %p467 = pneg %p367
        $region62: #{tpu_custom_call.1} parent=11 // pred_check_branch
          %469 = sbr.rel (%p467) target = $region64
        $region63: #{tpu_custom_call.1} parent=11 // pred_region
          _
        $region64: #{tpu_custom_call.1} parent=11 // pred_fallthru
          _
        // Predicated region
        $region65: #{tpu_custom_call.1} parent=11 // pred_check
          %p470 = pneg %p388
        $region66: #{tpu_custom_call.1} parent=11 // pred_check_branch
          %472 = sbr.rel (%p470) target = $region68
        $region67: #{tpu_custom_call.1} parent=11 // pred_region
          _
        $region68: #{tpu_custom_call.1} parent=11 // pred_fallthru
          _
      $region12: #{tpu_custom_call.1} parent=5 // pred_fallthru
        _
      %p473 = scmp.lt.s32.totalorder %s28, 2
      // Predicated region
      $region69: #{tpu_custom_call.1} parent=5 // pred_check
        %p474 = pneg %p473
      $region70: #{tpu_custom_call.1} parent=5 // pred_check_branch
        %476 = sbr.rel (%p474) target = $region72
      $region71: #{tpu_custom_call.1} parent=5 // pred_region
        // Predicated region
        $region73: #{tpu_custom_call.1} parent=71 // pred_check
          %p477 = pneg %p62
        $region74: #{tpu_custom_call.1} parent=71 // pred_check_branch
          %479 = sbr.rel (%p477) target = $region76
        $region75: #{tpu_custom_call.1} parent=71 // pred_region
          %p480 = scmp.lt.s32.totalorder %s35, 1
          %s481 = scalar_select %p480, %s35, 1
          %p482 = scmp.lt.s32.totalorder %s36, 0
          %s483 = scalar_select %p482, %s36, 0
          %s484 = sadd.s32 %s483, %s481
          %s485 = smul.addr %s484, 8
          %s486 = scalar_lea.vmem %s0, %s485
        $region76: #{tpu_custom_call.1} parent=71 // pred_fallthru
          _
        // Predicated region
        $region77: #{tpu_custom_call.1} parent=71 // pred_check
          %p487 = pneg %p88
        $region78: #{tpu_custom_call.1} parent=71 // pred_check_branch
          %489 = sbr.rel (%p487) target = $region80
        $region79: #{tpu_custom_call.1} parent=71 // pred_region
          %s490 = sand.u32 %s78, 1
          %s491 = scalar_lea.sflag [#allocation5], %s490
          %s492 = sand.u32 %s78, 1
          %s493 = smul.addr %s492, 4
          %s494 = scalar_lea.vmem [#allocation4], %s493
          %s496 = ssub.s32 64, 64
          %497 = vsyncadd %s491, %s496
          %s498 = smul.addr %s35, 64
          %s499 = scalar_lea.hbm %s1, %s498
          %s501 = sshll.u32 %s494, 4
          %s502 = int_to_ptr.vmem [resolvable:$true] %s501
          %504 = dma.hbm_to_vmem [thread:$0]  %s499, 64, %s502, %s491
        $region80: #{tpu_custom_call.1} parent=71 // pred_fallthru
          _
      $region72: #{tpu_custom_call.1} parent=5 // pred_fallthru
        _
      %p505 = scmp.le.s32.totalorder 1, %s28
      %p506 = scmp.lt.s32.totalorder %s28, 3
      %p507 = pnand %p505, %p506
      %p508 = pneg %p507
      // Predicated region
      $region81: #{tpu_custom_call.1} parent=5 // pred_check
        _
      $region82: #{tpu_custom_call.1} parent=5 // pred_check_branch
        %510 = sbr.rel (%p507) target = $region84
      $region83: #{tpu_custom_call.1} parent=5 // pred_region
        %s511 = ssub.s32 %s28, 1
        %s512 = sand.u32 %s81, 1
        %s513 = scalar_lea.sflag [#allocation5], %s512
        %s514 = sand.u32 %s81, 1
        %s515 = smul.addr %s514, 4
        %s516 = scalar_lea.vmem [#allocation4], %s515
        // Predicated region
        $region85: #{tpu_custom_call.1} parent=83 // pred_check
          %p517 = pneg %p94
        $region86: #{tpu_custom_call.1} parent=83 // pred_check_branch
          %519 = sbr.rel (%p517) target = $region88
        $region87: #{tpu_custom_call.1} parent=83 // pred_region
          %520 = dma.done %s513, 64
        $region88: #{tpu_custom_call.1} parent=83 // pred_fallthru
          _
        %p521 = scmp.lt.s32.totalorder %s37, 1
        %s522 = scalar_select %p521, %s37, 1
        %p523 = scmp.lt.s32.totalorder %s38, 0
        %s524 = scalar_select %p523, %s38, 0
        %s525 = sadd.s32 %s524, %s522
        %s526 = smul.addr %s525, 8
        %s527 = scalar_lea.vmem %s0, %s526
        %p528 = pneg %p68
        %p529 = pneg %p65
        %s530 = sand.u32 %s81, 1
        %s531 = scalar_lea.sflag [#allocation5], %s530
        %s532 = sand.u32 %s81, 1
        %s533 = smul.addr %s532, 4
        %s534 = scalar_lea.vmem [#allocation4], %s533
        %p535 = pneg %p94
        %p536 = pneg %p91
        %p537 = pneg %p115
        %p538 = pneg %p112
        %p539 = pneg %p136
        %p540 = pneg %p133
        %p541 = pneg %p157
        %p542 = pneg %p154
        %p543 = pneg %p178
        %p544 = pneg %p175
        %p545 = pneg %p199
        %p546 = pneg %p196
        %p547 = pneg %p220
        %p548 = pneg %p217
        %p549 = pneg %p241
        %p550 = pneg %p238
        %p551 = pneg %p262
        %p552 = pneg %p259
        %p553 = pneg %p283
        %p554 = pneg %p280
        %p555 = pneg %p304
        %p556 = pneg %p301
        %p557 = pneg %p325
        %p558 = pneg %p322
        %p559 = pneg %p346
        %p560 = pneg %p343
        %p561 = pneg %p367
        %p562 = pneg %p364
        %p563 = pneg %p388
        %p564 = pneg %p385
        %p565 = pneg %p416
        %p566 = pneg %p413
        %s567 = sand.u32 %s403, 1
        %s568 = scalar_lea.sflag [#allocation6], %s567
        %s569 = sand.u32 %s403, 1
        %s570 = smul.addr %s569, 8
        %s571 = scalar_lea.vmem [#allocation7], %s570
        %p572 = scmp.lt.s32.totalorder %s37, 1
        %s573 = scalar_select %p572, %s37, 1
        %p574 = scmp.lt.s32.totalorder %s38, 0
        %s575 = scalar_select %p574, %s38, 0
        %s576 = sadd.s32 %s575, %s573
        %s577 = smul.addr %s576, 8
        %s578 = scalar_lea.vmem %s0, %s577
        %s580 = smul.u32 %s38, 8
        %p581 = scmp.eq.s32.totalorder %s38, 0
        // Predicated region
        $region89: #{tpu_custom_call.1} parent=83 // pred_check
          %p582 = pneg %p581
        $region90: #{tpu_custom_call.1} parent=83 // pred_check_branch
          %584 = sbr.rel (%p582) target = $region92
        $region91: #{tpu_custom_call.1} parent=83 // pred_region
          %v585 = vld [vmem:[%s516] sm:$0xf]
          %v586 = vld [vmem:[%s4] sm:$0xf]
          %v587 = vld [vmem:[%s4 + $0x4] sm:$0xf]
          %v588 = vld [vmem:[%s4 + $0x8] sm:$0xf]
          %v589 = vld [vmem:[%s4 + $0xc] sm:$0xf]
          %v590 = vld [vmem:[%s5] sm:$0x1]
          %v592 = vlaneseq
          %v593 = vshrl.u32 %v592, 7
          %v594 = vsub.s32 0, %v593
          %v595 = vrot.slane %v590, %v594
          %v601 = vunpack.c.l.b16 %v586
          %v602 = vunpack.c.l.b16 %v587
          %v603 = vunpack.c.l.b16 %v588
          %v604 = vunpack.c.l.b16 %v589
          %v605 = vpack.c.b16 %v602, %v601
          %v606 = vpack.c.b16 %v604, %v603
          %vm609 = vcmask 261120
          %v611 = vsel %vm609, %v585, 0
          %613 = vmatprep.subr.bf16.mxu0 0
          %614 = vmatpush1.bf16.msra.mxu0 %v605
          %615 = vmatprep.subr.bf16.mxu0 0
          %616 = vmatpush1.bf16.msra.mxu0 %v606
          %617 = vmatprep.subr.bf16.mxu0 0
          %618 = vmatpush1.bf16.msra.mxu0 0
          %619 = vmatprep.subr.bf16.mxu0 0
          %620 = vmatpush1.bf16.msra.mxu0 0
          %621 = vmatprep.subr.bf16.mxu0 0
          %622 = vmatpush1.bf16.msra.mxu0 0
          %623 = vmatprep.subr.bf16.mxu0 0
          %624 = vmatpush1.bf16.msra.mxu0 0
          %625 = vmatprep.subr.bf16.mxu0 0
          %626 = vmatpush1.bf16.msra.mxu0 0
          %627 = vmatprep.subr.bf16.mxu0 0
          %628 = vmatpush1.bf16.msra.mxu0 0
          %629 = vmatprep.subr.bf16.mxu0 0
          %630 = vmatpush1.bf16.msra.mxu0 0
          %631 = vmatprep.subr.bf16.mxu0 0
          %632 = vmatpush1.bf16.msra.mxu0 0
          %633 = vmatprep.subr.bf16.mxu0 0
          %634 = vmatpush1.bf16.msra.mxu0 0
          %635 = vmatprep.subr.bf16.mxu0 0
          %636 = vmatpush1.bf16.msra.mxu0 0
          %637 = vmatprep.subr.bf16.mxu0 0
          %638 = vmatpush1.bf16.msra.mxu0 0
          %639 = vmatprep.subr.bf16.mxu0 0
          %640 = vmatpush1.bf16.msra.mxu0 0
          %641 = vmatprep.subr.bf16.mxu0 0
          %642 = vmatpush1.bf16.msra.mxu0 0
          %643 = vmatprep.subr.bf16.mxu0 0
          %644 = vmatpush1.bf16.msra.mxu0 0
          %645 = vmatprep.mubr.bf16.mxu0 0
          %646 = vmatmul.mubr.bf16.gmra.mrb[0].mxu0 %v611
          %v647 = vpop.f32.mrb[0].mxu0
          %v648 = vadd.f32 %v595, %v647
          %v649 = vpop.f32.mrb[0].mxu0
          %v650 = vpop.f32.mrb[0].mxu0
          %v651 = vpop.f32.mrb[0].mxu0
          %652 = vdwg.mxu0
          %654 = vrot.lane.b32.xlu0 %v648, 120
          %v655 = vpop.permute.xlu0 %654
          %657 = vrot.lane.b32.xlu0 %v648, 112
          %v658 = vpop.permute.xlu0 %657
          %660 = vrot.lane.b32.xlu0 %v648, 104
          %v661 = vpop.permute.xlu0 %660
          %v663 = vcombine.low %v648, %v658
          %v664 = vcombine.high %v648, %v658
          %v666 = vunpack.c.l.s4 1983009808
          %v667 = vunpack.c.0.s8 %v666
          %v668 = vlaneseq
          %v669 = vshrl.u32 %v668, 7
          %v670 = vsub.s32 %v667, %v669
          %v671 = vrot.slane %v663, %v670
          %v673 = vunpack.c.l.s4 1983009808
          %v674 = vunpack.c.0.s8 %v673
          %v675 = vlaneseq
          %v676 = vshrl.u32 %v675, 7
          %v677 = vsub.s32 %v674, %v676
          %v678 = vrot.slane %v664, %v677
          %v679 = vcombine.low %v655, %v661
          %v680 = vcombine.high %v655, %v661
          %v682 = vunpack.c.l.s4 1983009808
          %v683 = vunpack.c.0.s8 %v682
          %v684 = vlaneseq
          %v685 = vshrl.u32 %v684, 7
          %v686 = vsub.s32 %v683, %v685
          %v687 = vrot.slane %v679, %v686
          %v689 = vunpack.c.l.s4 1983009808
          %v690 = vunpack.c.0.s8 %v689
          %v691 = vlaneseq
          %v692 = vshrl.u32 %v691, 7
          %v693 = vsub.s32 %v690, %v692
          %v694 = vrot.slane %v680, %v693
          %v695 = vcombine.low %v671, %v687
          %v696 = vcombine.high %v671, %v687
          %v698 = vunpack.c.l.s4 1934713408
          %v699 = vunpack.c.0.s8 %v698
          %v700 = vlaneseq
          %v701 = vshrl.u32 %v700, 7
          %v702 = vsub.s32 %v699, %v701
          %v703 = vrot.slane %v695, %v702
          %v705 = vunpack.c.l.s4 1934713408
          %v706 = vunpack.c.0.s8 %v705
          %v707 = vlaneseq
          %v708 = vshrl.u32 %v707, 7
          %v709 = vsub.s32 %v706, %v708
          %v710 = vrot.slane %v696, %v709
          %v711 = vcombine.low %v678, %v694
          %v712 = vcombine.high %v678, %v694
          %v714 = vunpack.c.l.s4 1934713408
          %v715 = vunpack.c.0.s8 %v714
          %v716 = vlaneseq
          %v717 = vshrl.u32 %v716, 7
          %v718 = vsub.s32 %v715, %v717
          %v719 = vrot.slane %v711, %v718
          %v721 = vunpack.c.l.s4 1934713408
          %v722 = vunpack.c.0.s8 %v721
          %v723 = vlaneseq
          %v724 = vshrl.u32 %v723, 7
          %v725 = vsub.s32 %v722, %v724
          %v726 = vrot.slane %v712, %v725
          %v727 = vcombine.high %v703, 0.0
          %v728 = vcombine.high %v710, 0.0
          %v729 = vcombine.high %v719, 0.0
          %v730 = vcombine.high %v726, 0.0
          %731 = vrot.lane.b32.xlu0 %v648, 96
          %v732 = vpop.permute.xlu0 %731
          %733 = vrot.lane.b32.xlu0 %v655, 96
          %v734 = vpop.permute.xlu0 %733
          %735 = vrot.lane.b32.xlu0 %v658, 96
          %v736 = vpop.permute.xlu0 %735
          %737 = vrot.lane.b32.xlu0 %v661, 96
          %v738 = vpop.permute.xlu0 %737
          %v743 = vcombine.low %v732, %v736
          %v744 = vcombine.high %v732, %v736
          %v746 = vunpack.c.l.s4 1983009808
          %v747 = vunpack.c.0.s8 %v746
          %v748 = vlaneseq
          %v749 = vshrl.u32 %v748, 7
          %v750 = vsub.s32 %v747, %v749
          %v751 = vrot.slane %v743, %v750
          %v753 = vunpack.c.l.s4 1983009808
          %v754 = vunpack.c.0.s8 %v753
          %v755 = vlaneseq
          %v756 = vshrl.u32 %v755, 7
          %v757 = vsub.s32 %v754, %v756
          %v758 = vrot.slane %v744, %v757
          %v759 = vcombine.low %v734, %v738
          %v760 = vcombine.high %v734, %v738
          %v762 = vunpack.c.l.s4 1983009808
          %v763 = vunpack.c.0.s8 %v762
          %v764 = vlaneseq
          %v765 = vshrl.u32 %v764, 7
          %v766 = vsub.s32 %v763, %v765
          %v767 = vrot.slane %v759, %v766
          %v769 = vunpack.c.l.s4 1983009808
          %v770 = vunpack.c.0.s8 %v769
          %v771 = vlaneseq
          %v772 = vshrl.u32 %v771, 7
          %v773 = vsub.s32 %v770, %v772
          %v774 = vrot.slane %v760, %v773
          %v775 = vcombine.low %v751, %v767
          %v776 = vcombine.high %v751, %v767
          %v778 = vunpack.c.l.s4 1934713408
          %v779 = vunpack.c.0.s8 %v778
          %v780 = vlaneseq
          %v781 = vshrl.u32 %v780, 7
          %v782 = vsub.s32 %v779, %v781
          %v783 = vrot.slane %v775, %v782
          %v785 = vunpack.c.l.s4 1934713408
          %v786 = vunpack.c.0.s8 %v785
          %v787 = vlaneseq
          %v788 = vshrl.u32 %v787, 7
          %v789 = vsub.s32 %v786, %v788
          %v790 = vrot.slane %v776, %v789
          %v791 = vcombine.low %v758, %v774
          %v792 = vcombine.high %v758, %v774
          %v794 = vunpack.c.l.s4 1934713408
          %v795 = vunpack.c.0.s8 %v794
          %v796 = vlaneseq
          %v797 = vshrl.u32 %v796, 7
          %v798 = vsub.s32 %v795, %v797
          %v799 = vrot.slane %v791, %v798
          %v801 = vunpack.c.l.s4 1934713408
          %v802 = vunpack.c.0.s8 %v801
          %v803 = vlaneseq
          %v804 = vshrl.u32 %v803, 7
          %v805 = vsub.s32 %v802, %v804
          %v806 = vrot.slane %v792, %v805
          %v807 = vcombine.high %v783, 0.0
          %v808 = vcombine.high %v790, 0.0
          %v809 = vcombine.high %v799, 0.0
          %v810 = vcombine.high %v806, 0.0
          %v811 = vcombine.low %v703, %v710
          %v813 = vunpack.c.l.s4 1983009808
          %v814 = vunpack.c.0.s8 %v813
          %v815 = vlaneseq
          %v816 = vshrl.u32 %v815, 7
          %v817 = vsub.s32 %v814, %v816
          %v818 = vrot.slane %v811, %v817
          %v819 = vcombine.low %v727, %v728
          %v821 = vunpack.c.l.s4 1983009808
          %v822 = vunpack.c.0.s8 %v821
          %v823 = vlaneseq
          %v824 = vshrl.u32 %v823, 7
          %v825 = vsub.s32 %v822, %v824
          %v826 = vrot.slane %v819, %v825
          %v827 = vcombine.low %v719, %v726
          %v829 = vunpack.c.l.s4 1983009808
          %v830 = vunpack.c.0.s8 %v829
          %v831 = vlaneseq
          %v832 = vshrl.u32 %v831, 7
          %v833 = vsub.s32 %v830, %v832
          %v834 = vrot.slane %v827, %v833
          %v835 = vcombine.low %v729, %v730
          %v837 = vunpack.c.l.s4 1983009808
          %v838 = vunpack.c.0.s8 %v837
          %v839 = vlaneseq
          %v840 = vshrl.u32 %v839, 7
          %v841 = vsub.s32 %v838, %v840
          %v842 = vrot.slane %v835, %v841
          %v843 = vcombine.low %v818, %v826
          %v844 = vcombine.high %v818, %v826
          %v846 = vunpack.c.l.s4 1934713408
          %v847 = vunpack.c.0.s8 %v846
          %v848 = vlaneseq
          %v849 = vshrl.u32 %v848, 7
          %v850 = vsub.s32 %v847, %v849
          %v851 = vrot.slane %v843, %v850
          %v853 = vunpack.c.l.s4 1934713408
          %v854 = vunpack.c.0.s8 %v853
          %v855 = vlaneseq
          %v856 = vshrl.u32 %v855, 7
          %v857 = vsub.s32 %v854, %v856
          %v858 = vrot.slane %v844, %v857
          %v859 = vcombine.low %v834, %v842
          %v860 = vcombine.high %v834, %v842
          %v862 = vunpack.c.l.s4 1934713408
          %v863 = vunpack.c.0.s8 %v862
          %v864 = vlaneseq
          %v865 = vshrl.u32 %v864, 7
          %v866 = vsub.s32 %v863, %v865
          %v867 = vrot.slane %v859, %v866
          %v869 = vunpack.c.l.s4 1934713408
          %v870 = vunpack.c.0.s8 %v869
          %v871 = vlaneseq
          %v872 = vshrl.u32 %v871, 7
          %v873 = vsub.s32 %v870, %v872
          %v874 = vrot.slane %v860, %v873
          %v875 = vcombine.low %v851, %v867
          %v876 = vcombine.high %v851, %v867
          %v877 = vcombine.low %v858, %v874
          %v878 = vcombine.high %v858, %v874
          %v879 = vpack.c.bf16 %v875, %v875
          %v880 = vpack.c.bf16 %v876, %v876
          %v881 = vpack.c.bf16 %v877, %v877
          %v882 = vpack.c.bf16 %v878, %v878
          %vm883 = vcmask 60416
          %884 = vst.msk [vmem:[#allocation2] sm:$0xf] %vm883, %v879
          %885 = vst.msk [vmem:[#allocation2 + $0x4] sm:$0xf] %vm883, %v880
          %886 = vst.msk [vmem:[#allocation2 + $0x8] sm:$0xf] %vm883, %v881
          %887 = vst.msk [vmem:[#allocation2 + $0xc] sm:$0xf] %vm883, %v882
          %v888 = vcombine.low %v783, %v790
          %v890 = vunpack.c.l.s4 1983009808
          %v891 = vunpack.c.0.s8 %v890
          %v892 = vlaneseq
          %v893 = vshrl.u32 %v892, 7
          %v894 = vsub.s32 %v891, %v893
          %v895 = vrot.slane %v888, %v894
          %v896 = vcombine.low %v807, %v808
          %v898 = vunpack.c.l.s4 1983009808
          %v899 = vunpack.c.0.s8 %v898
          %v900 = vlaneseq
          %v901 = vshrl.u32 %v900, 7
          %v902 = vsub.s32 %v899, %v901
          %v903 = vrot.slane %v896, %v902
          %v904 = vcombine.low %v799, %v806
          %v906 = vunpack.c.l.s4 1983009808
          %v907 = vunpack.c.0.s8 %v906
          %v908 = vlaneseq
          %v909 = vshrl.u32 %v908, 7
          %v910 = vsub.s32 %v907, %v909
          %v911 = vrot.slane %v904, %v910
          %v912 = vcombine.low %v809, %v810
          %v914 = vunpack.c.l.s4 1983009808
          %v915 = vunpack.c.0.s8 %v914
          %v916 = vlaneseq
          %v917 = vshrl.u32 %v916, 7
          %v918 = vsub.s32 %v915, %v917
          %v919 = vrot.slane %v912, %v918
          %v920 = vcombine.low %v895, %v903
          %v921 = vcombine.high %v895, %v903
          %v923 = vunpack.c.l.s4 1934713408
          %v924 = vunpack.c.0.s8 %v923
          %v925 = vlaneseq
          %v926 = vshrl.u32 %v925, 7
          %v927 = vsub.s32 %v924, %v926
          %v928 = vrot.slane %v920, %v927
          %v930 = vunpack.c.l.s4 1934713408
          %v931 = vunpack.c.0.s8 %v930
          %v932 = vlaneseq
          %v933 = vshrl.u32 %v932, 7
          %v934 = vsub.s32 %v931, %v933
          %v935 = vrot.slane %v921, %v934
          %v936 = vcombine.low %v911, %v919
          %v937 = vcombine.high %v911, %v919
          %v939 = vunpack.c.l.s4 1934713408
          %v940 = vunpack.c.0.s8 %v939
          %v941 = vlaneseq
          %v942 = vshrl.u32 %v941, 7
          %v943 = vsub.s32 %v940, %v942
          %v944 = vrot.slane %v936, %v943
          %v946 = vunpack.c.l.s4 1934713408
          %v947 = vunpack.c.0.s8 %v946
          %v948 = vlaneseq
          %v949 = vshrl.u32 %v948, 7
          %v950 = vsub.s32 %v947, %v949
          %v951 = vrot.slane %v937, %v950
          %v952 = vcombine.low %v928, %v944
          %v953 = vcombine.high %v928, %v944
          %v954 = vcombine.low %v935, %v951
          %v955 = vcombine.high %v935, %v951
          %v956 = vpack.c.bf16 %v952, %v952
          %v957 = vpack.c.bf16 %v953, %v953
          %v958 = vpack.c.bf16 %v954, %v954
          %v959 = vpack.c.bf16 %v955, %v955
          %960 = vst.msk [vmem:[#allocation3] sm:$0xf] %vm883, %v956
          %961 = vst.msk [vmem:[#allocation3 + $0x4] sm:$0xf] %vm883, %v957
          %962 = vst.msk [vmem:[#allocation3 + $0x8] sm:$0xf] %vm883, %v958
          %963 = vst.msk [vmem:[#allocation3 + $0xc] sm:$0xf] %vm883, %v959
        $region92: #{tpu_custom_call.1} parent=83 // pred_fallthru
          _
        %v964 = vld [vmem:[%s578] sm:$0xff]
        %v965 = vpack.c.bf16 %v964, %v964
        %v966 = vld [vmem:[%s2] sm:$0xf]
        %v967 = vld [vmem:[%s2 + $0x4] sm:$0xf]
        %v968 = vld [vmem:[%s2 + $0x8] sm:$0xf]
        %v969 = vld [vmem:[%s2 + $0xc] sm:$0xf]
        %v970 = vld [vmem:[%s3] sm:$0x1]
        %v972 = vlaneseq
        %v973 = vshrl.u32 %v972, 7
        %v974 = vsub.s32 0, %v973
        %v975 = vrot.slane %v970, %v974
        %v981 = vunpack.c.l.b16 %v966
        %v982 = vunpack.c.l.b16 %v967
        %v983 = vunpack.c.l.b16 %v968
        %v984 = vunpack.c.l.b16 %v969
        %v985 = vpack.c.b16 %v982, %v981
        %v986 = vpack.c.b16 %v984, %v983
        %vm989 = vcmask 261120
        %v991 = vsel %vm989, %v965, 0
        %993 = vmatprep.subr.bf16.mxu0 0
        %994 = vmatpush1.bf16.msra.mxu0 %v985
        %995 = vmatprep.subr.bf16.mxu0 0
        %996 = vmatpush1.bf16.msra.mxu0 %v986
        %997 = vmatprep.subr.bf16.mxu0 0
        %998 = vmatpush1.bf16.msra.mxu0 0
        %999 = vmatprep.subr.bf16.mxu0 0
        %1000 = vmatpush1.bf16.msra.mxu0 0
        %1001 = vmatprep.subr.bf16.mxu0 0
        %1002 = vmatpush1.bf16.msra.mxu0 0
        %1003 = vmatprep.subr.bf16.mxu0 0
        %1004 = vmatpush1.bf16.msra.mxu0 0
        %1005 = vmatprep.subr.bf16.mxu0 0
        %1006 = vmatpush1.bf16.msra.mxu0 0
        %1007 = vmatprep.subr.bf16.mxu0 0
        %1008 = vmatpush1.bf16.msra.mxu0 0
        %1009 = vmatprep.subr.bf16.mxu0 0
        %1010 = vmatpush1.bf16.msra.mxu0 0
        %1011 = vmatprep.subr.bf16.mxu0 0
        %1012 = vmatpush1.bf16.msra.mxu0 0
        %1013 = vmatprep.subr.bf16.mxu0 0
        %1014 = vmatpush1.bf16.msra.mxu0 0
        %1015 = vmatprep.subr.bf16.mxu0 0
        %1016 = vmatpush1.bf16.msra.mxu0 0
        %1017 = vmatprep.subr.bf16.mxu0 0
        %1018 = vmatpush1.bf16.msra.mxu0 0
        %1019 = vmatprep.subr.bf16.mxu0 0
        %1020 = vmatpush1.bf16.msra.mxu0 0
        %1021 = vmatprep.subr.bf16.mxu0 0
        %1022 = vmatpush1.bf16.msra.mxu0 0
        %1023 = vmatprep.subr.bf16.mxu0 0
        %1024 = vmatpush1.bf16.msra.mxu0 0
        %1025 = vmatprep.mubr.bf16.mxu0 0
        %1026 = vmatmul.mubr.bf16.gmra.mrb[0].mxu0 %v991
        %v1027 = vpop.f32.mrb[0].mxu0
        %v1028 = vadd.f32 %v975, %v1027
        %v1029 = vpop.f32.mrb[0].mxu0
        %v1030 = vpop.f32.mrb[0].mxu0
        %v1031 = vpop.f32.mrb[0].mxu0
        %1032 = vdwg.mxu0
        %1034 = vrot.lane.b32.xlu0 %v1028, 120
        %v1035 = vpop.permute.xlu0 %1034
        %1037 = vrot.lane.b32.xlu0 %v1028, 112
        %v1038 = vpop.permute.xlu0 %1037
        %1040 = vrot.lane.b32.xlu0 %v1028, 104
        %v1041 = vpop.permute.xlu0 %1040
        %v1043 = vcombine.low %v1028, %v1038
        %v1044 = vcombine.high %v1028, %v1038
        %v1046 = vunpack.c.l.s4 1983009808
        %v1047 = vunpack.c.0.s8 %v1046
        %v1048 = vlaneseq
        %v1049 = vshrl.u32 %v1048, 7
        %v1050 = vsub.s32 %v1047, %v1049
        %v1051 = vrot.slane %v1043, %v1050
        %v1053 = vunpack.c.l.s4 1983009808
        %v1054 = vunpack.c.0.s8 %v1053
        %v1055 = vlaneseq
        %v1056 = vshrl.u32 %v1055, 7
        %v1057 = vsub.s32 %v1054, %v1056
        %v1058 = vrot.slane %v1044, %v1057
        %v1059 = vcombine.low %v1035, %v1041
        %v1060 = vcombine.high %v1035, %v1041
        %v1062 = vunpack.c.l.s4 1983009808
        %v1063 = vunpack.c.0.s8 %v1062
        %v1064 = vlaneseq
        %v1065 = vshrl.u32 %v1064, 7
        %v1066 = vsub.s32 %v1063, %v1065
        %v1067 = vrot.slane %v1059, %v1066
        %v1069 = vunpack.c.l.s4 1983009808
        %v1070 = vunpack.c.0.s8 %v1069
        %v1071 = vlaneseq
        %v1072 = vshrl.u32 %v1071, 7
        %v1073 = vsub.s32 %v1070, %v1072
        %v1074 = vrot.slane %v1060, %v1073
        %v1075 = vcombine.low %v1051, %v1067
        %v1076 = vcombine.high %v1051, %v1067
        %v1078 = vunpack.c.l.s4 1934713408
        %v1079 = vunpack.c.0.s8 %v1078
        %v1080 = vlaneseq
        %v1081 = vshrl.u32 %v1080, 7
        %v1082 = vsub.s32 %v1079, %v1081
        %v1083 = vrot.slane %v1075, %v1082
        %v1085 = vunpack.c.l.s4 1934713408
        %v1086 = vunpack.c.0.s8 %v1085
        %v1087 = vlaneseq
        %v1088 = vshrl.u32 %v1087, 7
        %v1089 = vsub.s32 %v1086, %v1088
        %v1090 = vrot.slane %v1076, %v1089
        %v1091 = vcombine.low %v1058, %v1074
        %v1092 = vcombine.high %v1058, %v1074
        %v1094 = vunpack.c.l.s4 1934713408
        %v1095 = vunpack.c.0.s8 %v1094
        %v1096 = vlaneseq
        %v1097 = vshrl.u32 %v1096, 7
        %v1098 = vsub.s32 %v1095, %v1097
        %v1099 = vrot.slane %v1091, %v1098
        %v1101 = vunpack.c.l.s4 1934713408
        %v1102 = vunpack.c.0.s8 %v1101
        %v1103 = vlaneseq
        %v1104 = vshrl.u32 %v1103, 7
        %v1105 = vsub.s32 %v1102, %v1104
        %v1106 = vrot.slane %v1092, %v1105
        %v1107 = vcombine.high %v1083, 0.0
        %v1108 = vcombine.high %v1090, 0.0
        %v1109 = vcombine.high %v1099, 0.0
        %v1110 = vcombine.high %v1106, 0.0
        %v1111 = vcombine.low %v1083, %v1090
        %v1113 = vunpack.c.l.s4 1983009808
        %v1114 = vunpack.c.0.s8 %v1113
        %v1115 = vlaneseq
        %v1116 = vshrl.u32 %v1115, 7
        %v1117 = vsub.s32 %v1114, %v1116
        %v1118 = vrot.slane %v1111, %v1117
        %v1119 = vcombine.low %v1107, %v1108
        %v1121 = vunpack.c.l.s4 1983009808
        %v1122 = vunpack.c.0.s8 %v1121
        %v1123 = vlaneseq
        %v1124 = vshrl.u32 %v1123, 7
        %v1125 = vsub.s32 %v1122, %v1124
        %v1126 = vrot.slane %v1119, %v1125
        %v1127 = vcombine.low %v1099, %v1106
        %v1129 = vunpack.c.l.s4 1983009808
        %v1130 = vunpack.c.0.s8 %v1129
        %v1131 = vlaneseq
        %v1132 = vshrl.u32 %v1131, 7
        %v1133 = vsub.s32 %v1130, %v1132
        %v1134 = vrot.slane %v1127, %v1133
        %v1135 = vcombine.low %v1109, %v1110
        %v1137 = vunpack.c.l.s4 1983009808
        %v1138 = vunpack.c.0.s8 %v1137
        %v1139 = vlaneseq
        %v1140 = vshrl.u32 %v1139, 7
        %v1141 = vsub.s32 %v1138, %v1140
        %v1142 = vrot.slane %v1135, %v1141
        %v1143 = vcombine.low %v1118, %v1126
        %v1144 = vcombine.high %v1118, %v1126
        %v1146 = vunpack.c.l.s4 1934713408
        %v1147 = vunpack.c.0.s8 %v1146
        %v1148 = vlaneseq
        %v1149 = vshrl.u32 %v1148, 7
        %v1150 = vsub.s32 %v1147, %v1149
        %v1151 = vrot.slane %v1143, %v1150
        %v1153 = vunpack.c.l.s4 1934713408
        %v1154 = vunpack.c.0.s8 %v1153
        %v1155 = vlaneseq
        %v1156 = vshrl.u32 %v1155, 7
        %v1157 = vsub.s32 %v1154, %v1156
        %v1158 = vrot.slane %v1144, %v1157
        %v1159 = vcombine.low %v1134, %v1142
        %v1160 = vcombine.high %v1134, %v1142
        %v1162 = vunpack.c.l.s4 1934713408
        %v1163 = vunpack.c.0.s8 %v1162
        %v1164 = vlaneseq
        %v1165 = vshrl.u32 %v1164, 7
        %v1166 = vsub.s32 %v1163, %v1165
        %v1167 = vrot.slane %v1159, %v1166
        %v1169 = vunpack.c.l.s4 1934713408
        %v1170 = vunpack.c.0.s8 %v1169
        %v1171 = vlaneseq
        %v1172 = vshrl.u32 %v1171, 7
        %v1173 = vsub.s32 %v1170, %v1172
        %v1174 = vrot.slane %v1160, %v1173
        %v1175 = vcombine.low %v1151, %v1167
        %v1176 = vcombine.high %v1151, %v1167
        %v1177 = vcombine.low %v1158, %v1174
        %v1178 = vcombine.high %v1158, %v1174
        %v1179 = vpack.c.bf16 %v1175, %v1175
        %v1180 = vpack.c.bf16 %v1176, %v1176
        %v1181 = vpack.c.bf16 %v1177, %v1177
        %v1182 = vpack.c.bf16 %v1178, %v1178
        %v1183 = vlaneseq
        %v1184 = vshrl.u32 %v1183, 7
        %v1185 = vstv %s580
        %v1186 = vadd.s32 %v1185, %v1184
        %s1187 = sadd.s32 %s38, 1
        // While loop
        $region93: #{tpu_custom_call.1} parent=83 // loop_pre_header
          _
        $region94: #{tpu_custom_call.1} parent=83 // loop_header
          %s1189 = sphi 0, %s1191
          %p1190 = scmp.ge.s32.totalorder %s1189, %s1187
          %v1194 = vphi -1e+30, %v1433
          %v1195 = vphi -1e+30, %v1434
          %v1196 = vphi -1e+30, %v1435
          %v1197 = vphi -1e+30, %v1436
          %v1198 = vphi 0.0, %v1477
          %v1199 = vphi 0.0, %v1478
          %v1200 = vphi 0.0, %v1479
          %v1201 = vphi 0.0, %v1480
          %v1202 = vphi 0.0, %v1674
          %v1203 = vphi 0.0, %v1675
          %v1204 = vphi 0.0, %v1676
          %v1205 = vphi 0.0, %v1677
        $region95: #{tpu_custom_call.1} parent=83 // loop_header_branch
          %1193 = sbr.rel (%p1190) target = $region99
        $region96: #{tpu_custom_call.1} parent=83 // loop_body
          %s1206 = smul.u32 %s1189, 8
          %s1207 = sshra.s32 %s1206, 3
          %s1208 = sand.u32 %s1206, 7
          %s1209 = smul.addr %s1207, 4
          %s1210 = scalar_lea.vmem [#allocation2], %s1209
          %v1211 = vld [vmem:[%s1210] sm:$0xf]
          %v1212 = vld [vmem:[%s1210 + $0x4] sm:$0xf]
          %v1213 = vld [vmem:[%s1210 + $0x8] sm:$0xf]
          %v1214 = vld [vmem:[%s1210 + $0xc] sm:$0xf]
          %s1215 = smul.addr %s1207, 4
          %s1216 = scalar_lea.vmem [#allocation3], %s1215
          %v1217 = vld [vmem:[%s1216] sm:$0xf]
          %v1218 = vld [vmem:[%s1216 + $0x4] sm:$0xf]
          %v1219 = vld [vmem:[%s1216 + $0x8] sm:$0xf]
          %v1220 = vld [vmem:[%s1216 + $0xc] sm:$0xf]
          %vm1221 = vcmask 64512
          %v1223 = vsel %vm1221, %v1179, 0
          %v1226 = vsel %vm1221, %v1211, 0
          %1228 = vmatprep.subr.bf16.mxu0 0
          %1229 = vmatpush1.bf16.xpose.msra.mxu0 %v1226
          %1230 = vmatprep.subr.bf16.mxu0 0
          %1231 = vmatpush1.bf16.xpose.msra.mxu0 0
          %1232 = vmatprep.subr.bf16.mxu0 0
          %1233 = vmatpush1.bf16.xpose.msra.mxu0 0
          %1234 = vmatprep.subr.bf16.mxu0 0
          %1235 = vmatpush1.bf16.xpose.msra.mxu0 0
          %1236 = vmatprep.subr.bf16.mxu0 0
          %1237 = vmatpush1.bf16.xpose.msra.mxu0 0
          %1238 = vmatprep.subr.bf16.mxu0 0
          %1239 = vmatpush1.bf16.xpose.msra.mxu0 0
          %1240 = vmatprep.subr.bf16.mxu0 0
          %1241 = vmatpush1.bf16.xpose.msra.mxu0 0
          %1242 = vmatprep.subr.bf16.mxu0 0
          %1243 = vmatpush1.bf16.xpose.msra.mxu0 0
          %1244 = vmatprep.subr.bf16.mxu0 0
          %1245 = vmatpush1.bf16.xpose.msra.mxu0 0
          %1246 = vmatprep.subr.bf16.mxu0 0
          %1247 = vmatpush1.bf16.xpose.msra.mxu0 0
          %1248 = vmatprep.subr.bf16.mxu0 0
          %1249 = vmatpush1.bf16.xpose.msra.mxu0 0
          %1250 = vmatprep.subr.bf16.mxu0 0
          %1251 = vmatpush1.bf16.xpose.msra.mxu0 0
          %1252 = vmatprep.subr.bf16.mxu0 0
          %1253 = vmatpush1.bf16.xpose.msra.mxu0 0
          %1254 = vmatprep.subr.bf16.mxu0 0
          %1255 = vmatpush1.bf16.xpose.msra.mxu0 0
          %1256 = vmatprep.subr.bf16.mxu0 0
          %1257 = vmatpush1.bf16.xpose.msra.mxu0 0
          %1258 = vmatprep.subr.bf16.mxu0 0
          %1259 = vmatpush1.bf16.xpose.msra.mxu0 0
          %1260 = vmatprep.mubr.bf16.mxu0 0
          %1261 = vmatmul.mubr.bf16.gmra.mrb[0].mxu0 %v1223
          %v1262 = vpop.f32.mrb[0].mxu0
          %v1263 = vadd.f32 0.0, %v1262
          %v1264 = vpop.f32.mrb[0].mxu0
          %v1265 = vpop.f32.mrb[0].mxu0
          %v1266 = vpop.f32.mrb[0].mxu0
          %1267 = vdwg.mxu0
          %v1269 = vsel %vm1221, %v1180, 0
          %v1272 = vsel %vm1221, %v1212, 0
          %1274 = vmatprep.subr.bf16.mxu0 0
          %1275 = vmatpush1.bf16.xpose.msra.mxu0 %v1272
          %1276 = vmatprep.subr.bf16.mxu0 0
          %1277 = vmatpush1.bf16.xpose.msra.mxu0 0
          %1278 = vmatprep.subr.bf16.mxu0 0
          %1279 = vmatpush1.bf16.xpose.msra.mxu0 0
          %1280 = vmatprep.subr.bf16.mxu0 0
          %1281 = vmatpush1.bf16.xpose.msra.mxu0 0
          %1282 = vmatprep.subr.bf16.mxu0 0
          %1283 = vmatpush1.bf16.xpose.msra.mxu0 0
          %1284 = vmatprep.subr.bf16.mxu0 0
          %1285 = vmatpush1.bf16.xpose.msra.mxu0 0
          %1286 = vmatprep.subr.bf16.mxu0 0
          %1287 = vmatpush1.bf16.xpose.msra.mxu0 0
          %1288 = vmatprep.subr.bf16.mxu0 0
          %1289 = vmatpush1.bf16.xpose.msra.mxu0 0
          %1290 = vmatprep.subr.bf16.mxu0 0
          %1291 = vmatpush1.bf16.xpose.msra.mxu0 0
          %1292 = vmatprep.subr.bf16.mxu0 0
          %1293 = vmatpush1.bf16.xpose.msra.mxu0 0
          %1294 = vmatprep.subr.bf16.mxu0 0
          %1295 = vmatpush1.bf16.xpose.msra.mxu0 0
          %1296 = vmatprep.subr.bf16.mxu0 0
          %1297 = vmatpush1.bf16.xpose.msra.mxu0 0
          %1298 = vmatprep.subr.bf16.mxu0 0
          %1299 = vmatpush1.bf16.xpose.msra.mxu0 0
          %1300 = vmatprep.subr.bf16.mxu0 0
          %1301 = vmatpush1.bf16.xpose.msra.mxu0 0
          %1302 = vmatprep.subr.bf16.mxu0 0
          %1303 = vmatpush1.bf16.xpose.msra.mxu0 0
          %1304 = vmatprep.subr.bf16.mxu0 0
          %1305 = vmatpush1.bf16.xpose.msra.mxu0 0
          %1306 = vmatprep.mubr.bf16.mxu0 0
          %1307 = vmatmul.mubr.bf16.gmra.mrb[0].mxu0 %v1269
          %v1308 = vpop.f32.mrb[0].mxu0
          %v1309 = vadd.f32 0.0, %v1308
          %v1310 = vpop.f32.mrb[0].mxu0
          %v1311 = vpop.f32.mrb[0].mxu0
          %v1312 = vpop.f32.mrb[0].mxu0
          %1313 = vdwg.mxu0
          %v1315 = vsel %vm1221, %v1181, 0
          %v1318 = vsel %vm1221, %v1213, 0
          %1320 = vmatprep.subr.bf16.mxu0 0
          %1321 = vmatpush1.bf16.xpose.msra.mxu0 %v1318
          %1322 = vmatprep.subr.bf16.mxu0 0
          %1323 = vmatpush1.bf16.xpose.msra.mxu0 0
          %1324 = vmatprep.subr.bf16.mxu0 0
          %1325 = vmatpush1.bf16.xpose.msra.mxu0 0
          %1326 = vmatprep.subr.bf16.mxu0 0
          %1327 = vmatpush1.bf16.xpose.msra.mxu0 0
          %1328 = vmatprep.subr.bf16.mxu0 0
          %1329 = vmatpush1.bf16.xpose.msra.mxu0 0
          %1330 = vmatprep.subr.bf16.mxu0 0
          %1331 = vmatpush1.bf16.xpose.msra.mxu0 0
          %1332 = vmatprep.subr.bf16.mxu0 0
          %1333 = vmatpush1.bf16.xpose.msra.mxu0 0
          %1334 = vmatprep.subr.bf16.mxu0 0
          %1335 = vmatpush1.bf16.xpose.msra.mxu0 0
          %1336 = vmatprep.subr.bf16.mxu0 0
          %1337 = vmatpush1.bf16.xpose.msra.mxu0 0
          %1338 = vmatprep.subr.bf16.mxu0 0
          %1339 = vmatpush1.bf16.xpose.msra.mxu0 0
          %1340 = vmatprep.subr.bf16.mxu0 0
          %1341 = vmatpush1.bf16.xpose.msra.mxu0 0
          %1342 = vmatprep.subr.bf16.mxu0 0
          %1343 = vmatpush1.bf16.xpose.msra.mxu0 0
          %1344 = vmatprep.subr.bf16.mxu0 0
          %1345 = vmatpush1.bf16.xpose.msra.mxu0 0
          %1346 = vmatprep.subr.bf16.mxu0 0
          %1347 = vmatpush1.bf16.xpose.msra.mxu0 0
          %1348 = vmatprep.subr.bf16.mxu0 0
          %1349 = vmatpush1.bf16.xpose.msra.mxu0 0
          %1350 = vmatprep.subr.bf16.mxu0 0
          %1351 = vmatpush1.bf16.xpose.msra.mxu0 0
          %1352 = vmatprep.mubr.bf16.mxu0 0
          %1353 = vmatmul.mubr.bf16.gmra.mrb[0].mxu0 %v1315
          %v1354 = vpop.f32.mrb[0].mxu0
          %v1355 = vadd.f32 0.0, %v1354
          %v1356 = vpop.f32.mrb[0].mxu0
          %v1357 = vpop.f32.mrb[0].mxu0
          %v1358 = vpop.f32.mrb[0].mxu0
          %1359 = vdwg.mxu0
          %v1361 = vsel %vm1221, %v1182, 0
          %v1364 = vsel %vm1221, %v1214, 0
          %1366 = vmatprep.subr.bf16.mxu0 0
          %1367 = vmatpush1.bf16.xpose.msra.mxu0 %v1364
          %1368 = vmatprep.subr.bf16.mxu0 0
          %1369 = vmatpush1.bf16.xpose.msra.mxu0 0
          %1370 = vmatprep.subr.bf16.mxu0 0
          %1371 = vmatpush1.bf16.xpose.msra.mxu0 0
          %1372 = vmatprep.subr.bf16.mxu0 0
          %1373 = vmatpush1.bf16.xpose.msra.mxu0 0
          %1374 = vmatprep.subr.bf16.mxu0 0
          %1375 = vmatpush1.bf16.xpose.msra.mxu0 0
          %1376 = vmatprep.subr.bf16.mxu0 0
          %1377 = vmatpush1.bf16.xpose.msra.mxu0 0
          %1378 = vmatprep.subr.bf16.mxu0 0
          %1379 = vmatpush1.bf16.xpose.msra.mxu0 0
          %1380 = vmatprep.subr.bf16.mxu0 0
          %1381 = vmatpush1.bf16.xpose.msra.mxu0 0
          %1382 = vmatprep.subr.bf16.mxu0 0
          %1383 = vmatpush1.bf16.xpose.msra.mxu0 0
          %1384 = vmatprep.subr.bf16.mxu0 0
          %1385 = vmatpush1.bf16.xpose.msra.mxu0 0
          %1386 = vmatprep.subr.bf16.mxu0 0
          %1387 = vmatpush1.bf16.xpose.msra.mxu0 0
          %1388 = vmatprep.subr.bf16.mxu0 0
          %1389 = vmatpush1.bf16.xpose.msra.mxu0 0
          %1390 = vmatprep.subr.bf16.mxu0 0
          %1391 = vmatpush1.bf16.xpose.msra.mxu0 0
          %1392 = vmatprep.subr.bf16.mxu0 0
          %1393 = vmatpush1.bf16.xpose.msra.mxu0 0
          %1394 = vmatprep.subr.bf16.mxu0 0
          %1395 = vmatpush1.bf16.xpose.msra.mxu0 0
          %1396 = vmatprep.subr.bf16.mxu0 0
          %1397 = vmatpush1.bf16.xpose.msra.mxu0 0
          %1398 = vmatprep.mubr.bf16.mxu0 0
          %1399 = vmatmul.mubr.bf16.gmra.mrb[0].mxu0 %v1361
          %v1400 = vpop.f32.mrb[0].mxu0
          %v1401 = vadd.f32 0.0, %v1400
          %v1402 = vpop.f32.mrb[0].mxu0
          %v1403 = vpop.f32.mrb[0].mxu0
          %v1404 = vpop.f32.mrb[0].mxu0
          %1405 = vdwg.mxu0
          %v1406 = vmul.f32 %v1263, 0.35355338
          %v1407 = vmul.f32 %v1309, 0.35355338
          %v1408 = vmul.f32 %v1355, 0.35355338
          %v1409 = vmul.f32 %v1401, 0.35355338
          %v1410 = vlaneseq
          %v1411 = vand.u32 %v1410, 127
          %v1412 = vstv %s1206
          %v1413 = vadd.s32 %v1412, %v1411
          %vm1414 = vcmp.gt.s32.totalorder %v1413, %v1186
          %v1415 = vsel %vm1414, 1, 0
          %vm1416 = vcmp.eq.s32.totalorder %v1415, 1
          %v1417 = vsel %vm1416, -1e+30, %v1406
          %v1418 = vsel %vm1416, -1e+30, %v1407
          %v1419 = vsel %vm1416, -1e+30, %v1408
          %v1420 = vsel %vm1416, -1e+30, %v1409
          %v1421 = vsel %vm1221, %v1417, -inf
          %1422 = vmax.xlane.f32.xlu0 %v1421
          %v1423 = vpop.xlane.xlu0 %1422
          %v1424 = vsel %vm1221, %v1418, -inf
          %1425 = vmax.xlane.f32.xlu0 %v1424
          %v1426 = vpop.xlane.xlu0 %1425
          %v1427 = vsel %vm1221, %v1419, -inf
          %1428 = vmax.xlane.f32.xlu0 %v1427
          %v1429 = vpop.xlane.xlu0 %1428
          %v1430 = vsel %vm1221, %v1420, -inf
          %1431 = vmax.xlane.f32.xlu0 %v1430
          %v1432 = vpop.xlane.xlu0 %1431
          %v1433 = vmax.f32 %v1194, %v1423
          %v1434 = vmax.f32 %v1195, %v1426
          %v1435 = vmax.f32 %v1196, %v1429
          %v1436 = vmax.f32 %v1197, %v1432
          %v1437 = vsub.f32 %v1194, %v1433
          %v1438 = vsub.f32 %v1195, %v1434
          %v1439 = vsub.f32 %v1196, %v1435
          %v1440 = vsub.f32 %v1197, %v1436
          %v1441 = vmul.f32 %v1437, 1.442695
          %v1442 = vpow.pop %v1441
          %v1443 = vmul.f32 %v1438, 1.442695
          %v1444 = vpow.pop %v1443
          %v1445 = vmul.f32 %v1439, 1.442695
          %v1446 = vpow.pop %v1445
          %v1447 = vmul.f32 %v1440, 1.442695
          %v1448 = vpow.pop %v1447
          %v1449 = vsub.f32 %v1417, %v1433
          %v1450 = vsub.f32 %v1418, %v1434
          %v1451 = vsub.f32 %v1419, %v1435
          %v1452 = vsub.f32 %v1420, %v1436
          %v1453 = vmul.f32 %v1449, 1.442695
          %v1454 = vpow.pop %v1453
          %v1455 = vmul.f32 %v1450, 1.442695
          %v1456 = vpow.pop %v1455
          %v1457 = vmul.f32 %v1451, 1.442695
          %v1458 = vpow.pop %v1457
          %v1459 = vmul.f32 %v1452, 1.442695
          %v1460 = vpow.pop %v1459
          %v1461 = vmul.f32 %v1442, %v1198
          %v1462 = vmul.f32 %v1444, %v1199
          %v1463 = vmul.f32 %v1446, %v1200
          %v1464 = vmul.f32 %v1448, %v1201
          %v1465 = vsel %vm1221, %v1454, 0.0
          %1466 = vadd.xlane.f32.xlu0 %v1465
          %v1467 = vpop.xlane.xlu0 %1466
          %v1468 = vsel %vm1221, %v1456, 0.0
          %1469 = vadd.xlane.f32.xlu0 %v1468
          %v1470 = vpop.xlane.xlu0 %1469
          %v1471 = vsel %vm1221, %v1458, 0.0
          %1472 = vadd.xlane.f32.xlu0 %v1471
          %v1473 = vpop.xlane.xlu0 %1472
          %v1474 = vsel %vm1221, %v1460, 0.0
          %1475 = vadd.xlane.f32.xlu0 %v1474
          %v1476 = vpop.xlane.xlu0 %1475
          %v1477 = vadd.f32 %v1461, %v1467
          %v1478 = vadd.f32 %v1462, %v1470
          %v1479 = vadd.f32 %v1463, %v1473
          %v1480 = vadd.f32 %v1464, %v1476
          %v1481 = vmul.f32 %v1442, %v1202
          %v1482 = vmul.f32 %v1444, %v1203
          %v1483 = vmul.f32 %v1446, %v1204
          %v1484 = vmul.f32 %v1448, %v1205
          %v1485 = vpack.c.bf16 %v1454, %v1454
          %v1486 = vpack.c.bf16 %v1456, %v1456
          %v1487 = vpack.c.bf16 %v1458, %v1458
          %v1488 = vpack.c.bf16 %v1460, %v1460
          %v1490 = vsel %vm1221, %v1485, 0
          %vm1492 = vcmask 1043456
          %v1494 = vsel %vm1492, %v1217, 0
          %1496 = vmatprep.subr.bf16.mxu0 0
          %1497 = vmatpush1.bf16.msra.mxu0 %v1494
          %1498 = vmatprep.subr.bf16.mxu0 0
          %1499 = vmatpush1.bf16.msra.mxu0 0
          %1500 = vmatprep.subr.bf16.mxu0 0
          %1501 = vmatpush1.bf16.msra.mxu0 0
          %1502 = vmatprep.subr.bf16.mxu0 0
          %1503 = vmatpush1.bf16.msra.mxu0 0
          %1504 = vmatprep.subr.bf16.mxu0 0
          %1505 = vmatpush1.bf16.msra.mxu0 0
          %1506 = vmatprep.subr.bf16.mxu0 0
          %1507 = vmatpush1.bf16.msra.mxu0 0
          %1508 = vmatprep.subr.bf16.mxu0 0
          %1509 = vmatpush1.bf16.msra.mxu0 0
          %1510 = vmatprep.subr.bf16.mxu0 0
          %1511 = vmatpush1.bf16.msra.mxu0 0
          %1512 = vmatprep.subr.bf16.mxu0 0
          %1513 = vmatpush1.bf16.msra.mxu0 0
          %1514 = vmatprep.subr.bf16.mxu0 0
          %1515 = vmatpush1.bf16.msra.mxu0 0
          %1516 = vmatprep.subr.bf16.mxu0 0
          %1517 = vmatpush1.bf16.msra.mxu0 0
          %1518 = vmatprep.subr.bf16.mxu0 0
          %1519 = vmatpush1.bf16.msra.mxu0 0
          %1520 = vmatprep.subr.bf16.mxu0 0
          %1521 = vmatpush1.bf16.msra.mxu0 0
          %1522 = vmatprep.subr.bf16.mxu0 0
          %1523 = vmatpush1.bf16.msra.mxu0 0
          %1524 = vmatprep.subr.bf16.mxu0 0
          %1525 = vmatpush1.bf16.msra.mxu0 0
          %1526 = vmatprep.subr.bf16.mxu0 0
          %1527 = vmatpush1.bf16.msra.mxu0 0
          %1528 = vmatprep.mubr.bf16.mxu0 0
          %1529 = vmatmul.mubr.bf16.gmra.mrb[0].mxu0 %v1490
          %v1530 = vpop.f32.mrb[0].mxu0
          %v1531 = vadd.f32 0.0, %v1530
          %v1532 = vpop.f32.mrb[0].mxu0
          %v1533 = vpop.f32.mrb[0].mxu0
          %v1534 = vpop.f32.mrb[0].mxu0
          %1535 = vdwg.mxu0
          %v1537 = vsel %vm1221, %v1486, 0
          %v1540 = vsel %vm1492, %v1218, 0
          %1542 = vmatprep.subr.bf16.mxu0 0
          %1543 = vmatpush1.bf16.msra.mxu0 %v1540
          %1544 = vmatprep.subr.bf16.mxu0 0
          %1545 = vmatpush1.bf16.msra.mxu0 0
          %1546 = vmatprep.subr.bf16.mxu0 0
          %1547 = vmatpush1.bf16.msra.mxu0 0
          %1548 = vmatprep.subr.bf16.mxu0 0
          %1549 = vmatpush1.bf16.msra.mxu0 0
          %1550 = vmatprep.subr.bf16.mxu0 0
          %1551 = vmatpush1.bf16.msra.mxu0 0
          %1552 = vmatprep.subr.bf16.mxu0 0
          %1553 = vmatpush1.bf16.msra.mxu0 0
          %1554 = vmatprep.subr.bf16.mxu0 0
          %1555 = vmatpush1.bf16.msra.mxu0 0
          %1556 = vmatprep.subr.bf16.mxu0 0
          %1557 = vmatpush1.bf16.msra.mxu0 0
          %1558 = vmatprep.subr.bf16.mxu0 0
          %1559 = vmatpush1.bf16.msra.mxu0 0
          %1560 = vmatprep.subr.bf16.mxu0 0
          %1561 = vmatpush1.bf16.msra.mxu0 0
          %1562 = vmatprep.subr.bf16.mxu0 0
          %1563 = vmatpush1.bf16.msra.mxu0 0
          %1564 = vmatprep.subr.bf16.mxu0 0
          %1565 = vmatpush1.bf16.msra.mxu0 0
          %1566 = vmatprep.subr.bf16.mxu0 0
          %1567 = vmatpush1.bf16.msra.mxu0 0
          %1568 = vmatprep.subr.bf16.mxu0 0
          %1569 = vmatpush1.bf16.msra.mxu0 0
          %1570 = vmatprep.subr.bf16.mxu0 0
          %1571 = vmatpush1.bf16.msra.mxu0 0
          %1572 = vmatprep.subr.bf16.mxu0 0
          %1573 = vmatpush1.bf16.msra.mxu0 0
          %1574 = vmatprep.mubr.bf16.mxu0 0
          %1575 = vmatmul.mubr.bf16.gmra.mrb[0].mxu0 %v1537
          %v1576 = vpop.f32.mrb[0].mxu0
          %v1577 = vadd.f32 0.0, %v1576
          %v1578 = vpop.f32.mrb[0].mxu0
          %v1579 = vpop.f32.mrb[0].mxu0
          %v1580 = vpop.f32.mrb[0].mxu0
          %1581 = vdwg.mxu0
          %v1583 = vsel %vm1221, %v1487, 0
          %v1586 = vsel %vm1492, %v1219, 0
          %1588 = vmatprep.subr.bf16.mxu0 0
          %1589 = vmatpush1.bf16.msra.mxu0 %v1586
          %1590 = vmatprep.subr.bf16.mxu0 0
          %1591 = vmatpush1.bf16.msra.mxu0 0
          %1592 = vmatprep.subr.bf16.mxu0 0
          %1593 = vmatpush1.bf16.msra.mxu0 0
          %1594 = vmatprep.subr.bf16.mxu0 0
          %1595 = vmatpush1.bf16.msra.mxu0 0
          %1596 = vmatprep.subr.bf16.mxu0 0
          %1597 = vmatpush1.bf16.msra.mxu0 0
          %1598 = vmatprep.subr.bf16.mxu0 0
          %1599 = vmatpush1.bf16.msra.mxu0 0
          %1600 = vmatprep.subr.bf16.mxu0 0
          %1601 = vmatpush1.bf16.msra.mxu0 0
          %1602 = vmatprep.subr.bf16.mxu0 0
          %1603 = vmatpush1.bf16.msra.mxu0 0
          %1604 = vmatprep.subr.bf16.mxu0 0
          %1605 = vmatpush1.bf16.msra.mxu0 0
          %1606 = vmatprep.subr.bf16.mxu0 0
          %1607 = vmatpush1.bf16.msra.mxu0 0
          %1608 = vmatprep.subr.bf16.mxu0 0
          %1609 = vmatpush1.bf16.msra.mxu0 0
          %1610 = vmatprep.subr.bf16.mxu0 0
          %1611 = vmatpush1.bf16.msra.mxu0 0
          %1612 = vmatprep.subr.bf16.mxu0 0
          %1613 = vmatpush1.bf16.msra.mxu0 0
          %1614 = vmatprep.subr.bf16.mxu0 0
          %1615 = vmatpush1.bf16.msra.mxu0 0
          %1616 = vmatprep.subr.bf16.mxu0 0
          %1617 = vmatpush1.bf16.msra.mxu0 0
          %1618 = vmatprep.subr.bf16.mxu0 0
          %1619 = vmatpush1.bf16.msra.mxu0 0
          %1620 = vmatprep.mubr.bf16.mxu0 0
          %1621 = vmatmul.mubr.bf16.gmra.mrb[0].mxu0 %v1583
          %v1622 = vpop.f32.mrb[0].mxu0
          %v1623 = vadd.f32 0.0, %v1622
          %v1624 = vpop.f32.mrb[0].mxu0
          %v1625 = vpop.f32.mrb[0].mxu0
          %v1626 = vpop.f32.mrb[0].mxu0
          %1627 = vdwg.mxu0
          %v1629 = vsel %vm1221, %v1488, 0
          %v1632 = vsel %vm1492, %v1220, 0
          %1634 = vmatprep.subr.bf16.mxu0 0
          %1635 = vmatpush1.bf16.msra.mxu0 %v1632
          %1636 = vmatprep.subr.bf16.mxu0 0
          %1637 = vmatpush1.bf16.msra.mxu0 0
          %1638 = vmatprep.subr.bf16.mxu0 0
          %1639 = vmatpush1.bf16.msra.mxu0 0
          %1640 = vmatprep.subr.bf16.mxu0 0
          %1641 = vmatpush1.bf16.msra.mxu0 0
          %1642 = vmatprep.subr.bf16.mxu0 0
          %1643 = vmatpush1.bf16.msra.mxu0 0
          %1644 = vmatprep.subr.bf16.mxu0 0
          %1645 = vmatpush1.bf16.msra.mxu0 0
          %1646 = vmatprep.subr.bf16.mxu0 0
          %1647 = vmatpush1.bf16.msra.mxu0 0
          %1648 = vmatprep.subr.bf16.mxu0 0
          %1649 = vmatpush1.bf16.msra.mxu0 0
          %1650 = vmatprep.subr.bf16.mxu0 0
          %1651 = vmatpush1.bf16.msra.mxu0 0
          %1652 = vmatprep.subr.bf16.mxu0 0
          %1653 = vmatpush1.bf16.msra.mxu0 0
          %1654 = vmatprep.subr.bf16.mxu0 0
          %1655 = vmatpush1.bf16.msra.mxu0 0
          %1656 = vmatprep.subr.bf16.mxu0 0
          %1657 = vmatpush1.bf16.msra.mxu0 0
          %1658 = vmatprep.subr.bf16.mxu0 0
          %1659 = vmatpush1.bf16.msra.mxu0 0
          %1660 = vmatprep.subr.bf16.mxu0 0
          %1661 = vmatpush1.bf16.msra.mxu0 0
          %1662 = vmatprep.subr.bf16.mxu0 0
          %1663 = vmatpush1.bf16.msra.mxu0 0
          %1664 = vmatprep.subr.bf16.mxu0 0
          %1665 = vmatpush1.bf16.msra.mxu0 0
          %1666 = vmatprep.mubr.bf16.mxu0 0
          %1667 = vmatmul.mubr.bf16.gmra.mrb[0].mxu0 %v1629
          %v1668 = vpop.f32.mrb[0].mxu0
          %v1669 = vadd.f32 0.0, %v1668
          %v1670 = vpop.f32.mrb[0].mxu0
          %v1671 = vpop.f32.mrb[0].mxu0
          %v1672 = vpop.f32.mrb[0].mxu0
          %1673 = vdwg.mxu0
          %v1674 = vadd.f32 %v1481, %v1531
          %v1675 = vadd.f32 %v1482, %v1577
          %v1676 = vadd.f32 %v1483, %v1623
          %v1677 = vadd.f32 %v1484, %v1669
        $region97: #{tpu_custom_call.1} parent=83 // loop_footer
          %s1191 = sadd.s32 %s1189, 1
        $region98: #{tpu_custom_call.1} parent=83 // loop_footer_branch
          %1188 = sbr.rel target = $region94
        $region99: #{tpu_custom_call.1} parent=83 // loop_exit
          _
        %v1678 = vrcp.pop %v1198
        %v1679 = vrcp.pop %v1199
        %v1680 = vrcp.pop %v1200
        %v1681 = vrcp.pop %v1201
        %v1682 = vmul.f32 %v1202, %v1678
        %v1683 = vmul.f32 %v1203, %v1679
        %v1684 = vmul.f32 %v1204, %v1680
        %v1685 = vmul.f32 %v1205, %v1681
        %v1686 = vcombine.low %v1682, %v1684
        %v1687 = vcombine.high %v1682, %v1684
        %v1689 = vunpack.c.l.s4 1983009808
        %v1690 = vunpack.c.0.s8 %v1689
        %v1691 = vlaneseq
        %v1692 = vshrl.u32 %v1691, 7
        %v1693 = vsub.s32 %v1690, %v1692
        %v1694 = vrot.slane %v1686, %v1693
        %v1696 = vunpack.c.l.s4 1983009808
        %v1697 = vunpack.c.0.s8 %v1696
        %v1698 = vlaneseq
        %v1699 = vshrl.u32 %v1698, 7
        %v1700 = vsub.s32 %v1697, %v1699
        %v1701 = vrot.slane %v1687, %v1700
        %v1702 = vcombine.low %v1683, %v1685
        %v1703 = vcombine.high %v1683, %v1685
        %v1705 = vunpack.c.l.s4 1983009808
        %v1706 = vunpack.c.0.s8 %v1705
        %v1707 = vlaneseq
        %v1708 = vshrl.u32 %v1707, 7
        %v1709 = vsub.s32 %v1706, %v1708
        %v1710 = vrot.slane %v1702, %v1709
        %v1712 = vunpack.c.l.s4 1983009808
        %v1713 = vunpack.c.0.s8 %v1712
        %v1714 = vlaneseq
        %v1715 = vshrl.u32 %v1714, 7
        %v1716 = vsub.s32 %v1713, %v1715
        %v1717 = vrot.slane %v1703, %v1716
        %v1718 = vcombine.low %v1694, %v1710
        %v1719 = vcombine.high %v1694, %v1710
        %v1721 = vunpack.c.l.s4 1934713408
        %v1722 = vunpack.c.0.s8 %v1721
        %v1723 = vlaneseq
        %v1724 = vshrl.u32 %v1723, 7
        %v1725 = vsub.s32 %v1722, %v1724
        %v1726 = vrot.slane %v1718, %v1725
        %v1728 = vunpack.c.l.s4 1934713408
        %v1729 = vunpack.c.0.s8 %v1728
        %v1730 = vlaneseq
        %v1731 = vshrl.u32 %v1730, 7
        %v1732 = vsub.s32 %v1729, %v1731
        %v1733 = vrot.slane %v1719, %v1732
        %v1734 = vcombine.low %v1701, %v1717
        %v1735 = vcombine.high %v1701, %v1717
        %v1737 = vunpack.c.l.s4 1934713408
        %v1738 = vunpack.c.0.s8 %v1737
        %v1739 = vlaneseq
        %v1740 = vshrl.u32 %v1739, 7
        %v1741 = vsub.s32 %v1738, %v1740
        %v1742 = vrot.slane %v1734, %v1741
        %v1744 = vunpack.c.l.s4 1934713408
        %v1745 = vunpack.c.0.s8 %v1744
        %v1746 = vlaneseq
        %v1747 = vshrl.u32 %v1746, 7
        %v1748 = vsub.s32 %v1745, %v1747
        %v1749 = vrot.slane %v1735, %v1748
        %v1750 = vcombine.high %v1726, 0.0
        %v1751 = vcombine.high %v1733, 0.0
        %v1752 = vcombine.high %v1742, 0.0
        %v1753 = vcombine.high %v1749, 0.0
        %v1754 = vcombine.low %v1726, %v1733
        %v1756 = vunpack.c.l.s4 1983009808
        %v1757 = vunpack.c.0.s8 %v1756
        %v1758 = vlaneseq
        %v1759 = vshrl.u32 %v1758, 7
        %v1760 = vsub.s32 %v1757, %v1759
        %v1761 = vrot.slane %v1754, %v1760
        %v1762 = vcombine.low %v1750, %v1751
        %v1764 = vunpack.c.l.s4 1983009808
        %v1765 = vunpack.c.0.s8 %v1764
        %v1766 = vlaneseq
        %v1767 = vshrl.u32 %v1766, 7
        %v1768 = vsub.s32 %v1765, %v1767
        %v1769 = vrot.slane %v1762, %v1768
        %v1770 = vcombine.low %v1742, %v1749
        %v1772 = vunpack.c.l.s4 1983009808
        %v1773 = vunpack.c.0.s8 %v1772
        %v1774 = vlaneseq
        %v1775 = vshrl.u32 %v1774, 7
        %v1776 = vsub.s32 %v1773, %v1775
        %v1777 = vrot.slane %v1770, %v1776
        %v1778 = vcombine.low %v1752, %v1753
        %v1780 = vunpack.c.l.s4 1983009808
        %v1781 = vunpack.c.0.s8 %v1780
        %v1782 = vlaneseq
        %v1783 = vshrl.u32 %v1782, 7
        %v1784 = vsub.s32 %v1781, %v1783
        %v1785 = vrot.slane %v1778, %v1784
        %v1786 = vcombine.low %v1761, %v1769
        %v1787 = vcombine.high %v1761, %v1769
        %v1789 = vunpack.c.l.s4 1934713408
        %v1790 = vunpack.c.0.s8 %v1789
        %v1791 = vlaneseq
        %v1792 = vshrl.u32 %v1791, 7
        %v1793 = vsub.s32 %v1790, %v1792
        %v1794 = vrot.slane %v1786, %v1793
        %v1796 = vunpack.c.l.s4 1934713408
        %v1797 = vunpack.c.0.s8 %v1796
        %v1798 = vlaneseq
        %v1799 = vshrl.u32 %v1798, 7
        %v1800 = vsub.s32 %v1797, %v1799
        %v1801 = vrot.slane %v1787, %v1800
        %v1802 = vcombine.low %v1777, %v1785
        %v1803 = vcombine.high %v1777, %v1785
        %v1805 = vunpack.c.l.s4 1934713408
        %v1806 = vunpack.c.0.s8 %v1805
        %v1807 = vlaneseq
        %v1808 = vshrl.u32 %v1807, 7
        %v1809 = vsub.s32 %v1806, %v1808
        %v1810 = vrot.slane %v1802, %v1809
        %v1812 = vunpack.c.l.s4 1934713408
        %v1813 = vunpack.c.0.s8 %v1812
        %v1814 = vlaneseq
        %v1815 = vshrl.u32 %v1814, 7
        %v1816 = vsub.s32 %v1813, %v1815
        %v1817 = vrot.slane %v1803, %v1816
        %v1818 = vcombine.low %v1794, %v1810
        %v1819 = vcombine.high %v1794, %v1810
        %v1820 = vcombine.low %v1801, %v1817
        %v1821 = vcombine.high %v1801, %v1817
        %1823 = vrot.lane.b32.xlu0 %v1819, 8
        %v1824 = vpop.permute.xlu0 %1823
        %1827 = vrot.lane.b32.xlu0 %v1820, 16
        %v1828 = vpop.permute.xlu0 %1827
        %1831 = vrot.lane.b32.xlu0 %v1821, 24
        %v1832 = vpop.permute.xlu0 %1831
        %vm1834 = vcmask 64512
        %v1835 = vsel %vm1834, %v1818, %v1824
        %vm1836 = vcmask 130048
        %v1837 = vsel %vm1836, %v1835, %v1828
        %vm1838 = vcmask 195584
        %v1839 = vsel %vm1838, %v1837, %v1832
        %v1840 = vpack.c.bf16 %v1839, %v1839
        %v1841 = vld [vmem:[%s6] sm:$0xf]
        %v1842 = vld [vmem:[%s6 + $0x4] sm:$0xf]
        %v1843 = vld [vmem:[%s6 + $0x8] sm:$0xf]
        %v1844 = vld [vmem:[%s6 + $0xc] sm:$0xf]
        %v1845 = vld [vmem:[%s7] sm:$0x1]
        %v1847 = vlaneseq
        %v1848 = vshrl.u32 %v1847, 7
        %v1849 = vsub.s32 0, %v1848
        %v1850 = vrot.slane %v1845, %v1849
        %v1856 = vunpack.c.l.b16 %v1841
        %v1857 = vunpack.c.l.b16 %v1842
        %v1858 = vunpack.c.l.b16 %v1843
        %v1859 = vunpack.c.l.b16 %v1844
        %v1860 = vpack.c.b16 %v1857, %v1856
        %v1861 = vpack.c.b16 %v1859, %v1858
        %v1865 = vsel %vm989, %v1840, 0
        %1867 = vmatprep.subr.bf16.mxu0 0
        %1868 = vmatpush1.bf16.msra.mxu0 %v1860
        %1869 = vmatprep.subr.bf16.mxu0 0
        %1870 = vmatpush1.bf16.msra.mxu0 %v1861
        %1871 = vmatprep.subr.bf16.mxu0 0
        %1872 = vmatpush1.bf16.msra.mxu0 0
        %1873 = vmatprep.subr.bf16.mxu0 0
        %1874 = vmatpush1.bf16.msra.mxu0 0
        %1875 = vmatprep.subr.bf16.mxu0 0
        %1876 = vmatpush1.bf16.msra.mxu0 0
        %1877 = vmatprep.subr.bf16.mxu0 0
        %1878 = vmatpush1.bf16.msra.mxu0 0
        %1879 = vmatprep.subr.bf16.mxu0 0
        %1880 = vmatpush1.bf16.msra.mxu0 0
        %1881 = vmatprep.subr.bf16.mxu0 0
        %1882 = vmatpush1.bf16.msra.mxu0 0
        %1883 = vmatprep.subr.bf16.mxu0 0
        %1884 = vmatpush1.bf16.msra.mxu0 0
        %1885 = vmatprep.subr.bf16.mxu0 0
        %1886 = vmatpush1.bf16.msra.mxu0 0
        %1887 = vmatprep.subr.bf16.mxu0 0
        %1888 = vmatpush1.bf16.msra.mxu0 0
        %1889 = vmatprep.subr.bf16.mxu0 0
        %1890 = vmatpush1.bf16.msra.mxu0 0
        %1891 = vmatprep.subr.bf16.mxu0 0
        %1892 = vmatpush1.bf16.msra.mxu0 0
        %1893 = vmatprep.subr.bf16.mxu0 0
        %1894 = vmatpush1.bf16.msra.mxu0 0
        %1895 = vmatprep.subr.bf16.mxu0 0
        %1896 = vmatpush1.bf16.msra.mxu0 0
        %1897 = vmatprep.subr.bf16.mxu0 0
        %1898 = vmatpush1.bf16.msra.mxu0 0
        %1899 = vmatprep.mubr.bf16.mxu0 0
        %1900 = vmatmul.mubr.bf16.gmra.mrb[0].mxu0 %v1865
        %v1901 = vpop.f32.mrb[0].mxu0
        %v1902 = vadd.f32 %v1850, %v1901
        %v1903 = vpop.f32.mrb[0].mxu0
        %v1904 = vpop.f32.mrb[0].mxu0
        %v1905 = vpop.f32.mrb[0].mxu0
        %1906 = vdwg.mxu0
        %v1907 = vadd.f32 %v964, %v1902
        %v1908 = vld [vmem:[%s8] sm:$0x1]
        %v1909 = vld [vmem:[%s9] sm:$0x1]
        %v1910 = vsel %vm989, %v1907, 0.0
        %1911 = vadd.xlane.f32.xlu0 %v1910
        %v1912 = vpop.xlane.xlu0 %1911
        %v1913 = vrcp.pop 32.0
        %v1914 = vmul.f32 %v1912, %v1913
        %v1915 = vsub.f32 %v1907, %v1914
        %v1916 = vmul.f32 %v1915, %v1915
        %v1917 = vsel %vm989, %v1916, 0.0
        %1918 = vadd.xlane.f32.xlu0 %v1917
        %v1919 = vpop.xlane.xlu0 %1918
        %v1920 = vmul.f32 %v1919, %v1913
        %v1921 = vadd.f32 %v1920, 1e-05
        %v1922 = vrsqrt.pop %v1921
        %v1923 = vmul.f32 %v1915, %v1922
        %v1925 = vlaneseq
        %v1926 = vshrl.u32 %v1925, 7
        %v1927 = vsub.s32 0, %v1926
        %v1928 = vrot.slane %v1908, %v1927
        %v1930 = vmul.f32 %v1923, %v1928
        %v1932 = vlaneseq
        %v1933 = vshrl.u32 %v1932, 7
        %v1934 = vsub.s32 0, %v1933
        %v1935 = vrot.slane %v1909, %v1934
        %v1937 = vadd.f32 %v1930, %v1935
        %v1938 = vpack.c.bf16 %v1937, %v1937
        %v1939 = vld [vmem:[%s10] sm:$0xf]
        %v1940 = vld [vmem:[%s10 + $0x4] sm:$0xf]
        %v1941 = vld [vmem:[%s10 + $0x8] sm:$0xf]
        %v1942 = vld [vmem:[%s10 + $0xc] sm:$0xf]
        %v1943 = vld [vmem:[%s11] sm:$0x1]
        %v1945 = vlaneseq
        %v1946 = vshrl.u32 %v1945, 7
        %v1947 = vsub.s32 0, %v1946
        %v1948 = vrot.slane %v1943, %v1947
        %v1954 = vunpack.c.l.b16 %v1939
        %v1955 = vunpack.c.l.b16 %v1940
        %v1956 = vunpack.c.l.b16 %v1941
        %v1957 = vunpack.c.l.b16 %v1942
        %v1958 = vpack.c.b16 %v1955, %v1954
        %v1959 = vpack.c.b16 %v1957, %v1956
        %v1963 = vsel %vm989, %v1938, 0
        %1965 = vmatprep.subr.bf16.mxu0 0
        %1966 = vmatpush1.bf16.msra.mxu0 %v1958
        %1967 = vmatprep.subr.bf16.mxu0 0
        %1968 = vmatpush1.bf16.msra.mxu0 %v1959
        %1969 = vmatprep.subr.bf16.mxu0 0
        %1970 = vmatpush1.bf16.msra.mxu0 0
        %1971 = vmatprep.subr.bf16.mxu0 0
        %1972 = vmatpush1.bf16.msra.mxu0 0
        %1973 = vmatprep.subr.bf16.mxu0 0
        %1974 = vmatpush1.bf16.msra.mxu0 0
        %1975 = vmatprep.subr.bf16.mxu0 0
        %1976 = vmatpush1.bf16.msra.mxu0 0
        %1977 = vmatprep.subr.bf16.mxu0 0
        %1978 = vmatpush1.bf16.msra.mxu0 0
        %1979 = vmatprep.subr.bf16.mxu0 0
        %1980 = vmatpush1.bf16.msra.mxu0 0
        %1981 = vmatprep.subr.bf16.mxu0 0
        %1982 = vmatpush1.bf16.msra.mxu0 0
        %1983 = vmatprep.subr.bf16.mxu0 0
        %1984 = vmatpush1.bf16.msra.mxu0 0
        %1985 = vmatprep.subr.bf16.mxu0 0
        %1986 = vmatpush1.bf16.msra.mxu0 0
        %1987 = vmatprep.subr.bf16.mxu0 0
        %1988 = vmatpush1.bf16.msra.mxu0 0
        %1989 = vmatprep.subr.bf16.mxu0 0
        %1990 = vmatpush1.bf16.msra.mxu0 0
        %1991 = vmatprep.subr.bf16.mxu0 0
        %1992 = vmatpush1.bf16.msra.mxu0 0
        %1993 = vmatprep.subr.bf16.mxu0 0
        %1994 = vmatpush1.bf16.msra.mxu0 0
        %1995 = vmatprep.subr.bf16.mxu0 0
        %1996 = vmatpush1.bf16.msra.mxu0 0
        %1997 = vmatprep.mubr.bf16.mxu0 0
        %1998 = vmatmul.mubr.bf16.gmra.mrb[0].mxu0 %v1963
        %v1999 = vpop.f32.mrb[0].mxu0
        %v2000 = vadd.f32 %v1948, %v1999
        %v2001 = vpop.f32.mrb[0].mxu0
        %v2002 = vpop.f32.mrb[0].mxu0
        %v2003 = vpop.f32.mrb[0].mxu0
        %2004 = vdwg.mxu0
        %v2005 = vmul.f32 %v2000, 0.5
        %v2006 = vrcp.pop 1.4142135
        %v2007 = vmul.f32 %v2000, %v2006
        %v2008 = verf.f32.pop %v2007
        %v2009 = vadd.f32 %v2008, 1.0
        %v2010 = vmul.f32 %v2005, %v2009
        %v2011 = vpack.c.bf16 %v2010, %v2010
        %v2012 = vld [vmem:[%s12] sm:$0xf]
        %v2013 = vld [vmem:[%s12 + $0x4] sm:$0xf]
        %v2014 = vld [vmem:[%s12 + $0x8] sm:$0xf]
        %v2015 = vld [vmem:[%s12 + $0xc] sm:$0xf]
        %v2016 = vld [vmem:[%s12 + $0x10] sm:$0xf]
        %v2017 = vld [vmem:[%s12 + $0x14] sm:$0xf]
        %v2018 = vld [vmem:[%s12 + $0x18] sm:$0xf]
        %v2019 = vld [vmem:[%s12 + $0x1c] sm:$0xf]
        %v2020 = vld [vmem:[%s12 + $0x20] sm:$0xf]
        %v2021 = vld [vmem:[%s12 + $0x24] sm:$0xf]
        %v2022 = vld [vmem:[%s12 + $0x28] sm:$0xf]
        %v2023 = vld [vmem:[%s12 + $0x2c] sm:$0xf]
        %v2024 = vld [vmem:[%s12 + $0x30] sm:$0xf]
        %v2025 = vld [vmem:[%s12 + $0x34] sm:$0xf]
        %v2026 = vld [vmem:[%s12 + $0x38] sm:$0xf]
        %v2027 = vld [vmem:[%s12 + $0x3c] sm:$0xf]
        %v2028 = vld [vmem:[%s13] sm:$0x1]
        %v2030 = vlaneseq
        %v2031 = vshrl.u32 %v2030, 7
        %v2032 = vsub.s32 0, %v2031
        %v2033 = vrot.slane %v2028, %v2032
        %v2051 = vunpack.c.l.b16 %v2012
        %v2052 = vunpack.c.l.b16 %v2013
        %v2053 = vunpack.c.l.b16 %v2014
        %v2054 = vunpack.c.l.b16 %v2015
        %v2055 = vunpack.c.l.b16 %v2016
        %v2056 = vunpack.c.l.b16 %v2017
        %v2057 = vunpack.c.l.b16 %v2018
        %v2058 = vunpack.c.l.b16 %v2019
        %v2059 = vunpack.c.l.b16 %v2020
        %v2060 = vunpack.c.l.b16 %v2021
        %v2061 = vunpack.c.l.b16 %v2022
        %v2062 = vunpack.c.l.b16 %v2023
        %v2063 = vunpack.c.l.b16 %v2024
        %v2064 = vunpack.c.l.b16 %v2025
        %v2065 = vunpack.c.l.b16 %v2026
        %v2066 = vunpack.c.l.b16 %v2027
        %v2067 = vpack.c.b16 %v2052, %v2051
        %v2068 = vpack.c.b16 %v2054, %v2053
        %v2069 = vpack.c.b16 %v2056, %v2055
        %v2070 = vpack.c.b16 %v2058, %v2057
        %v2071 = vpack.c.b16 %v2060, %v2059
        %v2072 = vpack.c.b16 %v2062, %v2061
        %v2073 = vpack.c.b16 %v2064, %v2063
        %v2074 = vpack.c.b16 %v2066, %v2065
        %2083 = vmatprep.subr.bf16.mxu0 0
        %2084 = vmatpush1.bf16.msra.mxu0 %v2067
        %2085 = vmatprep.subr.bf16.mxu0 0
        %2086 = vmatpush1.bf16.msra.mxu0 %v2068
        %2087 = vmatprep.subr.bf16.mxu0 0
        %2088 = vmatpush1.bf16.msra.mxu0 %v2069
        %2089 = vmatprep.subr.bf16.mxu0 0
        %2090 = vmatpush1.bf16.msra.mxu0 %v2070
        %2091 = vmatprep.subr.bf16.mxu0 0
        %2092 = vmatpush1.bf16.msra.mxu0 %v2071
        %2093 = vmatprep.subr.bf16.mxu0 0
        %2094 = vmatpush1.bf16.msra.mxu0 %v2072
        %2095 = vmatprep.subr.bf16.mxu0 0
        %2096 = vmatpush1.bf16.msra.mxu0 %v2073
        %2097 = vmatprep.subr.bf16.mxu0 0
        %2098 = vmatpush1.bf16.msra.mxu0 %v2074
        %2099 = vmatprep.subr.bf16.mxu0 0
        %2100 = vmatpush1.bf16.msra.mxu0 0
        %2101 = vmatprep.subr.bf16.mxu0 0
        %2102 = vmatpush1.bf16.msra.mxu0 0
        %2103 = vmatprep.subr.bf16.mxu0 0
        %2104 = vmatpush1.bf16.msra.mxu0 0
        %2105 = vmatprep.subr.bf16.mxu0 0
        %2106 = vmatpush1.bf16.msra.mxu0 0
        %2107 = vmatprep.subr.bf16.mxu0 0
        %2108 = vmatpush1.bf16.msra.mxu0 0
        %2109 = vmatprep.subr.bf16.mxu0 0
        %2110 = vmatpush1.bf16.msra.mxu0 0
        %2111 = vmatprep.subr.bf16.mxu0 0
        %2112 = vmatpush1.bf16.msra.mxu0 0
        %2113 = vmatprep.subr.bf16.mxu0 0
        %2114 = vmatpush1.bf16.msra.mxu0 0
        %2115 = vmatprep.mubr.bf16.mxu0 0
        %2116 = vmatmul.mubr.bf16.gmra.mrb[0].mxu0 %v2011
        %v2117 = vpop.f32.mrb[0].mxu0
        %v2118 = vadd.f32 %v2033, %v2117
        %v2119 = vpop.f32.mrb[0].mxu0
        %v2120 = vpop.f32.mrb[0].mxu0
        %v2121 = vpop.f32.mrb[0].mxu0
        %2122 = vdwg.mxu0
        %v2123 = vadd.f32 %v1937, %v2118
        %v2124 = vld [vmem:[%s14] sm:$0x1]
        %v2125 = vld [vmem:[%s15] sm:$0x1]
        %v2126 = vsel %vm989, %v2123, 0.0
        %2127 = vadd.xlane.f32.xlu0 %v2126
        %v2128 = vpop.xlane.xlu0 %2127
        %v2129 = vmul.f32 %v2128, %v1913
        %v2130 = vsub.f32 %v2123, %v2129
        %v2131 = vmul.f32 %v2130, %v2130
        %v2132 = vsel %vm989, %v2131, 0.0
        %2133 = vadd.xlane.f32.xlu0 %v2132
        %v2134 = vpop.xlane.xlu0 %2133
        %v2135 = vmul.f32 %v2134, %v1913
        %v2136 = vadd.f32 %v2135, 1e-05
        %v2137 = vrsqrt.pop %v2136
        %v2138 = vmul.f32 %v2130, %v2137
        %v2140 = vlaneseq
        %v2141 = vshrl.u32 %v2140, 7
        %v2142 = vsub.s32 0, %v2141
        %v2143 = vrot.slane %v2124, %v2142
        %v2145 = vmul.f32 %v2138, %v2143
        %v2147 = vlaneseq
        %v2148 = vshrl.u32 %v2147, 7
        %v2149 = vsub.s32 0, %v2148
        %v2150 = vrot.slane %v2125, %v2149
        %v2152 = vadd.f32 %v2145, %v2150
        %2153 = vst.msk [vmem:[%s571] sm:$0xff] %vm989, %v2152
        %s2154 = sand.u32 %s403, 1
        %s2155 = scalar_lea.sflag [#allocation6], %s2154
        %s2156 = sand.u32 %s403, 1
        %s2157 = smul.addr %s2156, 8
        %s2158 = scalar_lea.vmem [#allocation7], %s2157
        // Predicated region
        $region100: #{tpu_custom_call.1} parent=83 // pred_check
          %p2159 = pneg %p413
        $region101: #{tpu_custom_call.1} parent=83 // pred_check_branch
          %2161 = sbr.rel (%p2159) target = $region103
        $region102: #{tpu_custom_call.1} parent=83 // pred_region
          %s2163 = ssub.s32 128, 128
          %2164 = vsyncadd %s2155, %s2163
          %s2165 = sadd.s32 %s38, %s37
          %s2166 = smul.addr %s2165, 128
          %s2167 = scalar_lea.hbm %s16, %s2166
          %s2169 = sshll.u32 %s2158, 4
          %s2170 = int_to_ptr.vmem [resolvable:$true] %s2169
          %2172 = dma.vmem_to_hbm [thread:$0]  %s2170, 128, %s2167, %s2155
        $region103: #{tpu_custom_call.1} parent=83 // pred_fallthru
          _
      $region84: #{tpu_custom_call.1} parent=5 // pred_fallthru
        _
      %p2173 = scmp.le.s32.totalorder 2, %s28
      // Predicated region
      $region104: #{tpu_custom_call.1} parent=5 // pred_check
        %p2174 = pneg %p2173
      $region105: #{tpu_custom_call.1} parent=5 // pred_check_branch
        %2176 = sbr.rel (%p2174) target = $region107
      $region106: #{tpu_custom_call.1} parent=5 // pred_region
        %s2177 = ssub.s32 %s28, 2
        // Predicated region
        $region108: #{tpu_custom_call.1} parent=106 // pred_check
          %p2178 = pneg %p419
        $region109: #{tpu_custom_call.1} parent=106 // pred_check_branch
          %2180 = sbr.rel (%p2178) target = $region111
        $region110: #{tpu_custom_call.1} parent=106 // pred_region
          %s2181 = sand.u32 %s404, 1
          %s2182 = scalar_lea.sflag [#allocation6], %s2181
          %s2183 = sand.u32 %s404, 1
          %s2184 = smul.addr %s2183, 8
          %s2185 = scalar_lea.vmem [#allocation7], %s2184
          %2186 = dma.done %s2182, 128
        $region111: #{tpu_custom_call.1} parent=106 // pred_fallthru
          _
      $region107: #{tpu_custom_call.1} parent=5 // pred_fallthru
        _
    $region6: #{tpu_custom_call.1} parent=1 // loop_footer
      %s32 = sadd.s32 1, %s28
    $region7: #{tpu_custom_call.1} parent=1 // loop_footer_branch
      %27 = sbr.rel target = $region3
    $region8: #{tpu_custom_call.1} parent=1 // loop_exit
      _
    %2187 = vsyncpa [#allocation5], 1
    %s2188 = scalar_lea.sflag [#allocation5], 1
    %2189 = vsyncpa %s2188, 1
    %2190 = vsyncpa [#allocation6], 1
    %s2191 = scalar_lea.sflag [#allocation6], 1
    %2192 = vsyncpa %s2191, 1

// kernel: tpu_custom_call.1
$region0: #{tpu_custom_call.1}
  #allocation0 [shape = 'u32[]', space=smem, size = 0x4, offset = 0x4, fixed_abs, tag = 'smem constant byte address 0x4 - core index']
  #allocation1 [shape = 'u32[144,128]{1,0:T(1,128)}', space=vmem, size = 0x12000, scoped, tag = 'internal scratch']
  #allocation2 [shape = 'bf16[4,8,8]{2,1,0:T(8,128)(2,1)}', space=vmem, size = 0x2000, scoped, tag = 'scratch operand']
  #allocation3 [shape = 'bf16[4,8,8]{2,1,0:T(8,128)(2,1)}', space=vmem, size = 0x2000, scoped, tag = 'scratch operand']
  %s0 = inlined_call_operand.vmem [shape: f32[2,8,32], index: 0, kind: input, shape index: {}]
  %s1 = inlined_call_operand.hbm [shape: bf16[2,8,32], index: 1, kind: input, shape index: {}]
  %s2 = inlined_call_operand.vmem [shape: bf16[32,32], index: 2, kind: input, shape index: {}]
  %s3 = inlined_call_operand.vmem [shape: f32[1,32], index: 3, kind: input, shape index: {}]
  %s4 = inlined_call_operand.vmem [shape: bf16[32,64], index: 4, kind: input, shape index: {}]
  %s5 = inlined_call_operand.vmem [shape: f32[1,64], index: 5, kind: input, shape index: {}]
  %s6 = inlined_call_operand.vmem [shape: bf16[32,32], index: 6, kind: input, shape index: {}]
  %s7 = inlined_call_operand.vmem [shape: f32[1,32], index: 7, kind: input, shape index: {}]
  %s8 = inlined_call_operand.vmem [shape: f32[1,32], index: 8, kind: input, shape index: {}]
  %s9 = inlined_call_operand.vmem [shape: f32[1,32], index: 9, kind: input, shape index: {}]
  %s10 = inlined_call_operand.vmem [shape: bf16[32,128], index: 10, kind: input, shape index: {}]
  %s11 = inlined_call_operand.vmem [shape: f32[1,128], index: 11, kind: input, shape index: {}]
  %s12 = inlined_call_operand.vmem [shape: bf16[128,32], index: 12, kind: input, shape index: {}]
  %s13 = inlined_call_operand.vmem [shape: f32[1,32], index: 13, kind: input, shape index: {}]
  %s14 = inlined_call_operand.vmem [shape: f32[1,32], index: 14, kind: input, shape index: {}]
  %s15 = inlined_call_operand.vmem [shape: f32[1,32], index: 15, kind: input, shape index: {}]
  %s16 = inlined_call_operand.hbm [shape: f32[2,8,32], index: 16, kind: output, shape index: {}]
  %s17 = sld [smem:[#allocation0]]
  $region112: #{tpu_custom_call.1} parent=0
    _
  %s19 = ssub.s32 1, %s17
  %s20 = scalar_select 0, %s19, %s17
  $region1: #{tpu_custom_call.1} parent=0
    #allocation4 [shape = 'u8[4096]{0}', space=vmem, size = 0x1000, scoped, tag = 'input window, operand 1']
    #allocation5 [shape = 's32[2]{0}', space=sflag, size = 0x8, scoped, tag = 'scoped memory for tpu_custom_call.1']
    #allocation6 [shape = 's32[2]{0}', space=sflag, size = 0x8, scoped, tag = 'scoped memory for tpu_custom_call.1']
    #allocation7 [shape = 'u8[8192]{0}', space=vmem, size = 0x2000, scoped, tag = 'output window, operand 0']
    %21 = vsyncpa [#allocation5], 0
    %s22 = scalar_lea.sflag [#allocation5], 1
    %23 = vsyncpa %s22, 0
    %24 = vsyncpa [#allocation6], 0
    %s25 = scalar_lea.sflag [#allocation6], 1
    %26 = vsyncpa %s25, 0
    loop: start=0, step=1, limit=4
    $region2: #{tpu_custom_call.1} parent=1 // loop_pre_header
      _
    $region3: #{tpu_custom_call.1} parent=1 // loop_header
      %s28 = sphi 0, %s32
      %p29 = scmp.ge.s32.totalorder %s28, 4
      %s35 = sphi 0, %s47
      %s36 = sphi 0, %s43
      %s37 = sphi 0, %s35
      %s38 = sphi 0, %s36
      %s39 = sphi 0, %s37
      %s40 = sphi 0, %s38
      %s52 = sphi 0, %s54
      %s55 = sphi 0, %s52
      %s56 = sphi 0, %s55
      %s72 = sphi 0, %s56
      %s78 = sphi 0, %s80
      %s81 = sphi 0, %s78
      %s82 = sphi 0, %s81
      %s98 = sphi 0, %s82
      %s102 = sphi 0, %s102
      %s104 = sphi 0, %s102
      %s105 = sphi 0, %s104
      %s119 = sphi 0, %s105
      %s123 = sphi 0, %s123
      %s125 = sphi 0, %s123
      %s126 = sphi 0, %s125
      %s140 = sphi 0, %s126
      %s144 = sphi 0, %s144
      %s146 = sphi 0, %s144
      %s147 = sphi 0, %s146
      %s161 = sphi 0, %s147
      %s165 = sphi 0, %s165
      %s167 = sphi 0, %s165
      %s168 = sphi 0, %s167
      %s182 = sphi 0, %s168
      %s186 = sphi 0, %s186
      %s188 = sphi 0, %s186
      %s189 = sphi 0, %s188
      %s203 = sphi 0, %s189
      %s207 = sphi 0, %s207
      %s209 = sphi 0, %s207
      %s210 = sphi 0, %s209
      %s224 = sphi 0, %s210
      %s228 = sphi 0, %s228
      %s230 = sphi 0, %s228
      %s231 = sphi 0, %s230
      %s245 = sphi 0, %s231
      %s249 = sphi 0, %s249
      %s251 = sphi 0, %s249
      %s252 = sphi 0, %s251
      %s266 = sphi 0, %s252
      %s270 = sphi 0, %s270
      %s272 = sphi 0, %s270
      %s273 = sphi 0, %s272
      %s287 = sphi 0, %s273
      %s291 = sphi 0, %s291
      %s293 = sphi 0, %s291
      %s294 = sphi 0, %s293
      %s308 = sphi 0, %s294
      %s312 = sphi 0, %s312
      %s314 = sphi 0, %s312
      %s315 = sphi 0, %s314
      %s329 = sphi 0, %s315
      %s333 = sphi 0, %s333
      %s335 = sphi 0, %s333
      %s336 = sphi 0, %s335
      %s350 = sphi 0, %s336
      %s354 = sphi 0, %s354
      %s356 = sphi 0, %s354
      %s357 = sphi 0, %s356
      %s371 = sphi 0, %s357
      %s375 = sphi 0, %s375
      %s377 = sphi 0, %s375
      %s378 = sphi 0, %s377
      %s392 = sphi 0, %s378
      %s400 = sphi 0, %s402
      %s403 = sphi 0, %s400
      %s404 = sphi 0, %s403
      %s420 = sphi 0, %s404
    $region4: #{tpu_custom_call.1} parent=1 // loop_header_branch
      %31 = sbr.rel (%p29) target = $region8
    $region5: #{tpu_custom_call.1} parent=1 // loop_body
      %s33 = ssub.s32 %s28, 1
      %s34 = ssub.s32 %s28, 2
      %s41 = sadd.s32 1, %s36
      %p42 = scmp.ge.s32.totalorder %s41, 1
      %s43 = scalar_select %p42, 0, %s41
      %s44 = sadd.s32 1, %s35
      %s45 = scalar_select %p42, %s44, %s35
      %p46 = scmp.ge.s32.totalorder %s45, 2
      %s47 = scalar_select %p46, 0, %s45
      %s48 = ssub.s32 %s35, %s47
      %s49 = ssub.s32 %s36, %s43
      %s50 = sor.u32 %s48, %s49
      %p51 = scmp.eq.s32.totalorder %s50, 0
      %s53 = sadd.s32 %s52, 1
      %s54 = scalar_select %p51, %s52, %s53
      %p57 = pneg %p51
      %p58 = scmp.eq.s32.totalorder %s28, 1
      %p59 = por %p57, %p58
      %p60 = scmp.ne.s32.totalorder %s52, %s55
      %p61 = scmp.eq.s32.totalorder %s28, 0
      %p62 = por %p60, %p61
      %p63 = scmp.ne.s32.totalorder %s52, %s55
      %p64 = scmp.eq.s32.totalorder %s33, 1
      %p65 = por %p63, %p64
      %p66 = scmp.ne.s32.totalorder %s55, %s56
      %p67 = scmp.eq.s32.totalorder %s33, 0
      %p68 = por %p66, %p67
      %p69 = scmp.ne.s32.totalorder %s55, %s56
      %p70 = scmp.eq.s32.totalorder %s34, 1
      %p71 = por %p69, %p70
      %p73 = scmp.ne.s32.totalorder %s56, %s72
      %p74 = scmp.eq.s32.totalorder %s34, 0
      %p75 = por %p73, %p74
      %s76 = ssub.s32 %s35, %s47
      %p77 = scmp.eq.s32.totalorder %s76, 0
      %s79 = sadd.s32 %s78, 1
      %s80 = scalar_select %p77, %s78, %s79
      %p83 = pneg %p77
      %p84 = scmp.eq.s32.totalorder %s28, 1
      %p85 = por %p83, %p84
      %p86 = scmp.ne.s32.totalorder %s78, %s81
      %p87 = scmp.eq.s32.totalorder %s28, 0
      %p88 = por %p86, %p87
      %p89 = scmp.ne.s32.totalorder %s78, %s81
      %p90 = scmp.eq.s32.totalorder %s33, 1
      %p91 = por %p89, %p90
      %p92 = scmp.ne.s32.totalorder %s81, %s82
      %p93 = scmp.eq.s32.totalorder %s33, 0
      %p94 = por %p92, %p93
      %p95 = scmp.ne.s32.totalorder %s81, %s82
      %p96 = scmp.eq.s32.totalorder %s34, 1
      %p97 = por %p95, %p96
      %p99 = scmp.ne.s32.totalorder %s82, %s98
      %p100 = scmp.eq.s32.totalorder %s34, 0
      %p101 = por %p99, %p100
      %s103 = sadd.s32 %s102, 1
      %p106 = scmp.eq.s32.totalorder %s28, 1
      %p107 = scmp.ne.s32.totalorder %s102, %s104
      %p108 = scmp.eq.s32.totalorder %s28, 0
      %p109 = por %p107, %p108
      %p110 = scmp.ne.s32.totalorder %s102, %s104
      %p111 = scmp.eq.s32.totalorder %s33, 1
      %p112 = por %p110, %p111
      %p113 = scmp.ne.s32.totalorder %s104, %s105
      %p114 = scmp.eq.s32.totalorder %s33, 0
      %p115 = por %p113, %p114
      %p116 = scmp.ne.s32.totalorder %s104, %s105
      %p117 = scmp.eq.s32.totalorder %s34, 1
      %p118 = por %p116, %p117
      %p120 = scmp.ne.s32.totalorder %s105, %s119
      %p121 = scmp.eq.s32.totalorder %s34, 0
      %p122 = por %p120, %p121
      %s124 = sadd.s32 %s123, 1
      %p127 = scmp.eq.s32.totalorder %s28, 1
      %p128 = scmp.ne.s32.totalorder %s123, %s125
      %p129 = scmp.eq.s32.totalorder %s28, 0
      %p130 = por %p128, %p129
      %p131 = scmp.ne.s32.totalorder %s123, %s125
      %p132 = scmp.eq.s32.totalorder %s33, 1
      %p133 = por %p131, %p132
      %p134 = scmp.ne.s32.totalorder %s125, %s126
      %p135 = scmp.eq.s32.totalorder %s33, 0
      %p136 = por %p134, %p135
      %p137 = scmp.ne.s32.totalorder %s125, %s126
      %p138 = scmp.eq.s32.totalorder %s34, 1
      %p139 = por %p137, %p138
      %p141 = scmp.ne.s32.totalorder %s126, %s140
      %p142 = scmp.eq.s32.totalorder %s34, 0
      %p143 = por %p141, %p142
      %s145 = sadd.s32 %s144, 1
      %p148 = scmp.eq.s32.totalorder %s28, 1
      %p149 = scmp.ne.s32.totalorder %s144, %s146
      %p150 = scmp.eq.s32.totalorder %s28, 0
      %p151 = por %p149, %p150
      %p152 = scmp.ne.s32.totalorder %s144, %s146
      %p153 = scmp.eq.s32.totalorder %s33, 1
      %p154 = por %p152, %p153
      %p155 = scmp.ne.s32.totalorder %s146, %s147
      %p156 = scmp.eq.s32.totalorder %s33, 0
      %p157 = por %p155, %p156
      %p158 = scmp.ne.s32.totalorder %s146, %s147
      %p159 = scmp.eq.s32.totalorder %s34, 1
      %p160 = por %p158, %p159
      %p162 = scmp.ne.s32.totalorder %s147, %s161
      %p163 = scmp.eq.s32.totalorder %s34, 0
      %p164 = por %p162, %p163
      %s166 = sadd.s32 %s165, 1
      %p169 = scmp.eq.s32.totalorder %s28, 1
      %p170 = scmp.ne.s32.totalorder %s165, %s167
      %p171 = scmp.eq.s32.totalorder %s28, 0
      %p172 = por %p170, %p171
      %p173 = scmp.ne.s32.totalorder %s165, %s167
      %p174 = scmp.eq.s32.totalorder %s33, 1
      %p175 = por %p173, %p174
      %p176 = scmp.ne.s32.totalorder %s167, %s168
      %p177 = scmp.eq.s32.totalorder %s33, 0
      %p178 = por %p176, %p177
      %p179 = scmp.ne.s32.totalorder %s167, %s168
      %p180 = scmp.eq.s32.totalorder %s34, 1
      %p181 = por %p179, %p180
      %p183 = scmp.ne.s32.totalorder %s168, %s182
      %p184 = scmp.eq.s32.totalorder %s34, 0
      %p185 = por %p183, %p184
      %s187 = sadd.s32 %s186, 1
      %p190 = scmp.eq.s32.totalorder %s28, 1
      %p191 = scmp.ne.s32.totalorder %s186, %s188
      %p192 = scmp.eq.s32.totalorder %s28, 0
      %p193 = por %p191, %p192
      %p194 = scmp.ne.s32.totalorder %s186, %s188
      %p195 = scmp.eq.s32.totalorder %s33, 1
      %p196 = por %p194, %p195
      %p197 = scmp.ne.s32.totalorder %s188, %s189
      %p198 = scmp.eq.s32.totalorder %s33, 0
      %p199 = por %p197, %p198
      %p200 = scmp.ne.s32.totalorder %s188, %s189
      %p201 = scmp.eq.s32.totalorder %s34, 1
      %p202 = por %p200, %p201
      %p204 = scmp.ne.s32.totalorder %s189, %s203
      %p205 = scmp.eq.s32.totalorder %s34, 0
      %p206 = por %p204, %p205
      %s208 = sadd.s32 %s207, 1
      %p211 = scmp.eq.s32.totalorder %s28, 1
      %p212 = scmp.ne.s32.totalorder %s207, %s209
      %p213 = scmp.eq.s32.totalorder %s28, 0
      %p214 = por %p212, %p213
      %p215 = scmp.ne.s32.totalorder %s207, %s209
      %p216 = scmp.eq.s32.totalorder %s33, 1
      %p217 = por %p215, %p216
      %p218 = scmp.ne.s32.totalorder %s209, %s210
      %p219 = scmp.eq.s32.totalorder %s33, 0
      %p220 = por %p218, %p219
      %p221 = scmp.ne.s32.totalorder %s209, %s210
      %p222 = scmp.eq.s32.totalorder %s34, 1
      %p223 = por %p221, %p222
      %p225 = scmp.ne.s32.totalorder %s210, %s224
      %p226 = scmp.eq.s32.totalorder %s34, 0
      %p227 = por %p225, %p226
      %s229 = sadd.s32 %s228, 1
      %p232 = scmp.eq.s32.totalorder %s28, 1
      %p233 = scmp.ne.s32.totalorder %s228, %s230
      %p234 = scmp.eq.s32.totalorder %s28, 0
      %p235 = por %p233, %p234
      %p236 = scmp.ne.s32.totalorder %s228, %s230
      %p237 = scmp.eq.s32.totalorder %s33, 1
      %p238 = por %p236, %p237
      %p239 = scmp.ne.s32.totalorder %s230, %s231
      %p240 = scmp.eq.s32.totalorder %s33, 0
      %p241 = por %p239, %p240
      %p242 = scmp.ne.s32.totalorder %s230, %s231
      %p243 = scmp.eq.s32.totalorder %s34, 1
      %p244 = por %p242, %p243
      %p246 = scmp.ne.s32.totalorder %s231, %s245
      %p247 = scmp.eq.s32.totalorder %s34, 0
      %p248 = por %p246, %p247
      %s250 = sadd.s32 %s249, 1
      %p253 = scmp.eq.s32.totalorder %s28, 1
      %p254 = scmp.ne.s32.totalorder %s249, %s251
      %p255 = scmp.eq.s32.totalorder %s28, 0
      %p256 = por %p254, %p255
      %p257 = scmp.ne.s32.totalorder %s249, %s251
      %p258 = scmp.eq.s32.totalorder %s33, 1
      %p259 = por %p257, %p258
      %p260 = scmp.ne.s32.totalorder %s251, %s252
      %p261 = scmp.eq.s32.totalorder %s33, 0
      %p262 = por %p260, %p261
      %p263 = scmp.ne.s32.totalorder %s251, %s252
      %p264 = scmp.eq.s32.totalorder %s34, 1
      %p265 = por %p263, %p264
      %p267 = scmp.ne.s32.totalorder %s252, %s266
      %p268 = scmp.eq.s32.totalorder %s34, 0
      %p269 = por %p267, %p268
      %s271 = sadd.s32 %s270, 1
      %p274 = scmp.eq.s32.totalorder %s28, 1
      %p275 = scmp.ne.s32.totalorder %s270, %s272
      %p276 = scmp.eq.s32.totalorder %s28, 0
      %p277 = por %p275, %p276
      %p278 = scmp.ne.s32.totalorder %s270, %s272
      %p279 = scmp.eq.s32.totalorder %s33, 1
      %p280 = por %p278, %p279
      %p281 = scmp.ne.s32.totalorder %s272, %s273
      %p282 = scmp.eq.s32.totalorder %s33, 0
      %p283 = por %p281, %p282
      %p284 = scmp.ne.s32.totalorder %s272, %s273
      %p285 = scmp.eq.s32.totalorder %s34, 1
      %p286 = por %p284, %p285
      %p288 = scmp.ne.s32.totalorder %s273, %s287
      %p289 = scmp.eq.s32.totalorder %s34, 0
      %p290 = por %p288, %p289
      %s292 = sadd.s32 %s291, 1
      %p295 = scmp.eq.s32.totalorder %s28, 1
      %p296 = scmp.ne.s32.totalorder %s291, %s293
      %p297 = scmp.eq.s32.totalorder %s28, 0
      %p298 = por %p296, %p297
      %p299 = scmp.ne.s32.totalorder %s291, %s293
      %p300 = scmp.eq.s32.totalorder %s33, 1
      %p301 = por %p299, %p300
      %p302 = scmp.ne.s32.totalorder %s293, %s294
      %p303 = scmp.eq.s32.totalorder %s33, 0
      %p304 = por %p302, %p303
      %p305 = scmp.ne.s32.totalorder %s293, %s294
      %p306 = scmp.eq.s32.totalorder %s34, 1
      %p307 = por %p305, %p306
      %p309 = scmp.ne.s32.totalorder %s294, %s308
      %p310 = scmp.eq.s32.totalorder %s34, 0
      %p311 = por %p309, %p310
      %s313 = sadd.s32 %s312, 1
      %p316 = scmp.eq.s32.totalorder %s28, 1
      %p317 = scmp.ne.s32.totalorder %s312, %s314
      %p318 = scmp.eq.s32.totalorder %s28, 0
      %p319 = por %p317, %p318
      %p320 = scmp.ne.s32.totalorder %s312, %s314
      %p321 = scmp.eq.s32.totalorder %s33, 1
      %p322 = por %p320, %p321
      %p323 = scmp.ne.s32.totalorder %s314, %s315
      %p324 = scmp.eq.s32.totalorder %s33, 0
      %p325 = por %p323, %p324
      %p326 = scmp.ne.s32.totalorder %s314, %s315
      %p327 = scmp.eq.s32.totalorder %s34, 1
      %p328 = por %p326, %p327
      %p330 = scmp.ne.s32.totalorder %s315, %s329
      %p331 = scmp.eq.s32.totalorder %s34, 0
      %p332 = por %p330, %p331
      %s334 = sadd.s32 %s333, 1
      %p337 = scmp.eq.s32.totalorder %s28, 1
      %p338 = scmp.ne.s32.totalorder %s333, %s335
      %p339 = scmp.eq.s32.totalorder %s28, 0
      %p340 = por %p338, %p339
      %p341 = scmp.ne.s32.totalorder %s333, %s335
      %p342 = scmp.eq.s32.totalorder %s33, 1
      %p343 = por %p341, %p342
      %p344 = scmp.ne.s32.totalorder %s335, %s336
      %p345 = scmp.eq.s32.totalorder %s33, 0
      %p346 = por %p344, %p345
      %p347 = scmp.ne.s32.totalorder %s335, %s336
      %p348 = scmp.eq.s32.totalorder %s34, 1
      %p349 = por %p347, %p348
      %p351 = scmp.ne.s32.totalorder %s336, %s350
      %p352 = scmp.eq.s32.totalorder %s34, 0
      %p353 = por %p351, %p352
      %s355 = sadd.s32 %s354, 1
      %p358 = scmp.eq.s32.totalorder %s28, 1
      %p359 = scmp.ne.s32.totalorder %s354, %s356
      %p360 = scmp.eq.s32.totalorder %s28, 0
      %p361 = por %p359, %p360
      %p362 = scmp.ne.s32.totalorder %s354, %s356
      %p363 = scmp.eq.s32.totalorder %s33, 1
      %p364 = por %p362, %p363
      %p365 = scmp.ne.s32.totalorder %s356, %s357
      %p366 = scmp.eq.s32.totalorder %s33, 0
      %p367 = por %p365, %p366
      %p368 = scmp.ne.s32.totalorder %s356, %s357
      %p369 = scmp.eq.s32.totalorder %s34, 1
      %p370 = por %p368, %p369
      %p372 = scmp.ne.s32.totalorder %s357, %s371
      %p373 = scmp.eq.s32.totalorder %s34, 0
      %p374 = por %p372, %p373
      %s376 = sadd.s32 %s375, 1
      %p379 = scmp.eq.s32.totalorder %s28, 1
      %p380 = scmp.ne.s32.totalorder %s375, %s377
      %p381 = scmp.eq.s32.totalorder %s28, 0
      %p382 = por %p380, %p381
      %p383 = scmp.ne.s32.totalorder %s375, %s377
      %p384 = scmp.eq.s32.totalorder %s33, 1
      %p385 = por %p383, %p384
      %p386 = scmp.ne.s32.totalorder %s377, %s378
      %p387 = scmp.eq.s32.totalorder %s33, 0
      %p388 = por %p386, %p387
      %p389 = scmp.ne.s32.totalorder %s377, %s378
      %p390 = scmp.eq.s32.totalorder %s34, 1
      %p391 = por %p389, %p390
      %p393 = scmp.ne.s32.totalorder %s378, %s392
      %p394 = scmp.eq.s32.totalorder %s34, 0
      %p395 = por %p393, %p394
      %s396 = ssub.s32 %s35, %s47
      %s397 = ssub.s32 %s36, %s43
      %s398 = sor.u32 %s396, %s397
      %p399 = scmp.eq.s32.totalorder %s398, 0
      %s401 = sadd.s32 %s400, 1
      %s402 = scalar_select %p399, %s400, %s401
      %p405 = pneg %p399
      %p406 = scmp.eq.s32.totalorder %s28, 1
      %p407 = por %p405, %p406
      %p408 = scmp.ne.s32.totalorder %s400, %s403
      %p409 = scmp.eq.s32.totalorder %s28, 0
      %p410 = por %p408, %p409
      %p411 = scmp.ne.s32.totalorder %s400, %s403
      %p412 = scmp.eq.s32.totalorder %s33, 1
      %p413 = por %p411, %p412
      %p414 = scmp.ne.s32.totalorder %s403, %s404
      %p415 = scmp.eq.s32.totalorder %s33, 0
      %p416 = por %p414, %p415
      %p417 = scmp.ne.s32.totalorder %s403, %s404
      %p418 = scmp.eq.s32.totalorder %s34, 1
      %p419 = por %p417, %p418
      %p421 = scmp.ne.s32.totalorder %s404, %s420
      %p422 = scmp.eq.s32.totalorder %s34, 0
      %p423 = por %p421, %p422
      %p424 = scmp.le.s32.totalorder 1, %s28
      %p425 = scmp.lt.s32.totalorder %s28, 3
      %p426 = pnand %p424, %p425
      %p427 = pneg %p426
      // Predicated region
      $region9: #{tpu_custom_call.1} parent=5 // pred_check
        _
      $region10: #{tpu_custom_call.1} parent=5 // pred_check_branch
        %429 = sbr.rel (%p426) target = $region12
      $region11: #{tpu_custom_call.1} parent=5 // pred_region
        %s430 = ssub.s32 %s28, 1
        // Predicated region
        $region13: #{tpu_custom_call.1} parent=11 // pred_check
          %p431 = pneg %p115
        $region14: #{tpu_custom_call.1} parent=11 // pred_check_branch
          %433 = sbr.rel (%p431) target = $region16
        $region15: #{tpu_custom_call.1} parent=11 // pred_region
          _
        $region16: #{tpu_custom_call.1} parent=11 // pred_fallthru
          _
        // Predicated region
        $region17: #{tpu_custom_call.1} parent=11 // pred_check
          %p434 = pneg %p136
        $region18: #{tpu_custom_call.1} parent=11 // pred_check_branch
          %436 = sbr.rel (%p434) target = $region20
        $region19: #{tpu_custom_call.1} parent=11 // pred_region
          _
        $region20: #{tpu_custom_call.1} parent=11 // pred_fallthru
          _
        // Predicated region
        $region21: #{tpu_custom_call.1} parent=11 // pred_check
          %p437 = pneg %p157
        $region22: #{tpu_custom_call.1} parent=11 // pred_check_branch
          %439 = sbr.rel (%p437) target = $region24
        $region23: #{tpu_custom_call.1} parent=11 // pred_region
          _
        $region24: #{tpu_custom_call.1} parent=11 // pred_fallthru
          _
        // Predicated region
        $region25: #{tpu_custom_call.1} parent=11 // pred_check
          %p440 = pneg %p178
        $region26: #{tpu_custom_call.1} parent=11 // pred_check_branch
          %442 = sbr.rel (%p440) target = $region28
        $region27: #{tpu_custom_call.1} parent=11 // pred_region
          _
        $region28: #{tpu_custom_call.1} parent=11 // pred_fallthru
          _
        // Predicated region
        $region29: #{tpu_custom_call.1} parent=11 // pred_check
          %p443 = pneg %p199
        $region30: #{tpu_custom_call.1} parent=11 // pred_check_branch
          %445 = sbr.rel (%p443) target = $region32
        $region31: #{tpu_custom_call.1} parent=11 // pred_region
          _
        $region32: #{tpu_custom_call.1} parent=11 // pred_fallthru
          _
        // Predicated region
        $region33: #{tpu_custom_call.1} parent=11 // pred_check
          %p446 = pneg %p220
        $region34: #{tpu_custom_call.1} parent=11 // pred_check_branch
          %448 = sbr.rel (%p446) target = $region36
        $region35: #{tpu_custom_call.1} parent=11 // pred_region
          _
        $region36: #{tpu_custom_call.1} parent=11 // pred_fallthru
          _
        // Predicated region
        $region37: #{tpu_custom_call.1} parent=11 // pred_check
          %p449 = pneg %p241
        $region38: #{tpu_custom_call.1} parent=11 // pred_check_branch
          %451 = sbr.rel (%p449) target = $region40
        $region39: #{tpu_custom_call.1} parent=11 // pred_region
          _
        $region40: #{tpu_custom_call.1} parent=11 // pred_fallthru
          _
        // Predicated region
        $region41: #{tpu_custom_call.1} parent=11 // pred_check
          %p452 = pneg %p262
        $region42: #{tpu_custom_call.1} parent=11 // pred_check_branch
          %454 = sbr.rel (%p452) target = $region44
        $region43: #{tpu_custom_call.1} parent=11 // pred_region
          _
        $region44: #{tpu_custom_call.1} parent=11 // pred_fallthru
          _
        // Predicated region
        $region45: #{tpu_custom_call.1} parent=11 // pred_check
          %p455 = pneg %p283
        $region46: #{tpu_custom_call.1} parent=11 // pred_check_branch
          %457 = sbr.rel (%p455) target = $region48
        $region47: #{tpu_custom_call.1} parent=11 // pred_region
          _
        $region48: #{tpu_custom_call.1} parent=11 // pred_fallthru
          _
        // Predicated region
        $region49: #{tpu_custom_call.1} parent=11 // pred_check
          %p458 = pneg %p304
        $region50: #{tpu_custom_call.1} parent=11 // pred_check_branch
          %460 = sbr.rel (%p458) target = $region52
        $region51: #{tpu_custom_call.1} parent=11 // pred_region
          _
        $region52: #{tpu_custom_call.1} parent=11 // pred_fallthru
          _
        // Predicated region
        $region53: #{tpu_custom_call.1} parent=11 // pred_check
          %p461 = pneg %p325
        $region54: #{tpu_custom_call.1} parent=11 // pred_check_branch
          %463 = sbr.rel (%p461) target = $region56
        $region55: #{tpu_custom_call.1} parent=11 // pred_region
          _
        $region56: #{tpu_custom_call.1} parent=11 // pred_fallthru
          _
        // Predicated region
        $region57: #{tpu_custom_call.1} parent=11 // pred_check
          %p464 = pneg %p346
        $region58: #{tpu_custom_call.1} parent=11 // pred_check_branch
          %466 = sbr.rel (%p464) target = $region60
        $region59: #{tpu_custom_call.1} parent=11 // pred_region
          _
        $region60: #{tpu_custom_call.1} parent=11 // pred_fallthru
          _
        // Predicated region
        $region61: #{tpu_custom_call.1} parent=11 // pred_check
          %p467 = pneg %p367
        $region62: #{tpu_custom_call.1} parent=11 // pred_check_branch
          %469 = sbr.rel (%p467) target = $region64
        $region63: #{tpu_custom_call.1} parent=11 // pred_region
          _
        $region64: #{tpu_custom_call.1} parent=11 // pred_fallthru
          _
        // Predicated region
        $region65: #{tpu_custom_call.1} parent=11 // pred_check
          %p470 = pneg %p388
        $region66: #{tpu_custom_call.1} parent=11 // pred_check_branch
          %472 = sbr.rel (%p470) target = $region68
        $region67: #{tpu_custom_call.1} parent=11 // pred_region
          _
        $region68: #{tpu_custom_call.1} parent=11 // pred_fallthru
          _
      $region12: #{tpu_custom_call.1} parent=5 // pred_fallthru
        _
      %p473 = scmp.lt.s32.totalorder %s28, 2
      // Predicated region
      $region69: #{tpu_custom_call.1} parent=5 // pred_check
        %p474 = pneg %p473
      $region70: #{tpu_custom_call.1} parent=5 // pred_check_branch
        %476 = sbr.rel (%p474) target = $region72
      $region71: #{tpu_custom_call.1} parent=5 // pred_region
        // Predicated region
        $region73: #{tpu_custom_call.1} parent=71 // pred_check
          %p477 = pneg %p62
        $region74: #{tpu_custom_call.1} parent=71 // pred_check_branch
          %479 = sbr.rel (%p477) target = $region76
        $region75: #{tpu_custom_call.1} parent=71 // pred_region
          %p480 = scmp.lt.s32.totalorder %s35, 1
          %s481 = scalar_select %p480, %s35, 1
          %p482 = scmp.lt.s32.totalorder %s36, 0
          %s483 = scalar_select %p482, %s36, 0
          %s484 = sadd.s32 %s483, %s481
          %s485 = smul.addr %s484, 8
          %s486 = scalar_lea.vmem %s0, %s485
        $region76: #{tpu_custom_call.1} parent=71 // pred_fallthru
          _
        // Predicated region
        $region77: #{tpu_custom_call.1} parent=71 // pred_check
          %p487 = pneg %p88
        $region78: #{tpu_custom_call.1} parent=71 // pred_check_branch
          %489 = sbr.rel (%p487) target = $region80
        $region79: #{tpu_custom_call.1} parent=71 // pred_region
          %s490 = sand.u32 %s78, 1
          %s491 = scalar_lea.sflag [#allocation5], %s490
          %s492 = sand.u32 %s78, 1
          %s493 = smul.addr %s492, 4
          %s494 = scalar_lea.vmem [#allocation4], %s493
          %s496 = ssub.s32 64, 64
          %497 = vsyncadd %s491, %s496
          %s498 = smul.addr %s35, 64
          %s499 = scalar_lea.hbm %s1, %s498
          %s501 = sshll.u32 %s494, 4
          %s502 = int_to_ptr.vmem [resolvable:$true] %s501
          %504 = dma.hbm_to_vmem [thread:$0]  %s499, 64, %s502, %s491
        $region80: #{tpu_custom_call.1} parent=71 // pred_fallthru
          _
      $region72: #{tpu_custom_call.1} parent=5 // pred_fallthru
        _
      %p505 = scmp.le.s32.totalorder 1, %s28
      %p506 = scmp.lt.s32.totalorder %s28, 3
      %p507 = pnand %p505, %p506
      %p508 = pneg %p507
      // Predicated region
      $region81: #{tpu_custom_call.1} parent=5 // pred_check
        _
      $region82: #{tpu_custom_call.1} parent=5 // pred_check_branch
        %510 = sbr.rel (%p507) target = $region84
      $region83: #{tpu_custom_call.1} parent=5 // pred_region
        %s511 = ssub.s32 %s28, 1
        %s512 = sand.u32 %s81, 1
        %s513 = scalar_lea.sflag [#allocation5], %s512
        %s514 = sand.u32 %s81, 1
        %s515 = smul.addr %s514, 4
        %s516 = scalar_lea.vmem [#allocation4], %s515
        // Predicated region
        $region85: #{tpu_custom_call.1} parent=83 // pred_check
          %p517 = pneg %p94
        $region86: #{tpu_custom_call.1} parent=83 // pred_check_branch
          %519 = sbr.rel (%p517) target = $region88
        $region87: #{tpu_custom_call.1} parent=83 // pred_region
          %520 = dma.done %s513, 64
        $region88: #{tpu_custom_call.1} parent=83 // pred_fallthru
          _
        %p521 = scmp.lt.s32.totalorder %s37, 1
        %s522 = scalar_select %p521, %s37, 1
        %p523 = scmp.lt.s32.totalorder %s38, 0
        %s524 = scalar_select %p523, %s38, 0
        %s525 = sadd.s32 %s524, %s522
        %s526 = smul.addr %s525, 8
        %s527 = scalar_lea.vmem %s0, %s526
        %p528 = pneg %p68
        %p529 = pneg %p65
        %s530 = sand.u32 %s81, 1
        %s531 = scalar_lea.sflag [#allocation5], %s530
        %s532 = sand.u32 %s81, 1
        %s533 = smul.addr %s532, 4
        %s534 = scalar_lea.vmem [#allocation4], %s533
        %p535 = pneg %p94
        %p536 = pneg %p91
        %p537 = pneg %p115
        %p538 = pneg %p112
        %p539 = pneg %p136
        %p540 = pneg %p133
        %p541 = pneg %p157
        %p542 = pneg %p154
        %p543 = pneg %p178
        %p544 = pneg %p175
        %p545 = pneg %p199
        %p546 = pneg %p196
        %p547 = pneg %p220
        %p548 = pneg %p217
        %p549 = pneg %p241
        %p550 = pneg %p238
        %p551 = pneg %p262
        %p552 = pneg %p259
        %p553 = pneg %p283
        %p554 = pneg %p280
        %p555 = pneg %p304
        %p556 = pneg %p301
        %p557 = pneg %p325
        %p558 = pneg %p322
        %p559 = pneg %p346
        %p560 = pneg %p343
        %p561 = pneg %p367
        %p562 = pneg %p364
        %p563 = pneg %p388
        %p564 = pneg %p385
        %p565 = pneg %p416
        %p566 = pneg %p413
        %s567 = sand.u32 %s403, 1
        %s568 = scalar_lea.sflag [#allocation6], %s567
        %s569 = sand.u32 %s403, 1
        %s570 = smul.addr %s569, 8
        %s571 = scalar_lea.vmem [#allocation7], %s570
        %p572 = scmp.lt.s32.totalorder %s37, 1
        %s573 = scalar_select %p572, %s37, 1
        %p574 = scmp.lt.s32.totalorder %s38, 0
        %s575 = scalar_select %p574, %s38, 0
        %s576 = sadd.s32 %s575, %s573
        %s577 = smul.addr %s576, 8
        %s578 = scalar_lea.vmem %s0, %s577
        %s580 = smul.u32 %s38, 8
        %p581 = scmp.eq.s32.totalorder %s38, 0
        // Predicated region
        $region89: #{tpu_custom_call.1} parent=83 // pred_check
          %p582 = pneg %p581
        $region90: #{tpu_custom_call.1} parent=83 // pred_check_branch
          %584 = sbr.rel (%p582) target = $region92
        $region91: #{tpu_custom_call.1} parent=83 // pred_region
          %v585 = vld [vmem:[%s516] sm:$0xf]
          %v586 = vld [vmem:[%s4] sm:$0xf]
          %v587 = vld [vmem:[%s4 + $0x4] sm:$0xf]
          %v588 = vld [vmem:[%s4 + $0x8] sm:$0xf]
          %v589 = vld [vmem:[%s4 + $0xc] sm:$0xf]
          %v590 = vld [vmem:[%s5] sm:$0x1]
          %v592 = vlaneseq
          %v593 = vshrl.u32 %v592, 7
          %v594 = vsub.s32 0, %v593
          %v595 = vrot.slane %v590, %v594
          %v601 = vunpack.c.l.b16 %v586
          %v602 = vunpack.c.l.b16 %v587
          %v603 = vunpack.c.l.b16 %v588
          %v604 = vunpack.c.l.b16 %v589
          %v605 = vpack.c.b16 %v602, %v601
          %v606 = vpack.c.b16 %v604, %v603
          %vm609 = vcmask 261120
          %v611 = vsel %vm609, %v585, 0
          %613 = vmatprep.subr.bf16.mxu0 0
          %614 = vmatpush1.bf16.msra.mxu0 %v605
          %615 = vmatprep.subr.bf16.mxu0 0
          %616 = vmatpush1.bf16.msra.mxu0 %v606
          %617 = vmatprep.subr.bf16.mxu0 0
          %618 = vmatpush1.bf16.msra.mxu0 0
          %619 = vmatprep.subr.bf16.mxu0 0
          %620 = vmatpush1.bf16.msra.mxu0 0
          %621 = vmatprep.subr.bf16.mxu0 0
          %622 = vmatpush1.bf16.msra.mxu0 0
          %623 = vmatprep.subr.bf16.mxu0 0
          %624 = vmatpush1.bf16.msra.mxu0 0
          %625 = vmatprep.subr.bf16.mxu0 0
          %626 = vmatpush1.bf16.msra.mxu0 0
          %627 = vmatprep.subr.bf16.mxu0 0
          %628 = vmatpush1.bf16.msra.mxu0 0
          %629 = vmatprep.subr.bf16.mxu0 0
          %630 = vmatpush1.bf16.msra.mxu0 0
          %631 = vmatprep.subr.bf16.mxu0 0
          %632 = vmatpush1.bf16.msra.mxu0 0
          %633 = vmatprep.subr.bf16.mxu0 0
          %634 = vmatpush1.bf16.msra.mxu0 0
          %635 = vmatprep.subr.bf16.mxu0 0
          %636 = vmatpush1.bf16.msra.mxu0 0
          %637 = vmatprep.subr.bf16.mxu0 0
          %638 = vmatpush1.bf16.msra.mxu0 0
          %639 = vmatprep.subr.bf16.mxu0 0
          %640 = vmatpush1.bf16.msra.mxu0 0
          %641 = vmatprep.subr.bf16.mxu0 0
          %642 = vmatpush1.bf16.msra.mxu0 0
          %643 = vmatprep.subr.bf16.mxu0 0
          %644 = vmatpush1.bf16.msra.mxu0 0
          %645 = vmatprep.mubr.bf16.mxu0 0
          %646 = vmatmul.mubr.bf16.gmra.mrb[0].mxu0 %v611
          %v647 = vpop.f32.mrb[0].mxu0
          %v648 = vadd.f32 %v595, %v647
          %v649 = vpop.f32.mrb[0].mxu0
          %v650 = vpop.f32.mrb[0].mxu0
          %v651 = vpop.f32.mrb[0].mxu0
          %652 = vdwg.mxu0
          %654 = vrot.lane.b32.xlu0 %v648, 120
          %v655 = vpop.permute.xlu0 %654
          %657 = vrot.lane.b32.xlu0 %v648, 112
          %v658 = vpop.permute.xlu0 %657
          %660 = vrot.lane.b32.xlu0 %v648, 104
          %v661 = vpop.permute.xlu0 %660
          %v663 = vcombine.low %v648, %v658
          %v664 = vcombine.high %v648, %v658
          %v666 = vunpack.c.l.s4 1983009808
          %v667 = vunpack.c.0.s8 %v666
          %v668 = vlaneseq
          %v669 = vshrl.u32 %v668, 7
          %v670 = vsub.s32 %v667, %v669
          %v671 = vrot.slane %v663, %v670
          %v673 = vunpack.c.l.s4 1983009808
          %v674 = vunpack.c.0.s8 %v673
          %v675 = vlaneseq
          %v676 = vshrl.u32 %v675, 7
          %v677 = vsub.s32 %v674, %v676
          %v678 = vrot.slane %v664, %v677
          %v679 = vcombine.low %v655, %v661
          %v680 = vcombine.high %v655, %v661
          %v682 = vunpack.c.l.s4 1983009808
          %v683 = vunpack.c.0.s8 %v682
          %v684 = vlaneseq
          %v685 = vshrl.u32 %v684, 7
          %v686 = vsub.s32 %v683, %v685
          %v687 = vrot.slane %v679, %v686
          %v689 = vunpack.c.l.s4 1983009808
          %v690 = vunpack.c.0.s8 %v689
          %v691 = vlaneseq
          %v692 = vshrl.u32 %v691, 7
          %v693 = vsub.s32 %v690, %v692
          %v694 = vrot.slane %v680, %v693
          %v695 = vcombine.low %v671, %v687
          %v696 = vcombine.high %v671, %v687
          %v698 = vunpack.c.l.s4 1934713408
          %v699 = vunpack.c.0.s8 %v698
          %v700 = vlaneseq
          %v701 = vshrl.u32 %v700, 7
          %v702 = vsub.s32 %v699, %v701
          %v703 = vrot.slane %v695, %v702
          %v705 = vunpack.c.l.s4 1934713408
          %v706 = vunpack.c.0.s8 %v705
          %v707 = vlaneseq
          %v708 = vshrl.u32 %v707, 7
          %v709 = vsub.s32 %v706, %v708
          %v710 = vrot.slane %v696, %v709
          %v711 = vcombine.low %v678, %v694
          %v712 = vcombine.high %v678, %v694
          %v714 = vunpack.c.l.s4 1934713408
          %v715 = vunpack.c.0.s8 %v714
          %v716 = vlaneseq
          %v717 = vshrl.u32 %v716, 7
          %v718 = vsub.s32 %v715, %v717
          %v719 = vrot.slane %v711, %v718
          %v721 = vunpack.c.l.s4 1934713408
          %v722 = vunpack.c.0.s8 %v721
          %v723 = vlaneseq
          %v724 = vshrl.u32 %v723, 7
          %v725 = vsub.s32 %v722, %v724
          %v726 = vrot.slane %v712, %v725
          %v727 = vcombine.high %v703, 0.0
          %v728 = vcombine.high %v710, 0.0
          %v729 = vcombine.high %v719, 0.0
          %v730 = vcombine.high %v726, 0.0
          %731 = vrot.lane.b32.xlu0 %v648, 96
          %v732 = vpop.permute.xlu0 %731
          %733 = vrot.lane.b32.xlu0 %v655, 96
          %v734 = vpop.permute.xlu0 %733
          %735 = vrot.lane.b32.xlu0 %v658, 96
          %v736 = vpop.permute.xlu0 %735
          %737 = vrot.lane.b32.xlu0 %v661, 96
          %v738 = vpop.permute.xlu0 %737
          %v743 = vcombine.low %v732, %v736
          %v744 = vcombine.high %v732, %v736
          %v746 = vunpack.c.l.s4 1983009808
          %v747 = vunpack.c.0.s8 %v746
          %v748 = vlaneseq
          %v749 = vshrl.u32 %v748, 7
          %v750 = vsub.s32 %v747, %v749
          %v751 = vrot.slane %v743, %v750
          %v753 = vunpack.c.l.s4 1983009808
          %v754 = vunpack.c.0.s8 %v753
          %v755 = vlaneseq
          %v756 = vshrl.u32 %v755, 7
          %v757 = vsub.s32 %v754, %v756
          %v758 = vrot.slane %v744, %v757
          %v759 = vcombine.low %v734, %v738
          %v760 = vcombine.high %v734, %v738
          %v762 = vunpack.c.l.s4 1983009808
          %v763 = vunpack.c.0.s8 %v762
          %v764 = vlaneseq
          %v765 = vshrl.u32 %v764, 7
          %v766 = vsub.s32 %v763, %v765
          %v767 = vrot.slane %v759, %v766
          %v769 = vunpack.c.l.s4 1983009808
          %v770 = vunpack.c.0.s8 %v769
          %v771 = vlaneseq
          %v772 = vshrl.u32 %v771, 7
          %v773 = vsub.s32 %v770, %v772
          %v774 = vrot.slane %v760, %v773
          %v775 = vcombine.low %v751, %v767
          %v776 = vcombine.high %v751, %v767
          %v778 = vunpack.c.l.s4 1934713408
          %v779 = vunpack.c.0.s8 %v778
          %v780 = vlaneseq
          %v781 = vshrl.u32 %v780, 7
          %v782 = vsub.s32 %v779, %v781
          %v783 = vrot.slane %v775, %v782
          %v785 = vunpack.c.l.s4 1934713408
          %v786 = vunpack.c.0.s8 %v785
          %v787 = vlaneseq
          %v788 = vshrl.u32 %v787, 7
          %v789 = vsub.s32 %v786, %v788
          %v790 = vrot.slane %v776, %v789
          %v791 = vcombine.low %v758, %v774
          %v792 = vcombine.high %v758, %v774
          %v794 = vunpack.c.l.s4 1934713408
          %v795 = vunpack.c.0.s8 %v794
          %v796 = vlaneseq
          %v797 = vshrl.u32 %v796, 7
          %v798 = vsub.s32 %v795, %v797
          %v799 = vrot.slane %v791, %v798
          %v801 = vunpack.c.l.s4 1934713408
          %v802 = vunpack.c.0.s8 %v801
          %v803 = vlaneseq
          %v804 = vshrl.u32 %v803, 7
          %v805 = vsub.s32 %v802, %v804
          %v806 = vrot.slane %v792, %v805
          %v807 = vcombine.high %v783, 0.0
          %v808 = vcombine.high %v790, 0.0
          %v809 = vcombine.high %v799, 0.0
          %v810 = vcombine.high %v806, 0.0
          %v811 = vcombine.low %v703, %v710
          %v813 = vunpack.c.l.s4 1983009808
          %v814 = vunpack.c.0.s8 %v813
          %v815 = vlaneseq
          %v816 = vshrl.u32 %v815, 7
          %v817 = vsub.s32 %v814, %v816
          %v818 = vrot.slane %v811, %v817
          %v819 = vcombine.low %v727, %v728
          %v821 = vunpack.c.l.s4 1983009808
          %v822 = vunpack.c.0.s8 %v821
          %v823 = vlaneseq
          %v824 = vshrl.u32 %v823, 7
          %v825 = vsub.s32 %v822, %v824
          %v826 = vrot.slane %v819, %v825
          %v827 = vcombine.low %v719, %v726
          %v829 = vunpack.c.l.s4 1983009808
          %v830 = vunpack.c.0.s8 %v829
          %v831 = vlaneseq
          %v832 = vshrl.u32 %v831, 7
          %v833 = vsub.s32 %v830, %v832
          %v834 = vrot.slane %v827, %v833
          %v835 = vcombine.low %v729, %v730
          %v837 = vunpack.c.l.s4 1983009808
          %v838 = vunpack.c.0.s8 %v837
          %v839 = vlaneseq
          %v840 = vshrl.u32 %v839, 7
          %v841 = vsub.s32 %v838, %v840
          %v842 = vrot.slane %v835, %v841
          %v843 = vcombine.low %v818, %v826
          %v844 = vcombine.high %v818, %v826
          %v846 = vunpack.c.l.s4 1934713408
          %v847 = vunpack.c.0.s8 %v846
          %v848 = vlaneseq
          %v849 = vshrl.u32 %v848, 7
          %v850 = vsub.s32 %v847, %v849
          %v851 = vrot.slane %v843, %v850
          %v853 = vunpack.c.l.s4 1934713408
          %v854 = vunpack.c.0.s8 %v853
          %v855 = vlaneseq
          %v856 = vshrl.u32 %v855, 7
          %v857 = vsub.s32 %v854, %v856
          %v858 = vrot.slane %v844, %v857
          %v859 = vcombine.low %v834, %v842
          %v860 = vcombine.high %v834, %v842
          %v862 = vunpack.c.l.s4 1934713408
          %v863 = vunpack.c.0.s8 %v862
          %v864 = vlaneseq
          %v865 = vshrl.u32 %v864, 7
          %v866 = vsub.s32 %v863, %v865
          %v867 = vrot.slane %v859, %v866
          %v869 = vunpack.c.l.s4 1934713408
          %v870 = vunpack.c.0.s8 %v869
          %v871 = vlaneseq
          %v872 = vshrl.u32 %v871, 7
          %v873 = vsub.s32 %v870, %v872
          %v874 = vrot.slane %v860, %v873
          %v875 = vcombine.low %v851, %v867
          %v876 = vcombine.high %v851, %v867
          %v877 = vcombine.low %v858, %v874
          %v878 = vcombine.high %v858, %v874
          %v879 = vpack.c.bf16 %v875, %v875
          %v880 = vpack.c.bf16 %v876, %v876
          %v881 = vpack.c.bf16 %v877, %v877
          %v882 = vpack.c.bf16 %v878, %v878
          %vm883 = vcmask 60416
          %884 = vst.msk [vmem:[#allocation2] sm:$0xf] %vm883, %v879
          %885 = vst.msk [vmem:[#allocation2 + $0x4] sm:$0xf] %vm883, %v880
          %886 = vst.msk [vmem:[#allocation2 + $0x8] sm:$0xf] %vm883, %v881
          %887 = vst.msk [vmem:[#allocation2 + $0xc] sm:$0xf] %vm883, %v882
          %v888 = vcombine.low %v783, %v790
          %v890 = vunpack.c.l.s4 1983009808
          %v891 = vunpack.c.0.s8 %v890
          %v892 = vlaneseq
          %v893 = vshrl.u32 %v892, 7
          %v894 = vsub.s32 %v891, %v893
          %v895 = vrot.slane %v888, %v894
          %v896 = vcombine.low %v807, %v808
          %v898 = vunpack.c.l.s4 1983009808
          %v899 = vunpack.c.0.s8 %v898
          %v900 = vlaneseq
          %v901 = vshrl.u32 %v900, 7
          %v902 = vsub.s32 %v899, %v901
          %v903 = vrot.slane %v896, %v902
          %v904 = vcombine.low %v799, %v806
          %v906 = vunpack.c.l.s4 1983009808
          %v907 = vunpack.c.0.s8 %v906
          %v908 = vlaneseq
          %v909 = vshrl.u32 %v908, 7
          %v910 = vsub.s32 %v907, %v909
          %v911 = vrot.slane %v904, %v910
          %v912 = vcombine.low %v809, %v810
          %v914 = vunpack.c.l.s4 1983009808
          %v915 = vunpack.c.0.s8 %v914
          %v916 = vlaneseq
          %v917 = vshrl.u32 %v916, 7
          %v918 = vsub.s32 %v915, %v917
          %v919 = vrot.slane %v912, %v918
          %v920 = vcombine.low %v895, %v903
          %v921 = vcombine.high %v895, %v903
          %v923 = vunpack.c.l.s4 1934713408
          %v924 = vunpack.c.0.s8 %v923
          %v925 = vlaneseq
          %v926 = vshrl.u32 %v925, 7
          %v927 = vsub.s32 %v924, %v926
          %v928 = vrot.slane %v920, %v927
          %v930 = vunpack.c.l.s4 1934713408
          %v931 = vunpack.c.0.s8 %v930
          %v932 = vlaneseq
          %v933 = vshrl.u32 %v932, 7
          %v934 = vsub.s32 %v931, %v933
          %v935 = vrot.slane %v921, %v934
          %v936 = vcombine.low %v911, %v919
          %v937 = vcombine.high %v911, %v919
          %v939 = vunpack.c.l.s4 1934713408
          %v940 = vunpack.c.0.s8 %v939
          %v941 = vlaneseq
          %v942 = vshrl.u32 %v941, 7
          %v943 = vsub.s32 %v940, %v942
          %v944 = vrot.slane %v936, %v943
          %v946 = vunpack.c.l.s4 1934713408
          %v947 = vunpack.c.0.s8 %v946
          %v948 = vlaneseq
          %v949 = vshrl.u32 %v948, 7
          %v950 = vsub.s32 %v947, %v949
          %v951 = vrot.slane %v937, %v950
          %v952 = vcombine.low %v928, %v944
          %v953 = vcombine.high %v928, %v944
          %v954 = vcombine.low %v935, %v951
          %v955 = vcombine.high %v935, %v951
          %v956 = vpack.c.bf16 %v952, %v952
          %v957 = vpack.c.bf16 %v953, %v953
          %v958 = vpack.c.bf16 %v954, %v954
          %v959 = vpack.c.bf16 %v955, %v955
          %960 = vst.msk [vmem:[#allocation3] sm:$0xf] %vm883, %v956
          %961 = vst.msk [vmem:[#allocation3 + $0x4] sm:$0xf] %vm883, %v957
          %962 = vst.msk [vmem:[#allocation3 + $0x8] sm:$0xf] %vm883, %v958
          %963 = vst.msk [vmem:[#allocation3 + $0xc] sm:$0xf] %vm883, %v959
        $region92: #{tpu_custom_call.1} parent=83 // pred_fallthru
          _
        %v964 = vld [vmem:[%s578] sm:$0xff]
        %v965 = vpack.c.bf16 %v964, %v964
        %v966 = vld [vmem:[%s2] sm:$0xf]
        %v967 = vld [vmem:[%s2 + $0x4] sm:$0xf]
        %v968 = vld [vmem:[%s2 + $0x8] sm:$0xf]
        %v969 = vld [vmem:[%s2 + $0xc] sm:$0xf]
        %v970 = vld [vmem:[%s3] sm:$0x1]
        %v972 = vlaneseq
        %v973 = vshrl.u32 %v972, 7
        %v974 = vsub.s32 0, %v973
        %v975 = vrot.slane %v970, %v974
        %v981 = vunpack.c.l.b16 %v966
        %v982 = vunpack.c.l.b16 %v967
        %v983 = vunpack.c.l.b16 %v968
        %v984 = vunpack.c.l.b16 %v969
        %v985 = vpack.c.b16 %v982, %v981
        %v986 = vpack.c.b16 %v984, %v983
        %vm989 = vcmask 261120
        %v991 = vsel %vm989, %v965, 0
        %993 = vmatprep.subr.bf16.mxu0 0
        %994 = vmatpush1.bf16.msra.mxu0 %v985
        %995 = vmatprep.subr.bf16.mxu0 0
        %996 = vmatpush1.bf16.msra.mxu0 %v986
        %997 = vmatprep.subr.bf16.mxu0 0
        %998 = vmatpush1.bf16.msra.mxu0 0
        %999 = vmatprep.subr.bf16.mxu0 0
        %1000 = vmatpush1.bf16.msra.mxu0 0
        %1001 = vmatprep.subr.bf16.mxu0 0
        %1002 = vmatpush1.bf16.msra.mxu0 0
        %1003 = vmatprep.subr.bf16.mxu0 0
        %1004 = vmatpush1.bf16.msra.mxu0 0
        %1005 = vmatprep.subr.bf16.mxu0 0
        %1006 = vmatpush1.bf16.msra.mxu0 0
        %1007 = vmatprep.subr.bf16.mxu0 0
        %1008 = vmatpush1.bf16.msra.mxu0 0
        %1009 = vmatprep.subr.bf16.mxu0 0
        %1010 = vmatpush1.bf16.msra.mxu0 0
        %1011 = vmatprep.subr.bf16.mxu0 0
        %1012 = vmatpush1.bf16.msra.mxu0 0
        %1013 = vmatprep.subr.bf16.mxu0 0
        %1014 = vmatpush1.bf16.msra.mxu0 0
        %1015 = vmatprep.subr.bf16.mxu0 0
        %1016 = vmatpush1.bf16.msra.mxu0 0
        %1017 = vmatprep.subr.bf16.mxu0 0
        %1018 = vmatpush1.bf16.msra.mxu0 0
        %1019 = vmatprep.subr.bf16.mxu0 0
        %1020 = vmatpush1.bf16.msra.mxu0 0
        %1021 = vmatprep.subr.bf16.mxu0 0
        %1022 = vmatpush1.bf16.msra.mxu0 0
        %1023 = vmatprep.subr.bf16.mxu0 0
        %1024 = vmatpush1.bf16.msra.mxu0 0
        %1025 = vmatprep.mubr.bf16.mxu0 0
        %1026 = vmatmul.mubr.bf16.gmra.mrb[0].mxu0 %v991
        %v1027 = vpop.f32.mrb[0].mxu0
        %v1028 = vadd.f32 %v975, %v1027
        %v1029 = vpop.f32.mrb[0].mxu0
        %v1030 = vpop.f32.mrb[0].mxu0
        %v1031 = vpop.f32.mrb[0].mxu0
        %1032 = vdwg.mxu0
        %1034 = vrot.lane.b32.xlu0 %v1028, 120
        %v1035 = vpop.permute.xlu0 %1034
        %1037 = vrot.lane.b32.xlu0 %v1028, 112
        %v1038 = vpop.permute.xlu0 %1037
        %1040 = vrot.lane.b32.xlu0 %v1028, 104
        %v1041 = vpop.permute.xlu0 %1040
        %v1043 = vcombine.low %v1028, %v1038
        %v1044 = vcombine.high %v1028, %v1038
        %v1046 = vunpack.c.l.s4 1983009808
        %v1047 = vunpack.c.0.s8 %v1046
        %v1048 = vlaneseq
        %v1049 = vshrl.u32 %v1048, 7
        %v1050 = vsub.s32 %v1047, %v1049
        %v1051 = vrot.slane %v1043, %v1050
        %v1053 = vunpack.c.l.s4 1983009808
        %v1054 = vunpack.c.0.s8 %v1053
        %v1055 = vlaneseq
        %v1056 = vshrl.u32 %v1055, 7
        %v1057 = vsub.s32 %v1054, %v1056
        %v1058 = vrot.slane %v1044, %v1057
        %v1059 = vcombine.low %v1035, %v1041
        %v1060 = vcombine.high %v1035, %v1041
        %v1062 = vunpack.c.l.s4 1983009808
        %v1063 = vunpack.c.0.s8 %v1062
        %v1064 = vlaneseq
        %v1065 = vshrl.u32 %v1064, 7
        %v1066 = vsub.s32 %v1063, %v1065
        %v1067 = vrot.slane %v1059, %v1066
        %v1069 = vunpack.c.l.s4 1983009808
        %v1070 = vunpack.c.0.s8 %v1069
        %v1071 = vlaneseq
        %v1072 = vshrl.u32 %v1071, 7
        %v1073 = vsub.s32 %v1070, %v1072
        %v1074 = vrot.slane %v1060, %v1073
        %v1075 = vcombine.low %v1051, %v1067
        %v1076 = vcombine.high %v1051, %v1067
        %v1078 = vunpack.c.l.s4 1934713408
        %v1079 = vunpack.c.0.s8 %v1078
        %v1080 = vlaneseq
        %v1081 = vshrl.u32 %v1080, 7
        %v1082 = vsub.s32 %v1079, %v1081
        %v1083 = vrot.slane %v1075, %v1082
        %v1085 = vunpack.c.l.s4 1934713408
        %v1086 = vunpack.c.0.s8 %v1085
        %v1087 = vlaneseq
        %v1088 = vshrl.u32 %v1087, 7
        %v1089 = vsub.s32 %v1086, %v1088
        %v1090 = vrot.slane %v1076, %v1089
        %v1091 = vcombine.low %v1058, %v1074
        %v1092 = vcombine.high %v1058, %v1074
        %v1094 = vunpack.c.l.s4 1934713408
        %v1095 = vunpack.c.0.s8 %v1094
        %v1096 = vlaneseq
        %v1097 = vshrl.u32 %v1096, 7
        %v1098 = vsub.s32 %v1095, %v1097
        %v1099 = vrot.slane %v1091, %v1098
        %v1101 = vunpack.c.l.s4 1934713408
        %v1102 = vunpack.c.0.s8 %v1101
        %v1103 = vlaneseq
        %v1104 = vshrl.u32 %v1103, 7
        %v1105 = vsub.s32 %v1102, %v1104
        %v1106 = vrot.slane %v1092, %v1105
        %v1107 = vcombine.high %v1083, 0.0
        %v1108 = vcombine.high %v1090, 0.0
        %v1109 = vcombine.high %v1099, 0.0
        %v1110 = vcombine.high %v1106, 0.0
        %v1111 = vcombine.low %v1083, %v1090
        %v1113 = vunpack.c.l.s4 1983009808
        %v1114 = vunpack.c.0.s8 %v1113
        %v1115 = vlaneseq
        %v1116 = vshrl.u32 %v1115, 7
        %v1117 = vsub.s32 %v1114, %v1116
        %v1118 = vrot.slane %v1111, %v1117
        %v1119 = vcombine.low %v1107, %v1108
        %v1121 = vunpack.c.l.s4 1983009808
        %v1122 = vunpack.c.0.s8 %v1121
        %v1123 = vlaneseq
        %v1124 = vshrl.u32 %v1123, 7
        %v1125 = vsub.s32 %v1122, %v1124
        %v1126 = vrot.slane %v1119, %v1125
        %v1127 = vcombine.low %v1099, %v1106
        %v1129 = vunpack.c.l.s4 1983009808
        %v1130 = vunpack.c.0.s8 %v1129
        %v1131 = vlaneseq
        %v1132 = vshrl.u32 %v1131, 7
        %v1133 = vsub.s32 %v1130, %v1132
        %v1134 = vrot.slane %v1127, %v1133
        %v1135 = vcombine.low %v1109, %v1110
        %v1137 = vunpack.c.l.s4 1983009808
        %v1138 = vunpack.c.0.s8 %v1137
        %v1139 = vlaneseq
        %v1140 = vshrl.u32 %v1139, 7
        %v1141 = vsub.s32 %v1138, %v1140
        %v1142 = vrot.slane %v1135, %v1141
        %v1143 = vcombine.low %v1118, %v1126
        %v1144 = vcombine.high %v1118, %v1126
        %v1146 = vunpack.c.l.s4 1934713408
        %v1147 = vunpack.c.0.s8 %v1146
        %v1148 = vlaneseq
        %v1149 = vshrl.u32 %v1148, 7
        %v1150 = vsub.s32 %v1147, %v1149
        %v1151 = vrot.slane %v1143, %v1150
        %v1153 = vunpack.c.l.s4 1934713408
        %v1154 = vunpack.c.0.s8 %v1153
        %v1155 = vlaneseq
        %v1156 = vshrl.u32 %v1155, 7
        %v1157 = vsub.s32 %v1154, %v1156
        %v1158 = vrot.slane %v1144, %v1157
        %v1159 = vcombine.low %v1134, %v1142
        %v1160 = vcombine.high %v1134, %v1142
        %v1162 = vunpack.c.l.s4 1934713408
        %v1163 = vunpack.c.0.s8 %v1162
        %v1164 = vlaneseq
        %v1165 = vshrl.u32 %v1164, 7
        %v1166 = vsub.s32 %v1163, %v1165
        %v1167 = vrot.slane %v1159, %v1166
        %v1169 = vunpack.c.l.s4 1934713408
        %v1170 = vunpack.c.0.s8 %v1169
        %v1171 = vlaneseq
        %v1172 = vshrl.u32 %v1171, 7
        %v1173 = vsub.s32 %v1170, %v1172
        %v1174 = vrot.slane %v1160, %v1173
        %v1175 = vcombine.low %v1151, %v1167
        %v1176 = vcombine.high %v1151, %v1167
        %v1177 = vcombine.low %v1158, %v1174
        %v1178 = vcombine.high %v1158, %v1174
        %v1179 = vpack.c.bf16 %v1175, %v1175
        %v1180 = vpack.c.bf16 %v1176, %v1176
        %v1181 = vpack.c.bf16 %v1177, %v1177
        %v1182 = vpack.c.bf16 %v1178, %v1178
        %v1183 = vlaneseq
        %v1184 = vshrl.u32 %v1183, 7
        %v1185 = vstv %s580
        %v1186 = vadd.s32 %v1185, %v1184
        %s1187 = sadd.s32 %s38, 1
        // While loop
        $region93: #{tpu_custom_call.1} parent=83 // loop_pre_header
          _
        $region94: #{tpu_custom_call.1} parent=83 // loop_header
          %s1189 = sphi 0, %s1191
          %p1190 = scmp.ge.s32.totalorder %s1189, %s1187
          %v1194 = vphi -1e+30, %v1433
          %v1195 = vphi -1e+30, %v1434
          %v1196 = vphi -1e+30, %v1435
          %v1197 = vphi -1e+30, %v1436
          %v1198 = vphi 0.0, %v1477
          %v1199 = vphi 0.0, %v1478
          %v1200 = vphi 0.0, %v1479
          %v1201 = vphi 0.0, %v1480
          %v1202 = vphi 0.0, %v1674
          %v1203 = vphi 0.0, %v1675
          %v1204 = vphi 0.0, %v1676
          %v1205 = vphi 0.0, %v1677
        $region95: #{tpu_custom_call.1} parent=83 // loop_header_branch
          %1193 = sbr.rel (%p1190) target = $region99
        $region96: #{tpu_custom_call.1} parent=83 // loop_body
          %s1206 = smul.u32 %s1189, 8
          %s1207 = sshra.s32 %s1206, 3
          %s1208 = sand.u32 %s1206, 7
          %s1209 = smul.addr %s1207, 4
          %s1210 = scalar_lea.vmem [#allocation2], %s1209
          %v1211 = vld [vmem:[%s1210] sm:$0xf]
          %v1212 = vld [vmem:[%s1210 + $0x4] sm:$0xf]
          %v1213 = vld [vmem:[%s1210 + $0x8] sm:$0xf]
          %v1214 = vld [vmem:[%s1210 + $0xc] sm:$0xf]
          %s1215 = smul.addr %s1207, 4
          %s1216 = scalar_lea.vmem [#allocation3], %s1215
          %v1217 = vld [vmem:[%s1216] sm:$0xf]
          %v1218 = vld [vmem:[%s1216 + $0x4] sm:$0xf]
          %v1219 = vld [vmem:[%s1216 + $0x8] sm:$0xf]
          %v1220 = vld [vmem:[%s1216 + $0xc] sm:$0xf]
          %vm1221 = vcmask 64512
          %v1223 = vsel %vm1221, %v1179, 0
          %v1226 = vsel %vm1221, %v1211, 0
          %1228 = vmatprep.subr.bf16.mxu0 0
          %1229 = vmatpush1.bf16.xpose.msra.mxu0 %v1226
          %1230 = vmatprep.subr.bf16.mxu0 0
          %1231 = vmatpush1.bf16.xpose.msra.mxu0 0
          %1232 = vmatprep.subr.bf16.mxu0 0
          %1233 = vmatpush1.bf16.xpose.msra.mxu0 0
          %1234 = vmatprep.subr.bf16.mxu0 0
          %1235 = vmatpush1.bf16.xpose.msra.mxu0 0
          %1236 = vmatprep.subr.bf16.mxu0 0
          %1237 = vmatpush1.bf16.xpose.msra.mxu0 0
          %1238 = vmatprep.subr.bf16.mxu0 0
          %1239 = vmatpush1.bf16.xpose.msra.mxu0 0
          %1240 = vmatprep.subr.bf16.mxu0 0
          %1241 = vmatpush1.bf16.xpose.msra.mxu0 0
          %1242 = vmatprep.subr.bf16.mxu0 0
          %1243 = vmatpush1.bf16.xpose.msra.mxu0 0
          %1244 = vmatprep.subr.bf16.mxu0 0
          %1245 = vmatpush1.bf16.xpose.msra.mxu0 0
          %1246 = vmatprep.subr.bf16.mxu0 0
          %1247 = vmatpush1.bf16.xpose.msra.mxu0 0
          %1248 = vmatprep.subr.bf16.mxu0 0
          %1249 = vmatpush1.bf16.xpose.msra.mxu0 0
          %1250 = vmatprep.subr.bf16.mxu0 0
          %1251 = vmatpush1.bf16.xpose.msra.mxu0 0
          %1252 = vmatprep.subr.bf16.mxu0 0
          %1253 = vmatpush1.bf16.xpose.msra.mxu0 0
          %1254 = vmatprep.subr.bf16.mxu0 0
          %1255 = vmatpush1.bf16.xpose.msra.mxu0 0
          %1256 = vmatprep.subr.bf16.mxu0 0
          %1257 = vmatpush1.bf16.xpose.msra.mxu0 0
          %1258 = vmatprep.subr.bf16.mxu0 0
          %1259 = vmatpush1.bf16.xpose.msra.mxu0 0
          %1260 = vmatprep.mubr.bf16.mxu0 0
          %1261 = vmatmul.mubr.bf16.gmra.mrb[0].mxu0 %v1223
          %v1262 = vpop.f32.mrb[0].mxu0
          %v1263 = vadd.f32 0.0, %v1262
          %v1264 = vpop.f32.mrb[0].mxu0
          %v1265 = vpop.f32.mrb[0].mxu0
          %v1266 = vpop.f32.mrb[0].mxu0
          %1267 = vdwg.mxu0
          %v1269 = vsel %vm1221, %v1180, 0
          %v1272 = vsel %vm1221, %v1212, 0
          %1274 = vmatprep.subr.bf16.mxu0 0
          %1275 = vmatpush1.bf16.xpose.msra.mxu0 %v1272
          %1276 = vmatprep.subr.bf16.mxu0 0
          %1277 = vmatpush1.bf16.xpose.msra.mxu0 0
          %1278 = vmatprep.subr.bf16.mxu0 0
          %1279 = vmatpush1.bf16.xpose.msra.mxu0 0
          %1280 = vmatprep.subr.bf16.mxu0 0
          %1281 = vmatpush1.bf16.xpose.msra.mxu0 0
          %1282 = vmatprep.subr.bf16.mxu0 0
          %1283 = vmatpush1.bf16.xpose.msra.mxu0 0
          %1284 = vmatprep.subr.bf16.mxu0 0
          %1285 = vmatpush1.bf16.xpose.msra.mxu0 0
          %1286 = vmatprep.subr.bf16.mxu0 0
          %1287 = vmatpush1.bf16.xpose.msra.mxu0 0
          %1288 = vmatprep.subr.bf16.mxu0 0
          %1289 = vmatpush1.bf16.xpose.msra.mxu0 0
          %1290 = vmatprep.subr.bf16.mxu0 0
          %1291 = vmatpush1.bf16.xpose.msra.mxu0 0
          %1292 = vmatprep.subr.bf16.mxu0 0
          %1293 = vmatpush1.bf16.xpose.msra.mxu0 0
          %1294 = vmatprep.subr.bf16.mxu0 0
          %1295 = vmatpush1.bf16.xpose.msra.mxu0 0
          %1296 = vmatprep.subr.bf16.mxu0 0
          %1297 = vmatpush1.bf16.xpose.msra.mxu0 0
          %1298 = vmatprep.subr.bf16.mxu0 0
          %1299 = vmatpush1.bf16.xpose.msra.mxu0 0
          %1300 = vmatprep.subr.bf16.mxu0 0
          %1301 = vmatpush1.bf16.xpose.msra.mxu0 0
          %1302 = vmatprep.subr.bf16.mxu0 0
          %1303 = vmatpush1.bf16.xpose.msra.mxu0 0
          %1304 = vmatprep.subr.bf16.mxu0 0
          %1305 = vmatpush1.bf16.xpose.msra.mxu0 0
          %1306 = vmatprep.mubr.bf16.mxu0 0
          %1307 = vmatmul.mubr.bf16.gmra.mrb[0].mxu0 %v1269
          %v1308 = vpop.f32.mrb[0].mxu0
          %v1309 = vadd.f32 0.0, %v1308
          %v1310 = vpop.f32.mrb[0].mxu0
          %v1311 = vpop.f32.mrb[0].mxu0
          %v1312 = vpop.f32.mrb[0].mxu0
          %1313 = vdwg.mxu0
          %v1315 = vsel %vm1221, %v1181, 0
          %v1318 = vsel %vm1221, %v1213, 0
          %1320 = vmatprep.subr.bf16.mxu0 0
          %1321 = vmatpush1.bf16.xpose.msra.mxu0 %v1318
          %1322 = vmatprep.subr.bf16.mxu0 0
          %1323 = vmatpush1.bf16.xpose.msra.mxu0 0
          %1324 = vmatprep.subr.bf16.mxu0 0
          %1325 = vmatpush1.bf16.xpose.msra.mxu0 0
          %1326 = vmatprep.subr.bf16.mxu0 0
          %1327 = vmatpush1.bf16.xpose.msra.mxu0 0
          %1328 = vmatprep.subr.bf16.mxu0 0
          %1329 = vmatpush1.bf16.xpose.msra.mxu0 0
          %1330 = vmatprep.subr.bf16.mxu0 0
          %1331 = vmatpush1.bf16.xpose.msra.mxu0 0
          %1332 = vmatprep.subr.bf16.mxu0 0
          %1333 = vmatpush1.bf16.xpose.msra.mxu0 0
          %1334 = vmatprep.subr.bf16.mxu0 0
          %1335 = vmatpush1.bf16.xpose.msra.mxu0 0
          %1336 = vmatprep.subr.bf16.mxu0 0
          %1337 = vmatpush1.bf16.xpose.msra.mxu0 0
          %1338 = vmatprep.subr.bf16.mxu0 0
          %1339 = vmatpush1.bf16.xpose.msra.mxu0 0
          %1340 = vmatprep.subr.bf16.mxu0 0
          %1341 = vmatpush1.bf16.xpose.msra.mxu0 0
          %1342 = vmatprep.subr.bf16.mxu0 0
          %1343 = vmatpush1.bf16.xpose.msra.mxu0 0
          %1344 = vmatprep.subr.bf16.mxu0 0
          %1345 = vmatpush1.bf16.xpose.msra.mxu0 0
          %1346 = vmatprep.subr.bf16.mxu0 0
          %1347 = vmatpush1.bf16.xpose.msra.mxu0 0
          %1348 = vmatprep.subr.bf16.mxu0 0
          %1349 = vmatpush1.bf16.xpose.msra.mxu0 0
          %1350 = vmatprep.subr.bf16.mxu0 0
          %1351 = vmatpush1.bf16.xpose.msra.mxu0 0
          %1352 = vmatprep.mubr.bf16.mxu0 0
          %1353 = vmatmul.mubr.bf16.gmra.mrb[0].mxu0 %v1315
          %v1354 = vpop.f32.mrb[0].mxu0
          %v1355 = vadd.f32 0.0, %v1354
          %v1356 = vpop.f32.mrb[0].mxu0
          %v1357 = vpop.f32.mrb[0].mxu0
          %v1358 = vpop.f32.mrb[0].mxu0
          %1359 = vdwg.mxu0
          %v1361 = vsel %vm1221, %v1182, 0
          %v1364 = vsel %vm1221, %v1214, 0
          %1366 = vmatprep.subr.bf16.mxu0 0
          %1367 = vmatpush1.bf16.xpose.msra.mxu0 %v1364
          %1368 = vmatprep.subr.bf16.mxu0 0
          %1369 = vmatpush1.bf16.xpose.msra.mxu0 0
          %1370 = vmatprep.subr.bf16.mxu0 0
          %1371 = vmatpush1.bf16.xpose.msra.mxu0 0
          %1372 = vmatprep.subr.bf16.mxu0 0
          %1373 = vmatpush1.bf16.xpose.msra.mxu0 0
          %1374 = vmatprep.subr.bf16.mxu0 0
          %1375 = vmatpush1.bf16.xpose.msra.mxu0 0
          %1376 = vmatprep.subr.bf16.mxu0 0
          %1377 = vmatpush1.bf16.xpose.msra.mxu0 0
          %1378 = vmatprep.subr.bf16.mxu0 0
          %1379 = vmatpush1.bf16.xpose.msra.mxu0 0
          %1380 = vmatprep.subr.bf16.mxu0 0
          %1381 = vmatpush1.bf16.xpose.msra.mxu0 0
          %1382 = vmatprep.subr.bf16.mxu0 0
          %1383 = vmatpush1.bf16.xpose.msra.mxu0 0
          %1384 = vmatprep.subr.bf16.mxu0 0
          %1385 = vmatpush1.bf16.xpose.msra.mxu0 0
          %1386 = vmatprep.subr.bf16.mxu0 0
          %1387 = vmatpush1.bf16.xpose.msra.mxu0 0
          %1388 = vmatprep.subr.bf16.mxu0 0
          %1389 = vmatpush1.bf16.xpose.msra.mxu0 0
          %1390 = vmatprep.subr.bf16.mxu0 0
          %1391 = vmatpush1.bf16.xpose.msra.mxu0 0
          %1392 = vmatprep.subr.bf16.mxu0 0
          %1393 = vmatpush1.bf16.xpose.msra.mxu0 0
          %1394 = vmatprep.subr.bf16.mxu0 0
          %1395 = vmatpush1.bf16.xpose.msra.mxu0 0
          %1396 = vmatprep.subr.bf16.mxu0 0
          %1397 = vmatpush1.bf16.xpose.msra.mxu0 0
          %1398 = vmatprep.mubr.bf16.mxu0 0
          %1399 = vmatmul.mubr.bf16.gmra.mrb[0].mxu0 %v1361
          %v1400 = vpop.f32.mrb[0].mxu0
          %v1401 = vadd.f32 0.0, %v1400
          %v1402 = vpop.f32.mrb[0].mxu0
          %v1403 = vpop.f32.mrb[0].mxu0
          %v1404 = vpop.f32.mrb[0].mxu0
          %1405 = vdwg.mxu0
          %v1406 = vmul.f32 %v1263, 0.35355338
          %v1407 = vmul.f32 %v1309, 0.35355338
          %v1408 = vmul.f32 %v1355, 0.35355338
          %v1409 = vmul.f32 %v1401, 0.35355338
          %v1410 = vlaneseq
          %v1411 = vand.u32 %v1410, 127
          %v1412 = vstv %s1206
          %v1413 = vadd.s32 %v1412, %v1411
          %vm1414 = vcmp.gt.s32.totalorder %v1413, %v1186
          %v1415 = vsel %vm1414, 1, 0
          %vm1416 = vcmp.eq.s32.totalorder %v1415, 1
          %v1417 = vsel %vm1416, -1e+30, %v1406
          %v1418 = vsel %vm1416, -1e+30, %v1407
          %v1419 = vsel %vm1416, -1e+30, %v1408
          %v1420 = vsel %vm1416, -1e+30, %v1409
          %v1421 = vsel %vm1221, %v1417, -inf
          %1422 = vmax.xlane.f32.xlu0 %v1421
          %v1423 = vpop.xlane.xlu0 %1422
          %v1424 = vsel %vm1221, %v1418, -inf
          %1425 = vmax.xlane.f32.xlu0 %v1424
          %v1426 = vpop.xlane.xlu0 %1425
          %v1427 = vsel %vm1221, %v1419, -inf
          %1428 = vmax.xlane.f32.xlu0 %v1427
          %v1429 = vpop.xlane.xlu0 %1428
          %v1430 = vsel %vm1221, %v1420, -inf
          %1431 = vmax.xlane.f32.xlu0 %v1430
          %v1432 = vpop.xlane.xlu0 %1431
          %v1433 = vmax.f32 %v1194, %v1423
          %v1434 = vmax.f32 %v1195, %v1426
          %v1435 = vmax.f32 %v1196, %v1429
          %v1436 = vmax.f32 %v1197, %v1432
          %v1437 = vsub.f32 %v1194, %v1433
          %v1438 = vsub.f32 %v1195, %v1434
          %v1439 = vsub.f32 %v1196, %v1435
          %v1440 = vsub.f32 %v1197, %v1436
          %v1441 = vmul.f32 %v1437, 1.442695
          %v1442 = vpow.pop %v1441
          %v1443 = vmul.f32 %v1438, 1.442695
          %v1444 = vpow.pop %v1443
          %v1445 = vmul.f32 %v1439, 1.442695
          %v1446 = vpow.pop %v1445
          %v1447 = vmul.f32 %v1440, 1.442695
          %v1448 = vpow.pop %v1447
          %v1449 = vsub.f32 %v1417, %v1433
          %v1450 = vsub.f32 %v1418, %v1434
          %v1451 = vsub.f32 %v1419, %v1435
          %v1452 = vsub.f32 %v1420, %v1436
          %v1453 = vmul.f32 %v1449, 1.442695
          %v1454 = vpow.pop %v1453
          %v1455 = vmul.f32 %v1450, 1.442695
          %v1456 = vpow.pop %v1455
          %v1457 = vmul.f32 %v1451, 1.442695
          %v1458 = vpow.pop %v1457
          %v1459 = vmul.f32 %v1452, 1.442695
          %v1460 = vpow.pop %v1459
          %v1461 = vmul.f32 %v1442, %v1198
          %v1462 = vmul.f32 %v1444, %v1199
          %v1463 = vmul.f32 %v1446, %v1200
          %v1464 = vmul.f32 %v1448, %v1201
          %v1465 = vsel %vm1221, %v1454, 0.0
          %1466 = vadd.xlane.f32.xlu0 %v1465
          %v1467 = vpop.xlane.xlu0 %1466
          %v1468 = vsel %vm1221, %v1456, 0.0
          %1469 = vadd.xlane.f32.xlu0 %v1468
          %v1470 = vpop.xlane.xlu0 %1469
          %v1471 = vsel %vm1221, %v1458, 0.0
          %1472 = vadd.xlane.f32.xlu0 %v1471
          %v1473 = vpop.xlane.xlu0 %1472
          %v1474 = vsel %vm1221, %v1460, 0.0
          %1475 = vadd.xlane.f32.xlu0 %v1474
          %v1476 = vpop.xlane.xlu0 %1475
          %v1477 = vadd.f32 %v1461, %v1467
          %v1478 = vadd.f32 %v1462, %v1470
          %v1479 = vadd.f32 %v1463, %v1473
          %v1480 = vadd.f32 %v1464, %v1476
          %v1481 = vmul.f32 %v1442, %v1202
          %v1482 = vmul.f32 %v1444, %v1203
          %v1483 = vmul.f32 %v1446, %v1204
          %v1484 = vmul.f32 %v1448, %v1205
          %v1485 = vpack.c.bf16 %v1454, %v1454
          %v1486 = vpack.c.bf16 %v1456, %v1456
          %v1487 = vpack.c.bf16 %v1458, %v1458
          %v1488 = vpack.c.bf16 %v1460, %v1460
          %v1490 = vsel %vm1221, %v1485, 0
          %vm1492 = vcmask 1043456
          %v1494 = vsel %vm1492, %v1217, 0
          %1496 = vmatprep.subr.bf16.mxu0 0
          %1497 = vmatpush1.bf16.msra.mxu0 %v1494
          %1498 = vmatprep.subr.bf16.mxu0 0
          %1499 = vmatpush1.bf16.msra.mxu0 0
          %1500 = vmatprep.subr.bf16.mxu0 0
          %1501 = vmatpush1.bf16.msra.mxu0 0
          %1502 = vmatprep.subr.bf16.mxu0 0
          %1503 = vmatpush1.bf16.msra.mxu0 0
          %1504 = vmatprep.subr.bf16.mxu0 0
          %1505 = vmatpush1.bf16.msra.mxu0 0
          %1506 = vmatprep.subr.bf16.mxu0 0
          %1507 = vmatpush1.bf16.msra.mxu0 0
          %1508 = vmatprep.subr.bf16.mxu0 0
          %1509 = vmatpush1.bf16.msra.mxu0 0
          %1510 = vmatprep.subr.bf16.mxu0 0
          %1511 = vmatpush1.bf16.msra.mxu0 0
          %1512 = vmatprep.subr.bf16.mxu0 0
          %1513 = vmatpush1.bf16.msra.mxu0 0
          %1514 = vmatprep.subr.bf16.mxu0 0
          %1515 = vmatpush1.bf16.msra.mxu0 0
          %1516 = vmatprep.subr.bf16.mxu0 0
          %1517 = vmatpush1.bf16.msra.mxu0 0
          %1518 = vmatprep.subr.bf16.mxu0 0
          %1519 = vmatpush1.bf16.msra.mxu0 0
          %1520 = vmatprep.subr.bf16.mxu0 0
          %1521 = vmatpush1.bf16.msra.mxu0 0
          %1522 = vmatprep.subr.bf16.mxu0 0
          %1523 = vmatpush1.bf16.msra.mxu0 0
          %1524 = vmatprep.subr.bf16.mxu0 0
          %1525 = vmatpush1.bf16.msra.mxu0 0
          %1526 = vmatprep.subr.bf16.mxu0 0
          %1527 = vmatpush1.bf16.msra.mxu0 0
          %1528 = vmatprep.mubr.bf16.mxu0 0
          %1529 = vmatmul.mubr.bf16.gmra.mrb[0].mxu0 %v1490
          %v1530 = vpop.f32.mrb[0].mxu0
          %v1531 = vadd.f32 0.0, %v1530
          %v1532 = vpop.f32.mrb[0].mxu0
          %v1533 = vpop.f32.mrb[0].mxu0
          %v1534 = vpop.f32.mrb[0].mxu0
          %1535 = vdwg.mxu0
          %v1537 = vsel %vm1221, %v1486, 0
          %v1540 = vsel %vm1492, %v1218, 0
          %1542 = vmatprep.subr.bf16.mxu0 0
          %1543 = vmatpush1.bf16.msra.mxu0 %v1540
          %1544 = vmatprep.subr.bf16.mxu0 0
          %1545 = vmatpush1.bf16.msra.mxu0 0
          %1546 = vmatprep.subr.bf16.mxu0 0
          %1547 = vmatpush1.bf16.msra.mxu0 0
          %1548 = vmatprep.subr.bf16.mxu0 0
          %1549 = vmatpush1.bf16.msra.mxu0 0
          %1550 = vmatprep.subr.bf16.mxu0 0
          %1551 = vmatpush1.bf16.msra.mxu0 0
          %1552 = vmatprep.subr.bf16.mxu0 0
          %1553 = vmatpush1.bf16.msra.mxu0 0
          %1554 = vmatprep.subr.bf16.mxu0 0
          %1555 = vmatpush1.bf16.msra.mxu0 0
          %1556 = vmatprep.subr.bf16.mxu0 0
          %1557 = vmatpush1.bf16.msra.mxu0 0
          %1558 = vmatprep.subr.bf16.mxu0 0
          %1559 = vmatpush1.bf16.msra.mxu0 0
          %1560 = vmatprep.subr.bf16.mxu0 0
          %1561 = vmatpush1.bf16.msra.mxu0 0
          %1562 = vmatprep.subr.bf16.mxu0 0
          %1563 = vmatpush1.bf16.msra.mxu0 0
          %1564 = vmatprep.subr.bf16.mxu0 0
          %1565 = vmatpush1.bf16.msra.mxu0 0
          %1566 = vmatprep.subr.bf16.mxu0 0
          %1567 = vmatpush1.bf16.msra.mxu0 0
          %1568 = vmatprep.subr.bf16.mxu0 0
          %1569 = vmatpush1.bf16.msra.mxu0 0
          %1570 = vmatprep.subr.bf16.mxu0 0
          %1571 = vmatpush1.bf16.msra.mxu0 0
          %1572 = vmatprep.subr.bf16.mxu0 0
          %1573 = vmatpush1.bf16.msra.mxu0 0
          %1574 = vmatprep.mubr.bf16.mxu0 0
          %1575 = vmatmul.mubr.bf16.gmra.mrb[0].mxu0 %v1537
          %v1576 = vpop.f32.mrb[0].mxu0
          %v1577 = vadd.f32 0.0, %v1576
          %v1578 = vpop.f32.mrb[0].mxu0
          %v1579 = vpop.f32.mrb[0].mxu0
          %v1580 = vpop.f32.mrb[0].mxu0
          %1581 = vdwg.mxu0
          %v1583 = vsel %vm1221, %v1487, 0
          %v1586 = vsel %vm1492, %v1219, 0
          %1588 = vmatprep.subr.bf16.mxu0 0
          %1589 = vmatpush1.bf16.msra.mxu0 %v1586
          %1590 = vmatprep.subr.bf16.mxu0 0
          %1591 = vmatpush1.bf16.msra.mxu0 0
          %1592 = vmatprep.subr.bf16.mxu0 0
          %1593 = vmatpush1.bf16.msra.mxu0 0
          %1594 = vmatprep.subr.bf16.mxu0 0
          %1595 = vmatpush1.bf16.msra.mxu0 0
          %1596 = vmatprep.subr.bf16.mxu0 0
          %1597 = vmatpush1.bf16.msra.mxu0 0
          %1598 = vmatprep.subr.bf16.mxu0 0
          %1599 = vmatpush1.bf16.msra.mxu0 0
          %1600 = vmatprep.subr.bf16.mxu0 0
          %1601 = vmatpush1.bf16.msra.mxu0 0
          %1602 = vmatprep.subr.bf16.mxu0 0
          %1603 = vmatpush1.bf16.msra.mxu0 0
          %1604 = vmatprep.subr.bf16.mxu0 0
          %1605 = vmatpush1.bf16.msra.mxu0 0
          %1606 = vmatprep.subr.bf16.mxu0 0
          %1607 = vmatpush1.bf16.msra.mxu0 0
          %1608 = vmatprep.subr.bf16.mxu0 0
          %1609 = vmatpush1.bf16.msra.mxu0 0
          %1610 = vmatprep.subr.bf16.mxu0 0
          %1611 = vmatpush1.bf16.msra.mxu0 0
          %1612 = vmatprep.subr.bf16.mxu0 0
          %1613 = vmatpush1.bf16.msra.mxu0 0
          %1614 = vmatprep.subr.bf16.mxu0 0
          %1615 = vmatpush1.bf16.msra.mxu0 0
          %1616 = vmatprep.subr.bf16.mxu0 0
          %1617 = vmatpush1.bf16.msra.mxu0 0
          %1618 = vmatprep.subr.bf16.mxu0 0
          %1619 = vmatpush1.bf16.msra.mxu0 0
          %1620 = vmatprep.mubr.bf16.mxu0 0
          %1621 = vmatmul.mubr.bf16.gmra.mrb[0].mxu0 %v1583
          %v1622 = vpop.f32.mrb[0].mxu0
          %v1623 = vadd.f32 0.0, %v1622
          %v1624 = vpop.f32.mrb[0].mxu0
          %v1625 = vpop.f32.mrb[0].mxu0
          %v1626 = vpop.f32.mrb[0].mxu0
          %1627 = vdwg.mxu0
          %v1629 = vsel %vm1221, %v1488, 0
          %v1632 = vsel %vm1492, %v1220, 0
          %1634 = vmatprep.subr.bf16.mxu0 0
          %1635 = vmatpush1.bf16.msra.mxu0 %v1632
          %1636 = vmatprep.subr.bf16.mxu0 0
          %1637 = vmatpush1.bf16.msra.mxu0 0
          %1638 = vmatprep.subr.bf16.mxu0 0
          %1639 = vmatpush1.bf16.msra.mxu0 0
          %1640 = vmatprep.subr.bf16.mxu0 0
          %1641 = vmatpush1.bf16.msra.mxu0 0
          %1642 = vmatprep.subr.bf16.mxu0 0
          %1643 = vmatpush1.bf16.msra.mxu0 0
          %1644 = vmatprep.subr.bf16.mxu0 0
          %1645 = vmatpush1.bf16.msra.mxu0 0
          %1646 = vmatprep.subr.bf16.mxu0 0
          %1647 = vmatpush1.bf16.msra.mxu0 0
          %1648 = vmatprep.subr.bf16.mxu0 0
          %1649 = vmatpush1.bf16.msra.mxu0 0
          %1650 = vmatprep.subr.bf16.mxu0 0
          %1651 = vmatpush1.bf16.msra.mxu0 0
          %1652 = vmatprep.subr.bf16.mxu0 0
          %1653 = vmatpush1.bf16.msra.mxu0 0
          %1654 = vmatprep.subr.bf16.mxu0 0
          %1655 = vmatpush1.bf16.msra.mxu0 0
          %1656 = vmatprep.subr.bf16.mxu0 0
          %1657 = vmatpush1.bf16.msra.mxu0 0
          %1658 = vmatprep.subr.bf16.mxu0 0
          %1659 = vmatpush1.bf16.msra.mxu0 0
          %1660 = vmatprep.subr.bf16.mxu0 0
          %1661 = vmatpush1.bf16.msra.mxu0 0
          %1662 = vmatprep.subr.bf16.mxu0 0
          %1663 = vmatpush1.bf16.msra.mxu0 0
          %1664 = vmatprep.subr.bf16.mxu0 0
          %1665 = vmatpush1.bf16.msra.mxu0 0
          %1666 = vmatprep.mubr.bf16.mxu0 0
          %1667 = vmatmul.mubr.bf16.gmra.mrb[0].mxu0 %v1629
          %v1668 = vpop.f32.mrb[0].mxu0
          %v1669 = vadd.f32 0.0, %v1668
          %v1670 = vpop.f32.mrb[0].mxu0
          %v1671 = vpop.f32.mrb[0].mxu0
          %v1672 = vpop.f32.mrb[0].mxu0
          %1673 = vdwg.mxu0
          %v1674 = vadd.f32 %v1481, %v1531
          %v1675 = vadd.f32 %v1482, %v1577
          %v1676 = vadd.f32 %v1483, %v1623
          %v1677 = vadd.f32 %v1484, %v1669
        $region97: #{tpu_custom_call.1} parent=83 // loop_footer
          %s1191 = sadd.s32 %s1189, 1
        $region98: #{tpu_custom_call.1} parent=83 // loop_footer_branch
          %1188 = sbr.rel target = $region94
        $region99: #{tpu_custom_call.1} parent=83 // loop_exit
          _
        %v1678 = vrcp.pop %v1198
        %v1679 = vrcp.pop %v1199
        %v1680 = vrcp.pop %v1200
        %v1681 = vrcp.pop %v1201
        %v1682 = vmul.f32 %v1202, %v1678
        %v1683 = vmul.f32 %v1203, %v1679
        %v1684 = vmul.f32 %v1204, %v1680
        %v1685 = vmul.f32 %v1205, %v1681
        %v1686 = vcombine.low %v1682, %v1684
        %v1687 = vcombine.high %v1682, %v1684
        %v1689 = vunpack.c.l.s4 1983009808
        %v1690 = vunpack.c.0.s8 %v1689
        %v1691 = vlaneseq
        %v1692 = vshrl.u32 %v1691, 7
        %v1693 = vsub.s32 %v1690, %v1692
        %v1694 = vrot.slane %v1686, %v1693
        %v1696 = vunpack.c.l.s4 1983009808
        %v1697 = vunpack.c.0.s8 %v1696
        %v1698 = vlaneseq
        %v1699 = vshrl.u32 %v1698, 7
        %v1700 = vsub.s32 %v1697, %v1699
        %v1701 = vrot.slane %v1687, %v1700
        %v1702 = vcombine.low %v1683, %v1685
        %v1703 = vcombine.high %v1683, %v1685
        %v1705 = vunpack.c.l.s4 1983009808
        %v1706 = vunpack.c.0.s8 %v1705
        %v1707 = vlaneseq
        %v1708 = vshrl.u32 %v1707, 7
        %v1709 = vsub.s32 %v1706, %v1708
        %v1710 = vrot.slane %v1702, %v1709
        %v1712 = vunpack.c.l.s4 1983009808
        %v1713 = vunpack.c.0.s8 %v1712
        %v1714 = vlaneseq
        %v1715 = vshrl.u32 %v1714, 7
        %v1716 = vsub.s32 %v1713, %v1715
        %v1717 = vrot.slane %v1703, %v1716
        %v1718 = vcombine.low %v1694, %v1710
        %v1719 = vcombine.high %v1694, %v1710
        %v1721 = vunpack.c.l.s4 1934713408
        %v1722 = vunpack.c.0.s8 %v1721
        %v1723 = vlaneseq
        %v1724 = vshrl.u32 %v1723, 7
        %v1725 = vsub.s32 %v1722, %v1724
        %v1726 = vrot.slane %v1718, %v1725
        %v1728 = vunpack.c.l.s4 1934713408
        %v1729 = vunpack.c.0.s8 %v1728
        %v1730 = vlaneseq
        %v1731 = vshrl.u32 %v1730, 7
        %v1732 = vsub.s32 %v1729, %v1731
        %v1733 = vrot.slane %v1719, %v1732
        %v1734 = vcombine.low %v1701, %v1717
        %v1735 = vcombine.high %v1701, %v1717
        %v1737 = vunpack.c.l.s4 1934713408
        %v1738 = vunpack.c.0.s8 %v1737
        %v1739 = vlaneseq
        %v1740 = vshrl.u32 %v1739, 7
        %v1741 = vsub.s32 %v1738, %v1740
        %v1742 = vrot.slane %v1734, %v1741
        %v1744 = vunpack.c.l.s4 1934713408
        %v1745 = vunpack.c.0.s8 %v1744
        %v1746 = vlaneseq
        %v1747 = vshrl.u32 %v1746, 7
        %v1748 = vsub.s32 %v1745, %v1747
        %v1749 = vrot.slane %v1735, %v1748
        %v1750 = vcombine.high %v1726, 0.0
        %v1751 = vcombine.high %v1733, 0.0
        %v1752 = vcombine.high %v1742, 0.0
        %v1753 = vcombine.high %v1749, 0.0
        %v1754 = vcombine.low %v1726, %v1733
        %v1756 = vunpack.c.l.s4 1983009808
        %v1757 = vunpack.c.0.s8 %v1756
        %v1758 = vlaneseq
        %v1759 = vshrl.u32 %v1758, 7
        %v1760 = vsub.s32 %v1757, %v1759
        %v1761 = vrot.slane %v1754, %v1760
        %v1762 = vcombine.low %v1750, %v1751
        %v1764 = vunpack.c.l.s4 1983009808
        %v1765 = vunpack.c.0.s8 %v1764
        %v1766 = vlaneseq
        %v1767 = vshrl.u32 %v1766, 7
        %v1768 = vsub.s32 %v1765, %v1767
        %v1769 = vrot.slane %v1762, %v1768
        %v1770 = vcombine.low %v1742, %v1749
        %v1772 = vunpack.c.l.s4 1983009808
        %v1773 = vunpack.c.0.s8 %v1772
        %v1774 = vlaneseq
        %v1775 = vshrl.u32 %v1774, 7
        %v1776 = vsub.s32 %v1773, %v1775
        %v1777 = vrot.slane %v1770, %v1776
        %v1778 = vcombine.low %v1752, %v1753
        %v1780 = vunpack.c.l.s4 1983009808
        %v1781 = vunpack.c.0.s8 %v1780
        %v1782 = vlaneseq
        %v1783 = vshrl.u32 %v1782, 7
        %v1784 = vsub.s32 %v1781, %v1783
        %v1785 = vrot.slane %v1778, %v1784
        %v1786 = vcombine.low %v1761, %v1769
        %v1787 = vcombine.high %v1761, %v1769
        %v1789 = vunpack.c.l.s4 1934713408
        %v1790 = vunpack.c.0.s8 %v1789
        %v1791 = vlaneseq
        %v1792 = vshrl.u32 %v1791, 7
        %v1793 = vsub.s32 %v1790, %v1792
        %v1794 = vrot.slane %v1786, %v1793
        %v1796 = vunpack.c.l.s4 1934713408
        %v1797 = vunpack.c.0.s8 %v1796
        %v1798 = vlaneseq
        %v1799 = vshrl.u32 %v1798, 7
        %v1800 = vsub.s32 %v1797, %v1799
        %v1801 = vrot.slane %v1787, %v1800
        %v1802 = vcombine.low %v1777, %v1785
        %v1803 = vcombine.high %v1777, %v1785
        %v1805 = vunpack.c.l.s4 1934713408
        %v1806 = vunpack.c.0.s8 %v1805
        %v1807 = vlaneseq
        %v1808 = vshrl.u32 %v1807, 7
        %v1809 = vsub.s32 %v1806, %v1808
        %v1810 = vrot.slane %v1802, %v1809
        %v1812 = vunpack.c.l.s4 1934713408
        %v1813 = vunpack.c.0.s8 %v1812
        %v1814 = vlaneseq
        %v1815 = vshrl.u32 %v1814, 7
        %v1816 = vsub.s32 %v1813, %v1815
        %v1817 = vrot.slane %v1803, %v1816
        %v1818 = vcombine.low %v1794, %v1810
        %v1819 = vcombine.high %v1794, %v1810
        %v1820 = vcombine.low %v1801, %v1817
        %v1821 = vcombine.high %v1801, %v1817
        %1823 = vrot.lane.b32.xlu0 %v1819, 8
        %v1824 = vpop.permute.xlu0 %1823
        %1827 = vrot.lane.b32.xlu0 %v1820, 16
        %v1828 = vpop.permute.xlu0 %1827
        %1831 = vrot.lane.b32.xlu0 %v1821, 24
        %v1832 = vpop.permute.xlu0 %1831
        %vm1834 = vcmask 64512
        %v1835 = vsel %vm1834, %v1818, %v1824
        %vm1836 = vcmask 130048
        %v1837 = vsel %vm1836, %v1835, %v1828
        %vm1838 = vcmask 195584
        %v1839 = vsel %vm1838, %v1837, %v1832
        %v1840 = vpack.c.bf16 %v1839, %v1839
        %v1841 = vld [vmem:[%s6] sm:$0xf]
        %v1842 = vld [vmem:[%s6 + $0x4] sm:$0xf]
        %v1843 = vld [vmem:[%s6 + $0x8] sm:$0xf]
        %v1844 = vld [vmem:[%s6 + $0xc] sm:$0xf]
        %v1845 = vld [vmem:[%s7] sm:$0x1]
        %v1847 = vlaneseq
        %v1848 = vshrl.u32 %v1847, 7
        %v1849 = vsub.s32 0, %v1848
        %v1850 = vrot.slane %v1845, %v1849
        %v1856 = vunpack.c.l.b16 %v1841
        %v1857 = vunpack.c.l.b16 %v1842
        %v1858 = vunpack.c.l.b16 %v1843
        %v1859 = vunpack.c.l.b16 %v1844
        %v1860 = vpack.c.b16 %v1857, %v1856
        %v1861 = vpack.c.b16 %v1859, %v1858
        %v1865 = vsel %vm989, %v1840, 0
        %1867 = vmatprep.subr.bf16.mxu0 0
        %1868 = vmatpush1.bf16.msra.mxu0 %v1860
        %1869 = vmatprep.subr.bf16.mxu0 0
        %1870 = vmatpush1.bf16.msra.mxu0 %v1861
        %1871 = vmatprep.subr.bf16.mxu0 0
        %1872 = vmatpush1.bf16.msra.mxu0 0
        %1873 = vmatprep.subr.bf16.mxu0 0
        %1874 = vmatpush1.bf16.msra.mxu0 0
        %1875 = vmatprep.subr.bf16.mxu0 0
        %1876 = vmatpush1.bf16.msra.mxu0 0
        %1877 = vmatprep.subr.bf16.mxu0 0
        %1878 = vmatpush1.bf16.msra.mxu0 0
        %1879 = vmatprep.subr.bf16.mxu0 0
        %1880 = vmatpush1.bf16.msra.mxu0 0
        %1881 = vmatprep.subr.bf16.mxu0 0
        %1882 = vmatpush1.bf16.msra.mxu0 0
        %1883 = vmatprep.subr.bf16.mxu0 0
        %1884 = vmatpush1.bf16.msra.mxu0 0
        %1885 = vmatprep.subr.bf16.mxu0 0
        %1886 = vmatpush1.bf16.msra.mxu0 0
        %1887 = vmatprep.subr.bf16.mxu0 0
        %1888 = vmatpush1.bf16.msra.mxu0 0
        %1889 = vmatprep.subr.bf16.mxu0 0
        %1890 = vmatpush1.bf16.msra.mxu0 0
        %1891 = vmatprep.subr.bf16.mxu0 0
        %1892 = vmatpush1.bf16.msra.mxu0 0
        %1893 = vmatprep.subr.bf16.mxu0 0
        %1894 = vmatpush1.bf16.msra.mxu0 0
        %1895 = vmatprep.subr.bf16.mxu0 0
        %1896 = vmatpush1.bf16.msra.mxu0 0
        %1897 = vmatprep.subr.bf16.mxu0 0
        %1898 = vmatpush1.bf16.msra.mxu0 0
        %1899 = vmatprep.mubr.bf16.mxu0 0
        %1900 = vmatmul.mubr.bf16.gmra.mrb[0].mxu0 %v1865
        %v1901 = vpop.f32.mrb[0].mxu0
        %v1902 = vadd.f32 %v1850, %v1901
        %v1903 = vpop.f32.mrb[0].mxu0
        %v1904 = vpop.f32.mrb[0].mxu0
        %v1905 = vpop.f32.mrb[0].mxu0
        %1906 = vdwg.mxu0
        %v1907 = vadd.f32 %v964, %v1902
        %v1908 = vld [vmem:[%s8] sm:$0x1]
        %v1909 = vld [vmem:[%s9] sm:$0x1]
        %v1910 = vsel %vm989, %v1907, 0.0
        %1911 = vadd.xlane.f32.xlu0 %v1910
        %v1912 = vpop.xlane.xlu0 %1911
        %v1913 = vrcp.pop 32.0
        %v1914 = vmul.f32 %v1912, %v1913
        %v1915 = vsub.f32 %v1907, %v1914
        %v1916 = vmul.f32 %v1915, %v1915
        %v1917 = vsel %vm989, %v1916, 0.0
        %1918 = vadd.xlane.f32.xlu0 %v1917
        %v1919 = vpop.xlane.xlu0 %1918
        %v1920 = vmul.f32 %v1919, %v1913
        %v1921 = vadd.f32 %v1920, 1e-05
        %v1922 = vrsqrt.pop %v1921
        %v1923 = vmul.f32 %v1915, %v1922
        %v1925 = vlaneseq
        %v1926 = vshrl.u32 %v1925, 7
        %v1927 = vsub.s32 0, %v1926
        %v1928 = vrot.slane %v1908, %v1927
        %v1930 = vmul.f32 %v1923, %v1928
        %v1932 = vlaneseq
        %v1933 = vshrl.u32 %v1932, 7
        %v1934 = vsub.s32 0, %v1933
        %v1935 = vrot.slane %v1909, %v1934
        %v1937 = vadd.f32 %v1930, %v1935
        %v1938 = vpack.c.bf16 %v1937, %v1937
        %v1939 = vld [vmem:[%s10] sm:$0xf]
        %v1940 = vld [vmem:[%s10 + $0x4] sm:$0xf]
        %v1941 = vld [vmem:[%s10 + $0x8] sm:$0xf]
        %v1942 = vld [vmem:[%s10 + $0xc] sm:$0xf]
        %v1943 = vld [vmem:[%s11] sm:$0x1]
        %v1945 = vlaneseq
        %v1946 = vshrl.u32 %v1945, 7
        %v1947 = vsub.s32 0, %v1946
        %v1948 = vrot.slane %v1943, %v1947
        %v1954 = vunpack.c.l.b16 %v1939
        %v1955 = vunpack.c.l.b16 %v1940
        %v1956 = vunpack.c.l.b16 %v1941
        %v1957 = vunpack.c.l.b16 %v1942
        %v1958 = vpack.c.b16 %v1955, %v1954
        %v1959 = vpack.c.b16 %v1957, %v1956
        %v1963 = vsel %vm989, %v1938, 0
        %1965 = vmatprep.subr.bf16.mxu0 0
        %1966 = vmatpush1.bf16.msra.mxu0 %v1958
        %1967 = vmatprep.subr.bf16.mxu0 0
        %1968 = vmatpush1.bf16.msra.mxu0 %v1959
        %1969 = vmatprep.subr.bf16.mxu0 0
        %1970 = vmatpush1.bf16.msra.mxu0 0
        %1971 = vmatprep.subr.bf16.mxu0 0
        %1972 = vmatpush1.bf16.msra.mxu0 0
        %1973 = vmatprep.subr.bf16.mxu0 0
        %1974 = vmatpush1.bf16.msra.mxu0 0
        %1975 = vmatprep.subr.bf16.mxu0 0
        %1976 = vmatpush1.bf16.msra.mxu0 0
        %1977 = vmatprep.subr.bf16.mxu0 0
        %1978 = vmatpush1.bf16.msra.mxu0 0
        %1979 = vmatprep.subr.bf16.mxu0 0
        %1980 = vmatpush1.bf16.msra.mxu0 0
        %1981 = vmatprep.subr.bf16.mxu0 0
        %1982 = vmatpush1.bf16.msra.mxu0 0
        %1983 = vmatprep.subr.bf16.mxu0 0
        %1984 = vmatpush1.bf16.msra.mxu0 0
        %1985 = vmatprep.subr.bf16.mxu0 0
        %1986 = vmatpush1.bf16.msra.mxu0 0
        %1987 = vmatprep.subr.bf16.mxu0 0
        %1988 = vmatpush1.bf16.msra.mxu0 0
        %1989 = vmatprep.subr.bf16.mxu0 0
        %1990 = vmatpush1.bf16.msra.mxu0 0
        %1991 = vmatprep.subr.bf16.mxu0 0
        %1992 = vmatpush1.bf16.msra.mxu0 0
        %1993 = vmatprep.subr.bf16.mxu0 0
        %1994 = vmatpush1.bf16.msra.mxu0 0
        %1995 = vmatprep.subr.bf16.mxu0 0
        %1996 = vmatpush1.bf16.msra.mxu0 0
        %1997 = vmatprep.mubr.bf16.mxu0 0
        %1998 = vmatmul.mubr.bf16.gmra.mrb[0].mxu0 %v1963
        %v1999 = vpop.f32.mrb[0].mxu0
        %v2000 = vadd.f32 %v1948, %v1999
        %v2001 = vpop.f32.mrb[0].mxu0
        %v2002 = vpop.f32.mrb[0].mxu0
        %v2003 = vpop.f32.mrb[0].mxu0
        %2004 = vdwg.mxu0
        %v2005 = vmul.f32 %v2000, 0.5
        %v2006 = vrcp.pop 1.4142135
        %v2007 = vmul.f32 %v2000, %v2006
        %v2008 = verf.f32.pop %v2007
        %v2009 = vadd.f32 %v2008, 1.0
        %v2010 = vmul.f32 %v2005, %v2009
        %v2011 = vpack.c.bf16 %v2010, %v2010
        %v2012 = vld [vmem:[%s12] sm:$0xf]
        %v2013 = vld [vmem:[%s12 + $0x4] sm:$0xf]
        %v2014 = vld [vmem:[%s12 + $0x8] sm:$0xf]
        %v2015 = vld [vmem:[%s12 + $0xc] sm:$0xf]
        %v2016 = vld [vmem:[%s12 + $0x10] sm:$0xf]
        %v2017 = vld [vmem:[%s12 + $0x14] sm:$0xf]
        %v2018 = vld [vmem:[%s12 + $0x18] sm:$0xf]
        %v2019 = vld [vmem:[%s12 + $0x1c] sm:$0xf]
        %v2020 = vld [vmem:[%s12 + $0x20] sm:$0xf]
        %v2021 = vld [vmem:[%s12 + $0x24] sm:$0xf]
        %v2022 = vld [vmem:[%s12 + $0x28] sm:$0xf]
        %v2023 = vld [vmem:[%s12 + $0x2c] sm:$0xf]
        %v2024 = vld [vmem:[%s12 + $0x30] sm:$0xf]
        %v2025 = vld [vmem:[%s12 + $0x34] sm:$0xf]
        %v2026 = vld [vmem:[%s12 + $0x38] sm:$0xf]
        %v2027 = vld [vmem:[%s12 + $0x3c] sm:$0xf]
        %v2028 = vld [vmem:[%s13] sm:$0x1]
        %v2030 = vlaneseq
        %v2031 = vshrl.u32 %v2030, 7
        %v2032 = vsub.s32 0, %v2031
        %v2033 = vrot.slane %v2028, %v2032
        %v2051 = vunpack.c.l.b16 %v2012
        %v2052 = vunpack.c.l.b16 %v2013
        %v2053 = vunpack.c.l.b16 %v2014
        %v2054 = vunpack.c.l.b16 %v2015
        %v2055 = vunpack.c.l.b16 %v2016
        %v2056 = vunpack.c.l.b16 %v2017
        %v2057 = vunpack.c.l.b16 %v2018
        %v2058 = vunpack.c.l.b16 %v2019
        %v2059 = vunpack.c.l.b16 %v2020
        %v2060 = vunpack.c.l.b16 %v2021
        %v2061 = vunpack.c.l.b16 %v2022
        %v2062 = vunpack.c.l.b16 %v2023
        %v2063 = vunpack.c.l.b16 %v2024
        %v2064 = vunpack.c.l.b16 %v2025
        %v2065 = vunpack.c.l.b16 %v2026
        %v2066 = vunpack.c.l.b16 %v2027
        %v2067 = vpack.c.b16 %v2052, %v2051
        %v2068 = vpack.c.b16 %v2054, %v2053
        %v2069 = vpack.c.b16 %v2056, %v2055
        %v2070 = vpack.c.b16 %v2058, %v2057
        %v2071 = vpack.c.b16 %v2060, %v2059
        %v2072 = vpack.c.b16 %v2062, %v2061
        %v2073 = vpack.c.b16 %v2064, %v2063
        %v2074 = vpack.c.b16 %v2066, %v2065
        %2083 = vmatprep.subr.bf16.mxu0 0
        %2084 = vmatpush1.bf16.msra.mxu0 %v2067
        %2085 = vmatprep.subr.bf16.mxu0 0
        %2086 = vmatpush1.bf16.msra.mxu0 %v2068
        %2087 = vmatprep.subr.bf16.mxu0 0
        %2088 = vmatpush1.bf16.msra.mxu0 %v2069
        %2089 = vmatprep.subr.bf16.mxu0 0
        %2090 = vmatpush1.bf16.msra.mxu0 %v2070
        %2091 = vmatprep.subr.bf16.mxu0 0
        %2092 = vmatpush1.bf16.msra.mxu0 %v2071
        %2093 = vmatprep.subr.bf16.mxu0 0
        %2094 = vmatpush1.bf16.msra.mxu0 %v2072
        %2095 = vmatprep.subr.bf16.mxu0 0
        %2096 = vmatpush1.bf16.msra.mxu0 %v2073
        %2097 = vmatprep.subr.bf16.mxu0 0
        %2098 = vmatpush1.bf16.msra.mxu0 %v2074
        %2099 = vmatprep.subr.bf16.mxu0 0
        %2100 = vmatpush1.bf16.msra.mxu0 0
        %2101 = vmatprep.subr.bf16.mxu0 0
        %2102 = vmatpush1.bf16.msra.mxu0 0
        %2103 = vmatprep.subr.bf16.mxu0 0
        %2104 = vmatpush1.bf16.msra.mxu0 0
        %2105 = vmatprep.subr.bf16.mxu0 0
        %2106 = vmatpush1.bf16.msra.mxu0 0
        %2107 = vmatprep.subr.bf16.mxu0 0
        %2108 = vmatpush1.bf16.msra.mxu0 0
        %2109 = vmatprep.subr.bf16.mxu0 0
        %2110 = vmatpush1.bf16.msra.mxu0 0
        %2111 = vmatprep.subr.bf16.mxu0 0
        %2112 = vmatpush1.bf16.msra.mxu0 0
        %2113 = vmatprep.subr.bf16.mxu0 0
        %2114 = vmatpush1.bf16.msra.mxu0 0
        %2115 = vmatprep.mubr.bf16.mxu0 0
        %2116 = vmatmul.mubr.bf16.gmra.mrb[0].mxu0 %v2011
        %v2117 = vpop.f32.mrb[0].mxu0
        %v2118 = vadd.f32 %v2033, %v2117
        %v2119 = vpop.f32.mrb[0].mxu0
        %v2120 = vpop.f32.mrb[0].mxu0
        %v2121 = vpop.f32.mrb[0].mxu0
        %2122 = vdwg.mxu0
        %v2123 = vadd.f32 %v1937, %v2118
        %v2124 = vld [vmem:[%s14] sm:$0x1]
        %v2125 = vld [vmem:[%s15] sm:$0x1]
        %v2126 = vsel %vm989, %v2123, 0.0
        %2127 = vadd.xlane.f32.xlu0 %v2126
        %v2128 = vpop.xlane.xlu0 %2127
        %v2129 = vmul.f32 %v2128, %v1913
        %v2130 = vsub.f32 %v2123, %v2129
        %v2131 = vmul.f32 %v2130, %v2130
        %v2132 = vsel %vm989, %v2131, 0.0
        %2133 = vadd.xlane.f32.xlu0 %v2132
        %v2134 = vpop.xlane.xlu0 %2133
        %v2135 = vmul.f32 %v2134, %v1913
        %v2136 = vadd.f32 %v2135, 1e-05
        %v2137 = vrsqrt.pop %v2136
        %v2138 = vmul.f32 %v2130, %v2137
        %v2140 = vlaneseq
        %v2141 = vshrl.u32 %v2140, 7
        %v2142 = vsub.s32 0, %v2141
        %v2143 = vrot.slane %v2124, %v2142
        %v2145 = vmul.f32 %v2138, %v2143
        %v2147 = vlaneseq
        %v2148 = vshrl.u32 %v2147, 7
        %v2149 = vsub.s32 0, %v2148
        %v2150 = vrot.slane %v2125, %v2149
        %v2152 = vadd.f32 %v2145, %v2150
        %2153 = vst.msk [vmem:[%s571] sm:$0xff] %vm989, %v2152
        %s2154 = sand.u32 %s403, 1
        %s2155 = scalar_lea.sflag [#allocation6], %s2154
        %s2156 = sand.u32 %s403, 1
        %s2157 = smul.addr %s2156, 8
        %s2158 = scalar_lea.vmem [#allocation7], %s2157
        // Predicated region
        $region100: #{tpu_custom_call.1} parent=83 // pred_check
          %p2159 = pneg %p413
        $region101: #{tpu_custom_call.1} parent=83 // pred_check_branch
          %2161 = sbr.rel (%p2159) target = $region103
        $region102: #{tpu_custom_call.1} parent=83 // pred_region
          %s2163 = ssub.s32 128, 128
          %2164 = vsyncadd %s2155, %s2163
          %s2165 = sadd.s32 %s38, %s37
          %s2166 = smul.addr %s2165, 128
          %s2167 = scalar_lea.hbm %s16, %s2166
          %s2169 = sshll.u32 %s2158, 4
          %s2170 = int_to_ptr.vmem [resolvable:$true] %s2169
          %2172 = dma.vmem_to_hbm [thread:$0]  %s2170, 128, %s2167, %s2155
        $region103: #{tpu_custom_call.1} parent=83 // pred_fallthru
          _
      $region84: #{tpu_custom_call.1} parent=5 // pred_fallthru
        _
      %p2173 = scmp.le.s32.totalorder 2, %s28
      // Predicated region
      $region104: #{tpu_custom_call.1} parent=5 // pred_check
        %p2174 = pneg %p2173
      $region105: #{tpu_custom_call.1} parent=5 // pred_check_branch
        %2176 = sbr.rel (%p2174) target = $region107
      $region106: #{tpu_custom_call.1} parent=5 // pred_region
        %s2177 = ssub.s32 %s28, 2
        // Predicated region
        $region108: #{tpu_custom_call.1} parent=106 // pred_check
          %p2178 = pneg %p419
        $region109: #{tpu_custom_call.1} parent=106 // pred_check_branch
          %2180 = sbr.rel (%p2178) target = $region111
        $region110: #{tpu_custom_call.1} parent=106 // pred_region
          %s2181 = sand.u32 %s404, 1
          %s2182 = scalar_lea.sflag [#allocation6], %s2181
          %s2183 = sand.u32 %s404, 1
          %s2184 = smul.addr %s2183, 8
          %s2185 = scalar_lea.vmem [#allocation7], %s2184
          %2186 = dma.done %s2182, 128
        $region111: #{tpu_custom_call.1} parent=106 // pred_fallthru
          _
      $region107: #{tpu_custom_call.1} parent=5 // pred_fallthru
        _
    $region6: #{tpu_custom_call.1} parent=1 // loop_footer
      %s32 = sadd.s32 1, %s28
    $region7: #{tpu_custom_call.1} parent=1 // loop_footer_branch
      %27 = sbr.rel target = $region3
    $region8: #{tpu_custom_call.1} parent=1 // loop_exit
      _
    %2187 = vsyncpa [#allocation5], 1
    %s2188 = scalar_lea.sflag [#allocation5], 1
    %2189 = vsyncpa %s2188, 1
    %2190 = vsyncpa [#allocation6], 1
    %s2191 = scalar_lea.sflag [#allocation6], 1
    %2192 = vsyncpa %s2191, 1

</llo_original>
